<compile_context>
chip_gen: v7x
topology: tpu7x:2x2x1
jax: 0.10.0
libtpu: 0.0.40
codegen_flags: <defaults>
</compile_context>

<pallas_src>
import numpy as np

import jax
import jax.numpy as jnp
from jax import lax
from jax.experimental import pallas as pl
from jax.experimental.pallas import tpu as pltpu

# ----------------------------- tiny Qwen2 config -----------------------------
VOCAB = 128
HIDDEN = 64
INTERMEDIATE = 128
NUM_LAYERS = 2
NUM_HEADS = 4
NUM_KV_HEADS = 2
HEAD_DIM = HIDDEN // NUM_HEADS          # 16
NUM_LABELS = 3
SCORE_PAD = 128                          # lane-dense padded classifier width
RMS_EPS = 1e-6
ROPE_THETA = 10000.0
SEQ = 8

Q_SZ = NUM_HEADS * HEAD_DIM              # 64
KV_SZ = NUM_KV_HEADS * HEAD_DIM          # 32
GROUP = NUM_HEADS // NUM_KV_HEADS        # GQA group size


# --------------------- RoPE rotate_half as a rotation matrix -----------------
def _rope_rotation_matrix(n_heads: int) -> np.ndarray:
    """Block-diagonal matrix R such that x @ R == rotate_half(x) per head."""
    half = HEAD_DIM // 2
    r = np.zeros((HEAD_DIM, HEAD_DIM), np.float32)
    for j in range(half):
        r[j + half, j] = -1.0        # first half of output = -x2
        r[j, j + half] = 1.0         # second half of output = x1
    return np.kron(np.eye(n_heads, dtype=np.float32), r)


_ROT_Q_NP = _rope_rotation_matrix(NUM_HEADS)      # [Q_SZ,  Q_SZ]
_ROT_K_NP = _rope_rotation_matrix(NUM_KV_HEADS)   # [KV_SZ, KV_SZ]


# ------------------------------ fused model kernel ---------------------------
def _fused_model_kernel(
    h_ref,                                  # [T, H]        f32 (embeddings)
    cosq_ref, sinq_ref,                     # [T, Q_SZ]     f32 (tiled per head)
    cosk_ref, sink_ref,                     # [T, KV_SZ]    f32
    rq_ref, rk_ref,                         # rotation mats bf16
    in_norm_ref, post_norm_ref,             # [L, 1, H]     f32
    wq_ref, bq_ref, wk_ref, bk_ref, wv_ref, bv_ref,   # bf16 weights / f32 bias
    wo_ref,                                 # [L, Q_SZ, H]  bf16
    wg_ref, wu_ref, wd_ref,                 # MLP weights   bf16
    fnorm_ref,                              # [1, H]        f32
    wscore_ref,                             # [H, SCORE_PAD] bf16 (zero-padded)
    o_ref,                                  # [T, SCORE_PAD] f32
):
    bf16 = jnp.bfloat16
    f32 = jnp.float32

    def rms(x, w):                           # f32 RMSNorm (VPU/XLU/EUP)
        var = jnp.mean(x * x, axis=-1, keepdims=True)
        return x * lax.rsqrt(var + RMS_EPS) * w

    def bdot(a_f32, w_bf):                   # bf16 MXU matmul, f32 accumulate
        return jnp.dot(a_f32.astype(bf16), w_bf, preferred_element_type=f32)

    h = h_ref[...]                           # residual stream, f32 [T, H]
    cos_q = cosq_ref[...]
    sin_q = sinq_ref[...]
    cos_k = cosk_ref[...]
    sin_k = sink_ref[...]
    rq = rq_ref[...]
    rk = rk_ref[...]

    t = h.shape[0]
    row = lax.broadcasted_iota(jnp.int32, (t, t), 0)
    col = lax.broadcasted_iota(jnp.int32, (t, t), 1)
    causal = row >= col
    scale = 1.0 / (HEAD_DIM ** 0.5)

    for l in range(NUM_LAYERS):
        # ---------------- self-attention block ----------------
        x = rms(h, in_norm_ref[l])
        xb = x.astype(bf16)
        q = jnp.dot(xb, wq_ref[l], preferred_element_type=f32) + bq_ref[l]
        k = jnp.dot(xb, wk_ref[l], preferred_element_type=f32) + bk_ref[l]
        v = jnp.dot(xb, wv_ref[l], preferred_element_type=f32) + bv_ref[l]

        # neox RoPE: x*cos + rotate_half(x)*sin, rotate_half via MXU matmul
        q = q * cos_q + bdot(q, rq) * sin_q
        k = k * cos_k + bdot(k, rk) * sin_k
        q = q * scale

        qb = q.astype(bf16)
        kb = k.astype(bf16)
        vb = v.astype(bf16)
        wo_l = wo_ref[l]                     # [Q_SZ, H] bf16

        attn_proj = jnp.zeros((t, HIDDEN), f32)
        for hq in range(NUM_HEADS):          # unrolled; all heads in one launch
            kvh = hq // GROUP                # GQA head mapping
            q_h = qb[:, hq * HEAD_DIM:(hq + 1) * HEAD_DIM]
            k_h = kb[:, kvh * HEAD_DIM:(kvh + 1) * HEAD_DIM]
            v_h = vb[:, kvh * HEAD_DIM:(kvh + 1) * HEAD_DIM]

            # scores: q_h @ k_h.T without materializing the transpose
            s = lax.dot_general(q_h, k_h, (((1,), (1,)), ((), ())),
                                preferred_element_type=f32)
            s = jnp.where(causal, s, -1e30)          # f32 scores -> safe constant
            m = jnp.max(s, axis=-1, keepdims=True)
            p = jnp.exp(s - m)
            denom = jnp.sum(p, axis=-1, keepdims=True)
            p = p * pl.reciprocal(denom, approx=True)    # EUP, not VPU divide

            o_h = jnp.dot(p.astype(bf16), v_h, preferred_element_type=f32)
            # fold per-head output straight into o_proj (no lane concat)
            attn_proj = attn_proj + jnp.dot(
                o_h.astype(bf16),
                wo_l[hq * HEAD_DIM:(hq + 1) * HEAD_DIM, :],
                preferred_element_type=f32)

        h = h + attn_proj                     # residual fused in-kernel

        # ---------------------- MLP block ----------------------
        x = rms(h, post_norm_ref[l])
        xb = x.astype(bf16)
        g = jnp.dot(xb, wg_ref[l], preferred_element_type=f32)
        u = jnp.dot(xb, wu_ref[l], preferred_element_type=f32)
        act = g * pl.reciprocal(1.0 + jnp.exp(-g), approx=True) * u   # SiLU * up
        h = h + jnp.dot(act.astype(bf16), wd_ref[l], preferred_element_type=f32)

    # ---------------- final norm + classification head ----------------
    x = rms(h, fnorm_ref[...])
    # lane-dense [T, 128] store (weights zero-padded beyond NUM_LABELS)
    o_ref[...] = jnp.dot(x.astype(bf16), wscore_ref[...],
                         preferred_element_type=f32)


# ----------------------------- parameters (synthetic) -------------------------
def init_params(key):
    keys = jax.random.split(key, 2 + NUM_LAYERS)

    def nrm(k, shape, scale=0.02):
        return (scale * jax.random.normal(k, shape)).astype(jnp.float32)

    bf16 = jnp.bfloat16
    embed = nrm(keys[0], (VOCAB, HIDDEN))
    score = nrm(keys[1], (HIDDEN, NUM_LABELS))                # RowParallelLinear, no bias
    score_pad = jnp.zeros((HIDDEN, SCORE_PAD), jnp.float32).at[:, :NUM_LABELS].set(score)

    wq, wk, wv, bq, bk, bv = [], [], [], [], [], []
    wo, wg, wu, wd = [], [], [], []
    in_norms, post_norms = [], []
    for i in range(NUM_LAYERS):
        k = jax.random.split(keys[2 + i], 5)
        wqkv = nrm(k[0], (HIDDEN, Q_SZ + 2 * KV_SZ))          # packed qkv_proj
        bqkv = nrm(k[1], (Q_SZ + 2 * KV_SZ,))                 # Qwen2 qkv bias
        wq.append(wqkv[:, :Q_SZ])
        wk.append(wqkv[:, Q_SZ:Q_SZ + KV_SZ])
        wv.append(wqkv[:, Q_SZ + KV_SZ:])
        bq.append(bqkv[:Q_SZ].reshape(1, -1))
        bk.append(bqkv[Q_SZ:Q_SZ + KV_SZ].reshape(1, -1))
        bv.append(bqkv[Q_SZ + KV_SZ:].reshape(1, -1))
        wo.append(nrm(k[2], (Q_SZ, HIDDEN)))
        w_gu = nrm(k[3], (HIDDEN, 2 * INTERMEDIATE))          # packed gate_up_proj
        wg.append(w_gu[:, :INTERMEDIATE])
        wu.append(w_gu[:, INTERMEDIATE:])
        wd.append(nrm(k[4], (INTERMEDIATE, HIDDEN)))
        in_norms.append(jnp.ones((1, HIDDEN), jnp.float32))
        post_norms.append(jnp.ones((1, HIDDEN), jnp.float32))

    return dict(
        embed=embed,
        wq=jnp.stack(wq).astype(bf16), wk=jnp.stack(wk).astype(bf16),
        wv=jnp.stack(wv).astype(bf16),
        bq=jnp.stack(bq), bk=jnp.stack(bk), bv=jnp.stack(bv),
        wo=jnp.stack(wo).astype(bf16),
        wg=jnp.stack(wg).astype(bf16), wu=jnp.stack(wu).astype(bf16),
        wd=jnp.stack(wd).astype(bf16),
        input_norm=jnp.stack(in_norms), post_norm=jnp.stack(post_norms),
        final_norm=jnp.ones((1, HIDDEN), jnp.float32),
        score=score_pad.astype(bf16),
    )


def rope_cos_sin(positions):
    inv_freq = 1.0 / (ROPE_THETA ** (
        jnp.arange(0, HEAD_DIM, 2, dtype=jnp.float32) / HEAD_DIM))
    freqs = positions[:, None].astype(jnp.float32) * inv_freq[None, :]  # [T, hd/2]
    emb = jnp.concatenate([freqs, freqs], axis=-1)                      # [T, hd]
    return jnp.cos(emb), jnp.sin(emb)


# --------------------------------- forward -----------------------------------
def forward(params, input_ids, positions):
    t = input_ids.shape[0]
    # JAX glue: embedding gather (VocabParallelEmbedding equivalent)
    h0 = jnp.take(params["embed"], input_ids, axis=0)                   # [T, H] f32
    cos, sin = rope_cos_sin(positions)                                  # [T, hd]
    cos_q = jnp.tile(cos, (1, NUM_HEADS))
    sin_q = jnp.tile(sin, (1, NUM_HEADS))
    cos_k = jnp.tile(cos, (1, NUM_KV_HEADS))
    sin_k = jnp.tile(sin, (1, NUM_KV_HEADS))
    rq = jnp.asarray(_ROT_Q_NP, jnp.bfloat16)
    rk = jnp.asarray(_ROT_K_NP, jnp.bfloat16)

    out = pl.pallas_call(
        _fused_model_kernel,
        out_shape=jax.ShapeDtypeStruct((t, SCORE_PAD), jnp.float32),
        compiler_params=pltpu.CompilerParams(vmem_limit_bytes=32 * 1024 * 1024),
    )(h0, cos_q, sin_q, cos_k, sin_k, rq, rk,
      params["input_norm"], params["post_norm"],
      params["wq"], params["bq"], params["wk"], params["bk"],
      params["wv"], params["bv"],
      params["wo"], params["wg"], params["wu"], params["wd"],
      params["final_norm"], params["score"])

    return out[:, :NUM_LABELS]                                          # [T, num_labels]


if __name__ == "__main__":
    key = jax.random.PRNGKey(0)
    pkey, ikey = jax.random.split(key)
    params = init_params(pkey)
    input_ids = jax.random.randint(ikey, (SEQ,), 0, VOCAB, dtype=jnp.int32)
    positions = jnp.arange(SEQ, dtype=jnp.int32)

    fwd = jax.jit(forward)
    logits = fwd(params, input_ids, positions)
    logits = jax.block_until_ready(logits)

    # pooler() is a separate method in vLLM (PoolingType.LAST + softmax),
    # not part of forward(); shown here as plain-JAX glue on the kernel output.
    probs = jax.nn.softmax(logits[-1])
    jax.block_until_ready(probs)

    print("KERNEL_OK")
</pallas_src>

<mosaic_0001>
module attributes {stable_mosaic.version = 11 : i64} {
  func.func @_fused_model_kernel(%arg0: memref<8x64xf32, #tpu.memory_space<vmem>>, %arg1: memref<8x64xf32, #tpu.memory_space<vmem>>, %arg2: memref<8x64xf32, #tpu.memory_space<vmem>>, %arg3: memref<8x32xf32, #tpu.memory_space<vmem>>, %arg4: memref<8x32xf32, #tpu.memory_space<vmem>>, %arg5: memref<64x64xbf16, #tpu.memory_space<vmem>>, %arg6: memref<32x32xbf16, #tpu.memory_space<vmem>>, %arg7: memref<2x1x64xf32, #tpu.memory_space<vmem>>, %arg8: memref<2x1x64xf32, #tpu.memory_space<vmem>>, %arg9: memref<2x64x64xbf16, #tpu.memory_space<vmem>>, %arg10: memref<2x1x64xf32, #tpu.memory_space<vmem>>, %arg11: memref<2x64x32xbf16, #tpu.memory_space<vmem>>, %arg12: memref<2x1x32xf32, #tpu.memory_space<vmem>>, %arg13: memref<2x64x32xbf16, #tpu.memory_space<vmem>>, %arg14: memref<2x1x32xf32, #tpu.memory_space<vmem>>, %arg15: memref<2x64x64xbf16, #tpu.memory_space<vmem>>, %arg16: memref<2x64x128xbf16, #tpu.memory_space<vmem>>, %arg17: memref<2x64x128xbf16, #tpu.memory_space<vmem>>, %arg18: memref<2x128x64xbf16, #tpu.memory_space<vmem>>, %arg19: memref<1x64xf32, #tpu.memory_space<vmem>>, %arg20: memref<64x128xbf16, #tpu.memory_space<vmem>>, %arg21: memref<8x128xf32, #tpu.memory_space<vmem>>) attributes {dimension_semantics = [], scalar_prefetch = 0 : i64, scratch_operands = 0 : i64, tpu.core_type = #tpu.core_type<tc>} {
    %c0 = arith.constant 0 : index
    %c0_0 = arith.constant 0 : index
    %0 = vector.load %arg0[%c0, %c0_0] : memref<8x64xf32, #tpu.memory_space<vmem>>, vector<8x64xf32>
    %c0_1 = arith.constant 0 : index
    %c0_2 = arith.constant 0 : index
    %1 = vector.load %arg1[%c0_1, %c0_2] : memref<8x64xf32, #tpu.memory_space<vmem>>, vector<8x64xf32>
    %c0_3 = arith.constant 0 : index
    %c0_4 = arith.constant 0 : index
    %2 = vector.load %arg2[%c0_3, %c0_4] : memref<8x64xf32, #tpu.memory_space<vmem>>, vector<8x64xf32>
    %c0_5 = arith.constant 0 : index
    %c0_6 = arith.constant 0 : index
    %3 = vector.load %arg3[%c0_5, %c0_6] : memref<8x32xf32, #tpu.memory_space<vmem>>, vector<8x32xf32>
    %c0_7 = arith.constant 0 : index
    %c0_8 = arith.constant 0 : index
    %4 = vector.load %arg4[%c0_7, %c0_8] : memref<8x32xf32, #tpu.memory_space<vmem>>, vector<8x32xf32>
    %c0_9 = arith.constant 0 : index
    %c0_10 = arith.constant 0 : index
    %5 = vector.load %arg5[%c0_9, %c0_10] : memref<64x64xbf16, #tpu.memory_space<vmem>>, vector<64x64xbf16>
    %c0_11 = arith.constant 0 : index
    %c0_12 = arith.constant 0 : index
    %6 = vector.load %arg6[%c0_11, %c0_12] : memref<32x32xbf16, #tpu.memory_space<vmem>>, vector<32x32xbf16>
    %7 = tpu.iota {dimensions = array<i32: 0>} : vector<8x8xi32>
    %8 = tpu.iota {dimensions = array<i32: 1>} : vector<8x8xi32>
    %9 = arith.cmpi sge, %7, %8 : vector<8x8xi32>
    %c0_13 = arith.constant 0 : index
    %c0_14 = arith.constant 0 : index
    %c0_15 = arith.constant 0 : index
    %10 = vector.load %arg7[%c0_13, %c0_14, %c0_15] : memref<2x1x64xf32, #tpu.memory_space<vmem>>, vector<1x1x64xf32>
    %11 = vector.shape_cast %10 : vector<1x1x64xf32> to vector<1x64xf32>
    %12 = arith.mulf %0, %0 : vector<8x64xf32>
    %cst = arith.constant dense<0.000000e+00> : vector<8xf32>
    %13 = vector.multi_reduction <add>, %12, %cst [1] : vector<8x64xf32> to vector<8xf32>
    %14 = vector.shape_cast %13 : vector<8xf32> to vector<8x1xf32>
    %cst_16 = arith.constant 6.400000e+01 : f32
    %15 = vector.broadcast %cst_16 : f32 to vector<8x1xf32>
    %16 = arith.divf %14, %15 : vector<8x1xf32>
    %cst_17 = arith.constant 9.99999997E-7 : f32
    %17 = vector.broadcast %cst_17 : f32 to vector<8x1xf32>
    %18 = arith.addf %16, %17 : vector<8x1xf32>
    %19 = math.rsqrt %18 : vector<8x1xf32>
    %20 = vector.broadcast %19 : vector<8x1xf32> to vector<8x64xf32>
    %21 = arith.mulf %0, %20 : vector<8x64xf32>
    %22 = vector.broadcast %11 : vector<1x64xf32> to vector<8x64xf32>
    %23 = arith.mulf %21, %22 : vector<8x64xf32>
    %24 = arith.truncf %23 : vector<8x64xf32> to vector<8x64xbf16>
    %c0_18 = arith.constant 0 : index
    %c0_19 = arith.constant 0 : index
    %c0_20 = arith.constant 0 : index
    %25 = vector.load %arg9[%c0_18, %c0_19, %c0_20] : memref<2x64x64xbf16, #tpu.memory_space<vmem>>, vector<1x64x64xbf16>
    %26 = vector.shape_cast %25 : vector<1x64x64xbf16> to vector<64x64xbf16>
    %cst_21 = arith.constant dense<0.000000e+00> : vector<8x64xf32>
    %27 = tpu.matmul %24, %26, %cst_21 {dimension_numbers = #tpu.dot_dimension_numbers<[1], [0], [0], [1], [0, 0, 1, 1], [], []>} : vector<8x64xbf16>, vector<64x64xbf16>, vector<8x64xf32> -> vector<8x64xf32>
    %c0_22 = arith.constant 0 : index
    %c0_23 = arith.constant 0 : index
    %c0_24 = arith.constant 0 : index
    %28 = vector.load %arg10[%c0_22, %c0_23, %c0_24] : memref<2x1x64xf32, #tpu.memory_space<vmem>>, vector<1x1x64xf32>
    %29 = vector.shape_cast %28 : vector<1x1x64xf32> to vector<1x64xf32>
    %30 = vector.broadcast %29 : vector<1x64xf32> to vector<8x64xf32>
    %31 = arith.addf %27, %30 : vector<8x64xf32>
    %c0_25 = arith.constant 0 : index
    %c0_26 = arith.constant 0 : index
    %c0_27 = arith.constant 0 : index
    %32 = vector.load %arg11[%c0_25, %c0_26, %c0_27] : memref<2x64x32xbf16, #tpu.memory_space<vmem>>, vector<1x64x32xbf16>
    %33 = vector.shape_cast %32 : vector<1x64x32xbf16> to vector<64x32xbf16>
    %cst_28 = arith.constant dense<0.000000e+00> : vector<8x32xf32>
    %34 = tpu.matmul %24, %33, %cst_28 {dimension_numbers = #tpu.dot_dimension_numbers<[1], [0], [0], [1], [0, 0, 1, 1], [], []>} : vector<8x64xbf16>, vector<64x32xbf16>, vector<8x32xf32> -> vector<8x32xf32>
    %c0_29 = arith.constant 0 : index
    %c0_30 = arith.constant 0 : index
    %c0_31 = arith.constant 0 : index
    %35 = vector.load %arg12[%c0_29, %c0_30, %c0_31] : memref<2x1x32xf32, #tpu.memory_space<vmem>>, vector<1x1x32xf32>
    %36 = vector.shape_cast %35 : vector<1x1x32xf32> to vector<1x32xf32>
    %37 = vector.broadcast %36 : vector<1x32xf32> to vector<8x32xf32>
    %38 = arith.addf %34, %37 : vector<8x32xf32>
    %c0_32 = arith.constant 0 : index
    %c0_33 = arith.constant 0 : index
    %c0_34 = arith.constant 0 : index
    %39 = vector.load %arg13[%c0_32, %c0_33, %c0_34] : memref<2x64x32xbf16, #tpu.memory_space<vmem>>, vector<1x64x32xbf16>
    %40 = vector.shape_cast %39 : vector<1x64x32xbf16> to vector<64x32xbf16>
    %cst_35 = arith.constant dense<0.000000e+00> : vector<8x32xf32>
    %41 = tpu.matmul %24, %40, %cst_35 {dimension_numbers = #tpu.dot_dimension_numbers<[1], [0], [0], [1], [0, 0, 1, 1], [], []>} : vector<8x64xbf16>, vector<64x32xbf16>, vector<8x32xf32> -> vector<8x32xf32>
    %c0_36 = arith.constant 0 : index
    %c0_37 = arith.constant 0 : index
    %c0_38 = arith.constant 0 : index
    %42 = vector.load %arg14[%c0_36, %c0_37, %c0_38] : memref<2x1x32xf32, #tpu.memory_space<vmem>>, vector<1x1x32xf32>
    %43 = vector.shape_cast %42 : vector<1x1x32xf32> to vector<1x32xf32>
    %44 = vector.broadcast %43 : vector<1x32xf32> to vector<8x32xf32>
    %45 = arith.addf %41, %44 : vector<8x32xf32>
    %46 = arith.mulf %31, %1 : vector<8x64xf32>
    %47 = arith.truncf %31 : vector<8x64xf32> to vector<8x64xbf16>
    %cst_39 = arith.constant dense<0.000000e+00> : vector<8x64xf32>
    %48 = tpu.matmul %47, %5, %cst_39 {dimension_numbers = #tpu.dot_dimension_numbers<[1], [0], [0], [1], [0, 0, 1, 1], [], []>} : vector<8x64xbf16>, vector<64x64xbf16>, vector<8x64xf32> -> vector<8x64xf32>
    %49 = arith.mulf %48, %2 : vector<8x64xf32>
    %50 = arith.addf %46, %49 : vector<8x64xf32>
    %51 = arith.mulf %38, %3 : vector<8x32xf32>
    %52 = arith.truncf %38 : vector<8x32xf32> to vector<8x32xbf16>
    %cst_40 = arith.constant dense<0.000000e+00> : vector<8x32xf32>
    %53 = tpu.matmul %52, %6, %cst_40 {dimension_numbers = #tpu.dot_dimension_numbers<[1], [0], [0], [1], [0, 0, 1, 1], [], []>} : vector<8x32xbf16>, vector<32x32xbf16>, vector<8x32xf32> -> vector<8x32xf32>
    %54 = arith.mulf %53, %4 : vector<8x32xf32>
    %55 = arith.addf %51, %54 : vector<8x32xf32>
    %cst_41 = arith.constant 2.500000e-01 : f32
    %56 = vector.broadcast %cst_41 : f32 to vector<8x64xf32>
    %57 = arith.mulf %50, %56 : vector<8x64xf32>
    %58 = arith.truncf %57 : vector<8x64xf32> to vector<8x64xbf16>
    %59 = arith.truncf %55 : vector<8x32xf32> to vector<8x32xbf16>
    %60 = arith.truncf %45 : vector<8x32xf32> to vector<8x32xbf16>
    %c0_42 = arith.constant 0 : index
    %c0_43 = arith.constant 0 : index
    %c0_44 = arith.constant 0 : index
    %61 = vector.load %arg15[%c0_42, %c0_43, %c0_44] : memref<2x64x64xbf16, #tpu.memory_space<vmem>>, vector<1x64x64xbf16>
    %62 = vector.shape_cast %61 : vector<1x64x64xbf16> to vector<64x64xbf16>
    %cst_45 = arith.constant 0.000000e+00 : f32
    %63 = vector.broadcast %cst_45 : f32 to vector<8x64xf32>
    %64 = vector.extract_strided_slice %58 {offsets = [0, 0], sizes = [8, 16], strides = [1, 1]} : vector<8x64xbf16> to vector<8x16xbf16>
    %65 = vector.extract_strided_slice %59 {offsets = [0, 0], sizes = [8, 16], strides = [1, 1]} : vector<8x32xbf16> to vector<8x16xbf16>
    %66 = vector.extract_strided_slice %60 {offsets = [0, 0], sizes = [8, 16], strides = [1, 1]} : vector<8x32xbf16> to vector<8x16xbf16>
    %cst_46 = arith.constant dense<0.000000e+00> : vector<8x8xf32>
    %67 = tpu.matmul %64, %65, %cst_46 {dimension_numbers = #tpu.dot_dimension_numbers<[1], [1], [0], [0], [0, 0, 1, 0], [], []>} : vector<8x16xbf16>, vector<8x16xbf16>, vector<8x8xf32> -> vector<8x8xf32>
    %cst_47 = arith.constant -1.000000e+30 : f32
    %68 = vector.broadcast %cst_47 : f32 to vector<8x8xf32>
    %69 = arith.select %9, %67, %68 : vector<8x8xi1>, vector<8x8xf32>
    %cst_48 = arith.constant dense<0xFF800000> : vector<8xf32>
    %70 = vector.multi_reduction <maximumf>, %69, %cst_48 [1] : vector<8x8xf32> to vector<8xf32>
    %71 = vector.shape_cast %70 : vector<8xf32> to vector<8x1xf32>
    %72 = vector.broadcast %71 : vector<8x1xf32> to vector<8x8xf32>
    %73 = arith.subf %69, %72 : vector<8x8xf32>
    %74 = math.exp %73 : vector<8x8xf32>
    %cst_49 = arith.constant dense<0.000000e+00> : vector<8xf32>
    %75 = vector.multi_reduction <add>, %74, %cst_49 [1] : vector<8x8xf32> to vector<8xf32>
    %76 = vector.shape_cast %75 : vector<8xf32> to vector<8x1xf32>
    %77 = tpu.reciprocal %76 {approx = true} : vector<8x1xf32> -> vector<8x1xf32>
    %78 = vector.broadcast %77 : vector<8x1xf32> to vector<8x8xf32>
    %79 = arith.mulf %74, %78 : vector<8x8xf32>
    %80 = arith.truncf %79 : vector<8x8xf32> to vector<8x8xbf16>
    %cst_50 = arith.constant dense<0.000000e+00> : vector<8x16xf32>
    %81 = tpu.matmul %80, %66, %cst_50 {dimension_numbers = #tpu.dot_dimension_numbers<[1], [0], [0], [1], [0, 0, 1, 1], [], []>} : vector<8x8xbf16>, vector<8x16xbf16>, vector<8x16xf32> -> vector<8x16xf32>
    %82 = arith.truncf %81 : vector<8x16xf32> to vector<8x16xbf16>
    %83 = vector.extract_strided_slice %62 {offsets = [0, 0], sizes = [16, 64], strides = [1, 1]} : vector<64x64xbf16> to vector<16x64xbf16>
    %cst_51 = arith.constant dense<0.000000e+00> : vector<8x64xf32>
    %84 = tpu.matmul %82, %83, %cst_51 {dimension_numbers = #tpu.dot_dimension_numbers<[1], [0], [0], [1], [0, 0, 1, 1], [], []>} : vector<8x16xbf16>, vector<16x64xbf16>, vector<8x64xf32> -> vector<8x64xf32>
    %85 = arith.addf %63, %84 : vector<8x64xf32>
    %86 = vector.extract_strided_slice %58 {offsets = [0, 16], sizes = [8, 16], strides = [1, 1]} : vector<8x64xbf16> to vector<8x16xbf16>
    %87 = vector.extract_strided_slice %59 {offsets = [0, 0], sizes = [8, 16], strides = [1, 1]} : vector<8x32xbf16> to vector<8x16xbf16>
    %88 = vector.extract_strided_slice %60 {offsets = [0, 0], sizes = [8, 16], strides = [1, 1]} : vector<8x32xbf16> to vector<8x16xbf16>
    %cst_52 = arith.constant dense<0.000000e+00> : vector<8x8xf32>
    %89 = tpu.matmul %86, %87, %cst_52 {dimension_numbers = #tpu.dot_dimension_numbers<[1], [1], [0], [0], [0, 0, 1, 0], [], []>} : vector<8x16xbf16>, vector<8x16xbf16>, vector<8x8xf32> -> vector<8x8xf32>
    %cst_53 = arith.constant -1.000000e+30 : f32
    %90 = vector.broadcast %cst_53 : f32 to vector<8x8xf32>
    %91 = arith.select %9, %89, %90 : vector<8x8xi1>, vector<8x8xf32>
    %cst_54 = arith.constant dense<0xFF800000> : vector<8xf32>
    %92 = vector.multi_reduction <maximumf>, %91, %cst_54 [1] : vector<8x8xf32> to vector<8xf32>
    %93 = vector.shape_cast %92 : vector<8xf32> to vector<8x1xf32>
    %94 = vector.broadcast %93 : vector<8x1xf32> to vector<8x8xf32>
    %95 = arith.subf %91, %94 : vector<8x8xf32>
    %96 = math.exp %95 : vector<8x8xf32>
    %cst_55 = arith.constant dense<0.000000e+00> : vector<8xf32>
    %97 = vector.multi_reduction <add>, %96, %cst_55 [1] : vector<8x8xf32> to vector<8xf32>
    %98 = vector.shape_cast %97 : vector<8xf32> to vector<8x1xf32>
    %99 = tpu.reciprocal %98 {approx = true} : vector<8x1xf32> -> vector<8x1xf32>
    %100 = vector.broadcast %99 : vector<8x1xf32> to vector<8x8xf32>
    %101 = arith.mulf %96, %100 : vector<8x8xf32>
    %102 = arith.truncf %101 : vector<8x8xf32> to vector<8x8xbf16>
    %cst_56 = arith.constant dense<0.000000e+00> : vector<8x16xf32>
    %103 = tpu.matmul %102, %88, %cst_56 {dimension_numbers = #tpu.dot_dimension_numbers<[1], [0], [0], [1], [0, 0, 1, 1], [], []>} : vector<8x8xbf16>, vector<8x16xbf16>, vector<8x16xf32> -> vector<8x16xf32>
    %104 = arith.truncf %103 : vector<8x16xf32> to vector<8x16xbf16>
    %105 = vector.extract_strided_slice %62 {offsets = [16, 0], sizes = [16, 64], strides = [1, 1]} : vector<64x64xbf16> to vector<16x64xbf16>
    %cst_57 = arith.constant dense<0.000000e+00> : vector<8x64xf32>
    %106 = tpu.matmul %104, %105, %cst_57 {dimension_numbers = #tpu.dot_dimension_numbers<[1], [0], [0], [1], [0, 0, 1, 1], [], []>} : vector<8x16xbf16>, vector<16x64xbf16>, vector<8x64xf32> -> vector<8x64xf32>
    %107 = arith.addf %85, %106 : vector<8x64xf32>
    %108 = vector.extract_strided_slice %58 {offsets = [0, 32], sizes = [8, 16], strides = [1, 1]} : vector<8x64xbf16> to vector<8x16xbf16>
    %109 = vector.extract_strided_slice %59 {offsets = [0, 16], sizes = [8, 16], strides = [1, 1]} : vector<8x32xbf16> to vector<8x16xbf16>
    %110 = vector.extract_strided_slice %60 {offsets = [0, 16], sizes = [8, 16], strides = [1, 1]} : vector<8x32xbf16> to vector<8x16xbf16>
    %cst_58 = arith.constant dense<0.000000e+00> : vector<8x8xf32>
    %111 = tpu.matmul %108, %109, %cst_58 {dimension_numbers = #tpu.dot_dimension_numbers<[1], [1], [0], [0], [0, 0, 1, 0], [], []>} : vector<8x16xbf16>, vector<8x16xbf16>, vector<8x8xf32> -> vector<8x8xf32>
    %cst_59 = arith.constant -1.000000e+30 : f32
    %112 = vector.broadcast %cst_59 : f32 to vector<8x8xf32>
    %113 = arith.select %9, %111, %112 : vector<8x8xi1>, vector<8x8xf32>
    %cst_60 = arith.constant dense<0xFF800000> : vector<8xf32>
    %114 = vector.multi_reduction <maximumf>, %113, %cst_60 [1] : vector<8x8xf32> to vector<8xf32>
    %115 = vector.shape_cast %114 : vector<8xf32> to vector<8x1xf32>
    %116 = vector.broadcast %115 : vector<8x1xf32> to vector<8x8xf32>
    %117 = arith.subf %113, %116 : vector<8x8xf32>
    %118 = math.exp %117 : vector<8x8xf32>
    %cst_61 = arith.constant dense<0.000000e+00> : vector<8xf32>
    %119 = vector.multi_reduction <add>, %118, %cst_61 [1] : vector<8x8xf32> to vector<8xf32>
    %120 = vector.shape_cast %119 : vector<8xf32> to vector<8x1xf32>
    %121 = tpu.reciprocal %120 {approx = true} : vector<8x1xf32> -> vector<8x1xf32>
    %122 = vector.broadcast %121 : vector<8x1xf32> to vector<8x8xf32>
    %123 = arith.mulf %118, %122 : vector<8x8xf32>
    %124 = arith.truncf %123 : vector<8x8xf32> to vector<8x8xbf16>
    %cst_62 = arith.constant dense<0.000000e+00> : vector<8x16xf32>
    %125 = tpu.matmul %124, %110, %cst_62 {dimension_numbers = #tpu.dot_dimension_numbers<[1], [0], [0], [1], [0, 0, 1, 1], [], []>} : vector<8x8xbf16>, vector<8x16xbf16>, vector<8x16xf32> -> vector<8x16xf32>
    %126 = arith.truncf %125 : vector<8x16xf32> to vector<8x16xbf16>
    %127 = vector.extract_strided_slice %62 {offsets = [32, 0], sizes = [16, 64], strides = [1, 1]} : vector<64x64xbf16> to vector<16x64xbf16>
    %cst_63 = arith.constant dense<0.000000e+00> : vector<8x64xf32>
    %128 = tpu.matmul %126, %127, %cst_63 {dimension_numbers = #tpu.dot_dimension_numbers<[1], [0], [0], [1], [0, 0, 1, 1], [], []>} : vector<8x16xbf16>, vector<16x64xbf16>, vector<8x64xf32> -> vector<8x64xf32>
    %129 = arith.addf %107, %128 : vector<8x64xf32>
    %130 = vector.extract_strided_slice %58 {offsets = [0, 48], sizes = [8, 16], strides = [1, 1]} : vector<8x64xbf16> to vector<8x16xbf16>
    %131 = vector.extract_strided_slice %59 {offsets = [0, 16], sizes = [8, 16], strides = [1, 1]} : vector<8x32xbf16> to vector<8x16xbf16>
    %132 = vector.extract_strided_slice %60 {offsets = [0, 16], sizes = [8, 16], strides = [1, 1]} : vector<8x32xbf16> to vector<8x16xbf16>
    %cst_64 = arith.constant dense<0.000000e+00> : vector<8x8xf32>
    %133 = tpu.matmul %130, %131, %cst_64 {dimension_numbers = #tpu.dot_dimension_numbers<[1], [1], [0], [0], [0, 0, 1, 0], [], []>} : vector<8x16xbf16>, vector<8x16xbf16>, vector<8x8xf32> -> vector<8x8xf32>
    %cst_65 = arith.constant -1.000000e+30 : f32
    %134 = vector.broadcast %cst_65 : f32 to vector<8x8xf32>
    %135 = arith.select %9, %133, %134 : vector<8x8xi1>, vector<8x8xf32>
    %cst_66 = arith.constant dense<0xFF800000> : vector<8xf32>
    %136 = vector.multi_reduction <maximumf>, %135, %cst_66 [1] : vector<8x8xf32> to vector<8xf32>
    %137 = vector.shape_cast %136 : vector<8xf32> to vector<8x1xf32>
    %138 = vector.broadcast %137 : vector<8x1xf32> to vector<8x8xf32>
    %139 = arith.subf %135, %138 : vector<8x8xf32>
    %140 = math.exp %139 : vector<8x8xf32>
    %cst_67 = arith.constant dense<0.000000e+00> : vector<8xf32>
    %141 = vector.multi_reduction <add>, %140, %cst_67 [1] : vector<8x8xf32> to vector<8xf32>
    %142 = vector.shape_cast %141 : vector<8xf32> to vector<8x1xf32>
    %143 = tpu.reciprocal %142 {approx = true} : vector<8x1xf32> -> vector<8x1xf32>
    %144 = vector.broadcast %143 : vector<8x1xf32> to vector<8x8xf32>
    %145 = arith.mulf %140, %144 : vector<8x8xf32>
    %146 = arith.truncf %145 : vector<8x8xf32> to vector<8x8xbf16>
    %cst_68 = arith.constant dense<0.000000e+00> : vector<8x16xf32>
    %147 = tpu.matmul %146, %132, %cst_68 {dimension_numbers = #tpu.dot_dimension_numbers<[1], [0], [0], [1], [0, 0, 1, 1], [], []>} : vector<8x8xbf16>, vector<8x16xbf16>, vector<8x16xf32> -> vector<8x16xf32>
    %148 = arith.truncf %147 : vector<8x16xf32> to vector<8x16xbf16>
    %149 = vector.extract_strided_slice %62 {offsets = [48, 0], sizes = [16, 64], strides = [1, 1]} : vector<64x64xbf16> to vector<16x64xbf16>
    %cst_69 = arith.constant dense<0.000000e+00> : vector<8x64xf32>
    %150 = tpu.matmul %148, %149, %cst_69 {dimension_numbers = #tpu.dot_dimension_numbers<[1], [0], [0], [1], [0, 0, 1, 1], [], []>} : vector<8x16xbf16>, vector<16x64xbf16>, vector<8x64xf32> -> vector<8x64xf32>
    %151 = arith.addf %129, %150 : vector<8x64xf32>
    %152 = arith.addf %0, %151 : vector<8x64xf32>
    %c0_70 = arith.constant 0 : index
    %c0_71 = arith.constant 0 : index
    %c0_72 = arith.constant 0 : index
    %153 = vector.load %arg8[%c0_70, %c0_71, %c0_72] : memref<2x1x64xf32, #tpu.memory_space<vmem>>, vector<1x1x64xf32>
    %154 = vector.shape_cast %153 : vector<1x1x64xf32> to vector<1x64xf32>
    %155 = arith.mulf %152, %152 : vector<8x64xf32>
    %cst_73 = arith.constant dense<0.000000e+00> : vector<8xf32>
    %156 = vector.multi_reduction <add>, %155, %cst_73 [1] : vector<8x64xf32> to vector<8xf32>
    %157 = vector.shape_cast %156 : vector<8xf32> to vector<8x1xf32>
    %cst_74 = arith.constant 6.400000e+01 : f32
    %158 = vector.broadcast %cst_74 : f32 to vector<8x1xf32>
    %159 = arith.divf %157, %158 : vector<8x1xf32>
    %cst_75 = arith.constant 9.99999997E-7 : f32
    %160 = vector.broadcast %cst_75 : f32 to vector<8x1xf32>
    %161 = arith.addf %159, %160 : vector<8x1xf32>
    %162 = math.rsqrt %161 : vector<8x1xf32>
    %163 = vector.broadcast %162 : vector<8x1xf32> to vector<8x64xf32>
    %164 = arith.mulf %152, %163 : vector<8x64xf32>
    %165 = vector.broadcast %154 : vector<1x64xf32> to vector<8x64xf32>
    %166 = arith.mulf %164, %165 : vector<8x64xf32>
    %167 = arith.truncf %166 : vector<8x64xf32> to vector<8x64xbf16>
    %c0_76 = arith.constant 0 : index
    %c0_77 = arith.constant 0 : index
    %c0_78 = arith.constant 0 : index
    %168 = vector.load %arg16[%c0_76, %c0_77, %c0_78] : memref<2x64x128xbf16, #tpu.memory_space<vmem>>, vector<1x64x128xbf16>
    %169 = vector.shape_cast %168 : vector<1x64x128xbf16> to vector<64x128xbf16>
    %cst_79 = arith.constant dense<0.000000e+00> : vector<8x128xf32>
    %170 = tpu.matmul %167, %169, %cst_79 {dimension_numbers = #tpu.dot_dimension_numbers<[1], [0], [0], [1], [0, 0, 1, 1], [], []>} : vector<8x64xbf16>, vector<64x128xbf16>, vector<8x128xf32> -> vector<8x128xf32>
    %c0_80 = arith.constant 0 : index
    %c0_81 = arith.constant 0 : index
    %c0_82 = arith.constant 0 : index
    %171 = vector.load %arg17[%c0_80, %c0_81, %c0_82] : memref<2x64x128xbf16, #tpu.memory_space<vmem>>, vector<1x64x128xbf16>
    %172 = vector.shape_cast %171 : vector<1x64x128xbf16> to vector<64x128xbf16>
    %cst_83 = arith.constant dense<0.000000e+00> : vector<8x128xf32>
    %173 = tpu.matmul %167, %172, %cst_83 {dimension_numbers = #tpu.dot_dimension_numbers<[1], [0], [0], [1], [0, 0, 1, 1], [], []>} : vector<8x64xbf16>, vector<64x128xbf16>, vector<8x128xf32> -> vector<8x128xf32>
    %cst_84 = arith.constant 0.000000e+00 : f32
    %174 = vector.broadcast %cst_84 : f32 to vector<8x128xf32>
    %175 = arith.subf %174, %170 : vector<8x128xf32>
    %176 = math.exp %175 : vector<8x128xf32>
    %cst_85 = arith.constant 1.000000e+00 : f32
    %177 = vector.broadcast %cst_85 : f32 to vector<8x128xf32>
    %178 = arith.addf %177, %176 : vector<8x128xf32>
    %179 = tpu.reciprocal %178 {approx = true} : vector<8x128xf32> -> vector<8x128xf32>
    %180 = arith.mulf %170, %179 : vector<8x128xf32>
    %181 = arith.mulf %180, %173 : vector<8x128xf32>
    %182 = arith.truncf %181 : vector<8x128xf32> to vector<8x128xbf16>
    %c0_86 = arith.constant 0 : index
    %c0_87 = arith.constant 0 : index
    %c0_88 = arith.constant 0 : index
    %183 = vector.load %arg18[%c0_86, %c0_87, %c0_88] : memref<2x128x64xbf16, #tpu.memory_space<vmem>>, vector<1x128x64xbf16>
    %184 = vector.shape_cast %183 : vector<1x128x64xbf16> to vector<128x64xbf16>
    %cst_89 = arith.constant dense<0.000000e+00> : vector<8x64xf32>
    %185 = tpu.matmul %182, %184, %cst_89 {dimension_numbers = #tpu.dot_dimension_numbers<[1], [0], [0], [1], [0, 0, 1, 1], [], []>} : vector<8x128xbf16>, vector<128x64xbf16>, vector<8x64xf32> -> vector<8x64xf32>
    %186 = arith.addf %152, %185 : vector<8x64xf32>
    %c1 = arith.constant 1 : index
    %c0_90 = arith.constant 0 : index
    %c0_91 = arith.constant 0 : index
    %187 = vector.load %arg7[%c1, %c0_90, %c0_91] : memref<2x1x64xf32, #tpu.memory_space<vmem>>, vector<1x1x64xf32>
    %188 = vector.shape_cast %187 : vector<1x1x64xf32> to vector<1x64xf32>
    %189 = arith.mulf %186, %186 : vector<8x64xf32>
    %cst_92 = arith.constant dense<0.000000e+00> : vector<8xf32>
    %190 = vector.multi_reduction <add>, %189, %cst_92 [1] : vector<8x64xf32> to vector<8xf32>
    %191 = vector.shape_cast %190 : vector<8xf32> to vector<8x1xf32>
    %cst_93 = arith.constant 6.400000e+01 : f32
    %192 = vector.broadcast %cst_93 : f32 to vector<8x1xf32>
    %193 = arith.divf %191, %192 : vector<8x1xf32>
    %cst_94 = arith.constant 9.99999997E-7 : f32
    %194 = vector.broadcast %cst_94 : f32 to vector<8x1xf32>
    %195 = arith.addf %193, %194 : vector<8x1xf32>
    %196 = math.rsqrt %195 : vector<8x1xf32>
    %197 = vector.broadcast %196 : vector<8x1xf32> to vector<8x64xf32>
    %198 = arith.mulf %186, %197 : vector<8x64xf32>
    %199 = vector.broadcast %188 : vector<1x64xf32> to vector<8x64xf32>
    %200 = arith.mulf %198, %199 : vector<8x64xf32>
    %201 = arith.truncf %200 : vector<8x64xf32> to vector<8x64xbf16>
    %c1_95 = arith.constant 1 : index
    %c0_96 = arith.constant 0 : index
    %c0_97 = arith.constant 0 : index
    %202 = vector.load %arg9[%c1_95, %c0_96, %c0_97] : memref<2x64x64xbf16, #tpu.memory_space<vmem>>, vector<1x64x64xbf16>
    %203 = vector.shape_cast %202 : vector<1x64x64xbf16> to vector<64x64xbf16>
    %cst_98 = arith.constant dense<0.000000e+00> : vector<8x64xf32>
    %204 = tpu.matmul %201, %203, %cst_98 {dimension_numbers = #tpu.dot_dimension_numbers<[1], [0], [0], [1], [0, 0, 1, 1], [], []>} : vector<8x64xbf16>, vector<64x64xbf16>, vector<8x64xf32> -> vector<8x64xf32>
    %c1_99 = arith.constant 1 : index
    %c0_100 = arith.constant 0 : index
    %c0_101 = arith.constant 0 : index
    %205 = vector.load %arg10[%c1_99, %c0_100, %c0_101] : memref<2x1x64xf32, #tpu.memory_space<vmem>>, vector<1x1x64xf32>
    %206 = vector.shape_cast %205 : vector<1x1x64xf32> to vector<1x64xf32>
    %207 = vector.broadcast %206 : vector<1x64xf32> to vector<8x64xf32>
    %208 = arith.addf %204, %207 : vector<8x64xf32>
    %c1_102 = arith.constant 1 : index
    %c0_103 = arith.constant 0 : index
    %c0_104 = arith.constant 0 : index
    %209 = vector.load %arg11[%c1_102, %c0_103, %c0_104] : memref<2x64x32xbf16, #tpu.memory_space<vmem>>, vector<1x64x32xbf16>
    %210 = vector.shape_cast %209 : vector<1x64x32xbf16> to vector<64x32xbf16>
    %cst_105 = arith.constant dense<0.000000e+00> : vector<8x32xf32>
    %211 = tpu.matmul %201, %210, %cst_105 {dimension_numbers = #tpu.dot_dimension_numbers<[1], [0], [0], [1], [0, 0, 1, 1], [], []>} : vector<8x64xbf16>, vector<64x32xbf16>, vector<8x32xf32> -> vector<8x32xf32>
    %c1_106 = arith.constant 1 : index
    %c0_107 = arith.constant 0 : index
    %c0_108 = arith.constant 0 : index
    %212 = vector.load %arg12[%c1_106, %c0_107, %c0_108] : memref<2x1x32xf32, #tpu.memory_space<vmem>>, vector<1x1x32xf32>
    %213 = vector.shape_cast %212 : vector<1x1x32xf32> to vector<1x32xf32>
    %214 = vector.broadcast %213 : vector<1x32xf32> to vector<8x32xf32>
    %215 = arith.addf %211, %214 : vector<8x32xf32>
    %c1_109 = arith.constant 1 : index
    %c0_110 = arith.constant 0 : index
    %c0_111 = arith.constant 0 : index
    %216 = vector.load %arg13[%c1_109, %c0_110, %c0_111] : memref<2x64x32xbf16, #tpu.memory_space<vmem>>, vector<1x64x32xbf16>
    %217 = vector.shape_cast %216 : vector<1x64x32xbf16> to vector<64x32xbf16>
    %cst_112 = arith.constant dense<0.000000e+00> : vector<8x32xf32>
    %218 = tpu.matmul %201, %217, %cst_112 {dimension_numbers = #tpu.dot_dimension_numbers<[1], [0], [0], [1], [0, 0, 1, 1], [], []>} : vector<8x64xbf16>, vector<64x32xbf16>, vector<8x32xf32> -> vector<8x32xf32>
    %c1_113 = arith.constant 1 : index
    %c0_114 = arith.constant 0 : index
    %c0_115 = arith.constant 0 : index
    %219 = vector.load %arg14[%c1_113, %c0_114, %c0_115] : memref<2x1x32xf32, #tpu.memory_space<vmem>>, vector<1x1x32xf32>
    %220 = vector.shape_cast %219 : vector<1x1x32xf32> to vector<1x32xf32>
    %221 = vector.broadcast %220 : vector<1x32xf32> to vector<8x32xf32>
    %222 = arith.addf %218, %221 : vector<8x32xf32>
    %223 = arith.mulf %208, %1 : vector<8x64xf32>
    %224 = arith.truncf %208 : vector<8x64xf32> to vector<8x64xbf16>
    %cst_116 = arith.constant dense<0.000000e+00> : vector<8x64xf32>
    %225 = tpu.matmul %224, %5, %cst_116 {dimension_numbers = #tpu.dot_dimension_numbers<[1], [0], [0], [1], [0, 0, 1, 1], [], []>} : vector<8x64xbf16>, vector<64x64xbf16>, vector<8x64xf32> -> vector<8x64xf32>
    %226 = arith.mulf %225, %2 : vector<8x64xf32>
    %227 = arith.addf %223, %226 : vector<8x64xf32>
    %228 = arith.mulf %215, %3 : vector<8x32xf32>
    %229 = arith.truncf %215 : vector<8x32xf32> to vector<8x32xbf16>
    %cst_117 = arith.constant dense<0.000000e+00> : vector<8x32xf32>
    %230 = tpu.matmul %229, %6, %cst_117 {dimension_numbers = #tpu.dot_dimension_numbers<[1], [0], [0], [1], [0, 0, 1, 1], [], []>} : vector<8x32xbf16>, vector<32x32xbf16>, vector<8x32xf32> -> vector<8x32xf32>
    %231 = arith.mulf %230, %4 : vector<8x32xf32>
    %232 = arith.addf %228, %231 : vector<8x32xf32>
    %cst_118 = arith.constant 2.500000e-01 : f32
    %233 = vector.broadcast %cst_118 : f32 to vector<8x64xf32>
    %234 = arith.mulf %227, %233 : vector<8x64xf32>
    %235 = arith.truncf %234 : vector<8x64xf32> to vector<8x64xbf16>
    %236 = arith.truncf %232 : vector<8x32xf32> to vector<8x32xbf16>
    %237 = arith.truncf %222 : vector<8x32xf32> to vector<8x32xbf16>
    %c1_119 = arith.constant 1 : index
    %c0_120 = arith.constant 0 : index
    %c0_121 = arith.constant 0 : index
    %238 = vector.load %arg15[%c1_119, %c0_120, %c0_121] : memref<2x64x64xbf16, #tpu.memory_space<vmem>>, vector<1x64x64xbf16>
    %239 = vector.shape_cast %238 : vector<1x64x64xbf16> to vector<64x64xbf16>
    %cst_122 = arith.constant 0.000000e+00 : f32
    %240 = vector.broadcast %cst_122 : f32 to vector<8x64xf32>
    %241 = vector.extract_strided_slice %235 {offsets = [0, 0], sizes = [8, 16], strides = [1, 1]} : vector<8x64xbf16> to vector<8x16xbf16>
    %242 = vector.extract_strided_slice %236 {offsets = [0, 0], sizes = [8, 16], strides = [1, 1]} : vector<8x32xbf16> to vector<8x16xbf16>
    %243 = vector.extract_strided_slice %237 {offsets = [0, 0], sizes = [8, 16], strides = [1, 1]} : vector<8x32xbf16> to vector<8x16xbf16>
    %cst_123 = arith.constant dense<0.000000e+00> : vector<8x8xf32>
    %244 = tpu.matmul %241, %242, %cst_123 {dimension_numbers = #tpu.dot_dimension_numbers<[1], [1], [0], [0], [0, 0, 1, 0], [], []>} : vector<8x16xbf16>, vector<8x16xbf16>, vector<8x8xf32> -> vector<8x8xf32>
    %cst_124 = arith.constant -1.000000e+30 : f32
    %245 = vector.broadcast %cst_124 : f32 to vector<8x8xf32>
    %246 = arith.select %9, %244, %245 : vector<8x8xi1>, vector<8x8xf32>
    %cst_125 = arith.constant dense<0xFF800000> : vector<8xf32>
    %247 = vector.multi_reduction <maximumf>, %246, %cst_125 [1] : vector<8x8xf32> to vector<8xf32>
    %248 = vector.shape_cast %247 : vector<8xf32> to vector<8x1xf32>
    %249 = vector.broadcast %248 : vector<8x1xf32> to vector<8x8xf32>
    %250 = arith.subf %246, %249 : vector<8x8xf32>
    %251 = math.exp %250 : vector<8x8xf32>
    %cst_126 = arith.constant dense<0.000000e+00> : vector<8xf32>
    %252 = vector.multi_reduction <add>, %251, %cst_126 [1] : vector<8x8xf32> to vector<8xf32>
    %253 = vector.shape_cast %252 : vector<8xf32> to vector<8x1xf32>
    %254 = tpu.reciprocal %253 {approx = true} : vector<8x1xf32> -> vector<8x1xf32>
    %255 = vector.broadcast %254 : vector<8x1xf32> to vector<8x8xf32>
    %256 = arith.mulf %251, %255 : vector<8x8xf32>
    %257 = arith.truncf %256 : vector<8x8xf32> to vector<8x8xbf16>
    %cst_127 = arith.constant dense<0.000000e+00> : vector<8x16xf32>
    %258 = tpu.matmul %257, %243, %cst_127 {dimension_numbers = #tpu.dot_dimension_numbers<[1], [0], [0], [1], [0, 0, 1, 1], [], []>} : vector<8x8xbf16>, vector<8x16xbf16>, vector<8x16xf32> -> vector<8x16xf32>
    %259 = arith.truncf %258 : vector<8x16xf32> to vector<8x16xbf16>
    %260 = vector.extract_strided_slice %239 {offsets = [0, 0], sizes = [16, 64], strides = [1, 1]} : vector<64x64xbf16> to vector<16x64xbf16>
    %cst_128 = arith.constant dense<0.000000e+00> : vector<8x64xf32>
    %261 = tpu.matmul %259, %260, %cst_128 {dimension_numbers = #tpu.dot_dimension_numbers<[1], [0], [0], [1], [0, 0, 1, 1], [], []>} : vector<8x16xbf16>, vector<16x64xbf16>, vector<8x64xf32> -> vector<8x64xf32>
    %262 = arith.addf %240, %261 : vector<8x64xf32>
    %263 = vector.extract_strided_slice %235 {offsets = [0, 16], sizes = [8, 16], strides = [1, 1]} : vector<8x64xbf16> to vector<8x16xbf16>
    %264 = vector.extract_strided_slice %236 {offsets = [0, 0], sizes = [8, 16], strides = [1, 1]} : vector<8x32xbf16> to vector<8x16xbf16>
    %265 = vector.extract_strided_slice %237 {offsets = [0, 0], sizes = [8, 16], strides = [1, 1]} : vector<8x32xbf16> to vector<8x16xbf16>
    %cst_129 = arith.constant dense<0.000000e+00> : vector<8x8xf32>
    %266 = tpu.matmul %263, %264, %cst_129 {dimension_numbers = #tpu.dot_dimension_numbers<[1], [1], [0], [0], [0, 0, 1, 0], [], []>} : vector<8x16xbf16>, vector<8x16xbf16>, vector<8x8xf32> -> vector<8x8xf32>
    %cst_130 = arith.constant -1.000000e+30 : f32
    %267 = vector.broadcast %cst_130 : f32 to vector<8x8xf32>
    %268 = arith.select %9, %266, %267 : vector<8x8xi1>, vector<8x8xf32>
    %cst_131 = arith.constant dense<0xFF800000> : vector<8xf32>
    %269 = vector.multi_reduction <maximumf>, %268, %cst_131 [1] : vector<8x8xf32> to vector<8xf32>
    %270 = vector.shape_cast %269 : vector<8xf32> to vector<8x1xf32>
    %271 = vector.broadcast %270 : vector<8x1xf32> to vector<8x8xf32>
    %272 = arith.subf %268, %271 : vector<8x8xf32>
    %273 = math.exp %272 : vector<8x8xf32>
    %cst_132 = arith.constant dense<0.000000e+00> : vector<8xf32>
    %274 = vector.multi_reduction <add>, %273, %cst_132 [1] : vector<8x8xf32> to vector<8xf32>
    %275 = vector.shape_cast %274 : vector<8xf32> to vector<8x1xf32>
    %276 = tpu.reciprocal %275 {approx = true} : vector<8x1xf32> -> vector<8x1xf32>
    %277 = vector.broadcast %276 : vector<8x1xf32> to vector<8x8xf32>
    %278 = arith.mulf %273, %277 : vector<8x8xf32>
    %279 = arith.truncf %278 : vector<8x8xf32> to vector<8x8xbf16>
    %cst_133 = arith.constant dense<0.000000e+00> : vector<8x16xf32>
    %280 = tpu.matmul %279, %265, %cst_133 {dimension_numbers = #tpu.dot_dimension_numbers<[1], [0], [0], [1], [0, 0, 1, 1], [], []>} : vector<8x8xbf16>, vector<8x16xbf16>, vector<8x16xf32> -> vector<8x16xf32>
    %281 = arith.truncf %280 : vector<8x16xf32> to vector<8x16xbf16>
    %282 = vector.extract_strided_slice %239 {offsets = [16, 0], sizes = [16, 64], strides = [1, 1]} : vector<64x64xbf16> to vector<16x64xbf16>
    %cst_134 = arith.constant dense<0.000000e+00> : vector<8x64xf32>
    %283 = tpu.matmul %281, %282, %cst_134 {dimension_numbers = #tpu.dot_dimension_numbers<[1], [0], [0], [1], [0, 0, 1, 1], [], []>} : vector<8x16xbf16>, vector<16x64xbf16>, vector<8x64xf32> -> vector<8x64xf32>
    %284 = arith.addf %262, %283 : vector<8x64xf32>
    %285 = vector.extract_strided_slice %235 {offsets = [0, 32], sizes = [8, 16], strides = [1, 1]} : vector<8x64xbf16> to vector<8x16xbf16>
    %286 = vector.extract_strided_slice %236 {offsets = [0, 16], sizes = [8, 16], strides = [1, 1]} : vector<8x32xbf16> to vector<8x16xbf16>
    %287 = vector.extract_strided_slice %237 {offsets = [0, 16], sizes = [8, 16], strides = [1, 1]} : vector<8x32xbf16> to vector<8x16xbf16>
    %cst_135 = arith.constant dense<0.000000e+00> : vector<8x8xf32>
    %288 = tpu.matmul %285, %286, %cst_135 {dimension_numbers = #tpu.dot_dimension_numbers<[1], [1], [0], [0], [0, 0, 1, 0], [], []>} : vector<8x16xbf16>, vector<8x16xbf16>, vector<8x8xf32> -> vector<8x8xf32>
    %cst_136 = arith.constant -1.000000e+30 : f32
    %289 = vector.broadcast %cst_136 : f32 to vector<8x8xf32>
    %290 = arith.select %9, %288, %289 : vector<8x8xi1>, vector<8x8xf32>
    %cst_137 = arith.constant dense<0xFF800000> : vector<8xf32>
    %291 = vector.multi_reduction <maximumf>, %290, %cst_137 [1] : vector<8x8xf32> to vector<8xf32>
    %292 = vector.shape_cast %291 : vector<8xf32> to vector<8x1xf32>
    %293 = vector.broadcast %292 : vector<8x1xf32> to vector<8x8xf32>
    %294 = arith.subf %290, %293 : vector<8x8xf32>
    %295 = math.exp %294 : vector<8x8xf32>
    %cst_138 = arith.constant dense<0.000000e+00> : vector<8xf32>
    %296 = vector.multi_reduction <add>, %295, %cst_138 [1] : vector<8x8xf32> to vector<8xf32>
    %297 = vector.shape_cast %296 : vector<8xf32> to vector<8x1xf32>
    %298 = tpu.reciprocal %297 {approx = true} : vector<8x1xf32> -> vector<8x1xf32>
    %299 = vector.broadcast %298 : vector<8x1xf32> to vector<8x8xf32>
    %300 = arith.mulf %295, %299 : vector<8x8xf32>
    %301 = arith.truncf %300 : vector<8x8xf32> to vector<8x8xbf16>
    %cst_139 = arith.constant dense<0.000000e+00> : vector<8x16xf32>
    %302 = tpu.matmul %301, %287, %cst_139 {dimension_numbers = #tpu.dot_dimension_numbers<[1], [0], [0], [1], [0, 0, 1, 1], [], []>} : vector<8x8xbf16>, vector<8x16xbf16>, vector<8x16xf32> -> vector<8x16xf32>
    %303 = arith.truncf %302 : vector<8x16xf32> to vector<8x16xbf16>
    %304 = vector.extract_strided_slice %239 {offsets = [32, 0], sizes = [16, 64], strides = [1, 1]} : vector<64x64xbf16> to vector<16x64xbf16>
    %cst_140 = arith.constant dense<0.000000e+00> : vector<8x64xf32>
    %305 = tpu.matmul %303, %304, %cst_140 {dimension_numbers = #tpu.dot_dimension_numbers<[1], [0], [0], [1], [0, 0, 1, 1], [], []>} : vector<8x16xbf16>, vector<16x64xbf16>, vector<8x64xf32> -> vector<8x64xf32>
    %306 = arith.addf %284, %305 : vector<8x64xf32>
    %307 = vector.extract_strided_slice %235 {offsets = [0, 48], sizes = [8, 16], strides = [1, 1]} : vector<8x64xbf16> to vector<8x16xbf16>
    %308 = vector.extract_strided_slice %236 {offsets = [0, 16], sizes = [8, 16], strides = [1, 1]} : vector<8x32xbf16> to vector<8x16xbf16>
    %309 = vector.extract_strided_slice %237 {offsets = [0, 16], sizes = [8, 16], strides = [1, 1]} : vector<8x32xbf16> to vector<8x16xbf16>
    %cst_141 = arith.constant dense<0.000000e+00> : vector<8x8xf32>
    %310 = tpu.matmul %307, %308, %cst_141 {dimension_numbers = #tpu.dot_dimension_numbers<[1], [1], [0], [0], [0, 0, 1, 0], [], []>} : vector<8x16xbf16>, vector<8x16xbf16>, vector<8x8xf32> -> vector<8x8xf32>
    %cst_142 = arith.constant -1.000000e+30 : f32
    %311 = vector.broadcast %cst_142 : f32 to vector<8x8xf32>
    %312 = arith.select %9, %310, %311 : vector<8x8xi1>, vector<8x8xf32>
    %cst_143 = arith.constant dense<0xFF800000> : vector<8xf32>
    %313 = vector.multi_reduction <maximumf>, %312, %cst_143 [1] : vector<8x8xf32> to vector<8xf32>
    %314 = vector.shape_cast %313 : vector<8xf32> to vector<8x1xf32>
    %315 = vector.broadcast %314 : vector<8x1xf32> to vector<8x8xf32>
    %316 = arith.subf %312, %315 : vector<8x8xf32>
    %317 = math.exp %316 : vector<8x8xf32>
    %cst_144 = arith.constant dense<0.000000e+00> : vector<8xf32>
    %318 = vector.multi_reduction <add>, %317, %cst_144 [1] : vector<8x8xf32> to vector<8xf32>
    %319 = vector.shape_cast %318 : vector<8xf32> to vector<8x1xf32>
    %320 = tpu.reciprocal %319 {approx = true} : vector<8x1xf32> -> vector<8x1xf32>
    %321 = vector.broadcast %320 : vector<8x1xf32> to vector<8x8xf32>
    %322 = arith.mulf %317, %321 : vector<8x8xf32>
    %323 = arith.truncf %322 : vector<8x8xf32> to vector<8x8xbf16>
    %cst_145 = arith.constant dense<0.000000e+00> : vector<8x16xf32>
    %324 = tpu.matmul %323, %309, %cst_145 {dimension_numbers = #tpu.dot_dimension_numbers<[1], [0], [0], [1], [0, 0, 1, 1], [], []>} : vector<8x8xbf16>, vector<8x16xbf16>, vector<8x16xf32> -> vector<8x16xf32>
    %325 = arith.truncf %324 : vector<8x16xf32> to vector<8x16xbf16>
    %326 = vector.extract_strided_slice %239 {offsets = [48, 0], sizes = [16, 64], strides = [1, 1]} : vector<64x64xbf16> to vector<16x64xbf16>
    %cst_146 = arith.constant dense<0.000000e+00> : vector<8x64xf32>
    %327 = tpu.matmul %325, %326, %cst_146 {dimension_numbers = #tpu.dot_dimension_numbers<[1], [0], [0], [1], [0, 0, 1, 1], [], []>} : vector<8x16xbf16>, vector<16x64xbf16>, vector<8x64xf32> -> vector<8x64xf32>
    %328 = arith.addf %306, %327 : vector<8x64xf32>
    %329 = arith.addf %186, %328 : vector<8x64xf32>
    %c1_147 = arith.constant 1 : index
    %c0_148 = arith.constant 0 : index
    %c0_149 = arith.constant 0 : index
    %330 = vector.load %arg8[%c1_147, %c0_148, %c0_149] : memref<2x1x64xf32, #tpu.memory_space<vmem>>, vector<1x1x64xf32>
    %331 = vector.shape_cast %330 : vector<1x1x64xf32> to vector<1x64xf32>
    %332 = arith.mulf %329, %329 : vector<8x64xf32>
    %cst_150 = arith.constant dense<0.000000e+00> : vector<8xf32>
    %333 = vector.multi_reduction <add>, %332, %cst_150 [1] : vector<8x64xf32> to vector<8xf32>
    %334 = vector.shape_cast %333 : vector<8xf32> to vector<8x1xf32>
    %cst_151 = arith.constant 6.400000e+01 : f32
    %335 = vector.broadcast %cst_151 : f32 to vector<8x1xf32>
    %336 = arith.divf %334, %335 : vector<8x1xf32>
    %cst_152 = arith.constant 9.99999997E-7 : f32
    %337 = vector.broadcast %cst_152 : f32 to vector<8x1xf32>
    %338 = arith.addf %336, %337 : vector<8x1xf32>
    %339 = math.rsqrt %338 : vector<8x1xf32>
    %340 = vector.broadcast %339 : vector<8x1xf32> to vector<8x64xf32>
    %341 = arith.mulf %329, %340 : vector<8x64xf32>
    %342 = vector.broadcast %331 : vector<1x64xf32> to vector<8x64xf32>
    %343 = arith.mulf %341, %342 : vector<8x64xf32>
    %344 = arith.truncf %343 : vector<8x64xf32> to vector<8x64xbf16>
    %c1_153 = arith.constant 1 : index
    %c0_154 = arith.constant 0 : index
    %c0_155 = arith.constant 0 : index
    %345 = vector.load %arg16[%c1_153, %c0_154, %c0_155] : memref<2x64x128xbf16, #tpu.memory_space<vmem>>, vector<1x64x128xbf16>
    %346 = vector.shape_cast %345 : vector<1x64x128xbf16> to vector<64x128xbf16>
    %cst_156 = arith.constant dense<0.000000e+00> : vector<8x128xf32>
    %347 = tpu.matmul %344, %346, %cst_156 {dimension_numbers = #tpu.dot_dimension_numbers<[1], [0], [0], [1], [0, 0, 1, 1], [], []>} : vector<8x64xbf16>, vector<64x128xbf16>, vector<8x128xf32> -> vector<8x128xf32>
    %c1_157 = arith.constant 1 : index
    %c0_158 = arith.constant 0 : index
    %c0_159 = arith.constant 0 : index
    %348 = vector.load %arg17[%c1_157, %c0_158, %c0_159] : memref<2x64x128xbf16, #tpu.memory_space<vmem>>, vector<1x64x128xbf16>
    %349 = vector.shape_cast %348 : vector<1x64x128xbf16> to vector<64x128xbf16>
    %cst_160 = arith.constant dense<0.000000e+00> : vector<8x128xf32>
    %350 = tpu.matmul %344, %349, %cst_160 {dimension_numbers = #tpu.dot_dimension_numbers<[1], [0], [0], [1], [0, 0, 1, 1], [], []>} : vector<8x64xbf16>, vector<64x128xbf16>, vector<8x128xf32> -> vector<8x128xf32>
    %cst_161 = arith.constant 0.000000e+00 : f32
    %351 = vector.broadcast %cst_161 : f32 to vector<8x128xf32>
    %352 = arith.subf %351, %347 : vector<8x128xf32>
    %353 = math.exp %352 : vector<8x128xf32>
    %cst_162 = arith.constant 1.000000e+00 : f32
    %354 = vector.broadcast %cst_162 : f32 to vector<8x128xf32>
    %355 = arith.addf %354, %353 : vector<8x128xf32>
    %356 = tpu.reciprocal %355 {approx = true} : vector<8x128xf32> -> vector<8x128xf32>
    %357 = arith.mulf %347, %356 : vector<8x128xf32>
    %358 = arith.mulf %357, %350 : vector<8x128xf32>
    %359 = arith.truncf %358 : vector<8x128xf32> to vector<8x128xbf16>
    %c1_163 = arith.constant 1 : index
    %c0_164 = arith.constant 0 : index
    %c0_165 = arith.constant 0 : index
    %360 = vector.load %arg18[%c1_163, %c0_164, %c0_165] : memref<2x128x64xbf16, #tpu.memory_space<vmem>>, vector<1x128x64xbf16>
    %361 = vector.shape_cast %360 : vector<1x128x64xbf16> to vector<128x64xbf16>
    %cst_166 = arith.constant dense<0.000000e+00> : vector<8x64xf32>
    %362 = tpu.matmul %359, %361, %cst_166 {dimension_numbers = #tpu.dot_dimension_numbers<[1], [0], [0], [1], [0, 0, 1, 1], [], []>} : vector<8x128xbf16>, vector<128x64xbf16>, vector<8x64xf32> -> vector<8x64xf32>
    %363 = arith.addf %329, %362 : vector<8x64xf32>
    %c0_167 = arith.constant 0 : index
    %c0_168 = arith.constant 0 : index
    %364 = vector.load %arg19[%c0_167, %c0_168] : memref<1x64xf32, #tpu.memory_space<vmem>>, vector<1x64xf32>
    %365 = arith.mulf %363, %363 : vector<8x64xf32>
    %cst_169 = arith.constant dense<0.000000e+00> : vector<8xf32>
    %366 = vector.multi_reduction <add>, %365, %cst_169 [1] : vector<8x64xf32> to vector<8xf32>
    %367 = vector.shape_cast %366 : vector<8xf32> to vector<8x1xf32>
    %cst_170 = arith.constant 6.400000e+01 : f32
    %368 = vector.broadcast %cst_170 : f32 to vector<8x1xf32>
    %369 = arith.divf %367, %368 : vector<8x1xf32>
    %cst_171 = arith.constant 9.99999997E-7 : f32
    %370 = vector.broadcast %cst_171 : f32 to vector<8x1xf32>
    %371 = arith.addf %369, %370 : vector<8x1xf32>
    %372 = math.rsqrt %371 : vector<8x1xf32>
    %373 = vector.broadcast %372 : vector<8x1xf32> to vector<8x64xf32>
    %374 = arith.mulf %363, %373 : vector<8x64xf32>
    %375 = vector.broadcast %364 : vector<1x64xf32> to vector<8x64xf32>
    %376 = arith.mulf %374, %375 : vector<8x64xf32>
    %377 = arith.truncf %376 : vector<8x64xf32> to vector<8x64xbf16>
    %c0_172 = arith.constant 0 : index
    %c0_173 = arith.constant 0 : index
    %378 = vector.load %arg20[%c0_172, %c0_173] : memref<64x128xbf16, #tpu.memory_space<vmem>>, vector<64x128xbf16>
    %cst_174 = arith.constant dense<0.000000e+00> : vector<8x128xf32>
    %379 = tpu.matmul %377, %378, %cst_174 {dimension_numbers = #tpu.dot_dimension_numbers<[1], [0], [0], [1], [0, 0, 1, 1], [], []>} : vector<8x64xbf16>, vector<64x128xbf16>, vector<8x128xf32> -> vector<8x128xf32>
    %c0_175 = arith.constant 0 : index
    %c0_176 = arith.constant 0 : index
    %380 = vector.load %arg21[%c0_175, %c0_176] : memref<8x128xf32, #tpu.memory_space<vmem>>, vector<8x128xf32>
    tpu.vector_store %arg21[%c0_175, %c0_176], %379 {strides = array<i32>} : memref<8x128xf32, #tpu.memory_space<vmem>>, vector<8x128xf32>,
    return
  }
}

</mosaic_0001>

<llo_original>
// kernel: tile.34
$region0: #{tile.34}
  %s0 = inlined_call_operand.vmem [shape: f32[8,2,16], index: 0, kind: input, shape index: {}]
  %s1 = inlined_call_operand.vmem [shape: f32[8,32], index: 1, kind: output, shape index: {}]
  $region1: #{tile.34} parent=0
    #allocation0 [shape = 'u8[32768]{0}', space=vmem, size = 0x8000, scoped, tag = 'scoped mem for input reshape']
    %s3 = sshllo.u32 0, 2
    %s4 = smul.addr 2, 7
    %s5 = scalar_lea.vmem %s0, %s4
    %v6 = vld [vmem:[%s5] sm:%s3]
    %s7 = scalar_lea.vmem [#allocation0], 56
    %8 = vst [vmem:[%s7] sm:%s3] %v6
    %s9 = smul.addr 2, 6
    %s10 = scalar_lea.vmem %s0, %s9
    %v11 = vld [vmem:[%s10] sm:%s3]
    %s12 = scalar_lea.vmem [#allocation0], 48
    %13 = vst [vmem:[%s12] sm:%s3] %v11
    %s14 = smul.addr 2, 5
    %s15 = scalar_lea.vmem %s0, %s14
    %v16 = vld [vmem:[%s15] sm:%s3]
    %s17 = scalar_lea.vmem [#allocation0], 40
    %18 = vst [vmem:[%s17] sm:%s3] %v16
    %s19 = smul.addr 2, 4
    %s20 = scalar_lea.vmem %s0, %s19
    %v21 = vld [vmem:[%s20] sm:%s3]
    %s22 = scalar_lea.vmem [#allocation0], 32
    %23 = vst [vmem:[%s22] sm:%s3] %v21
    %s24 = smul.addr 2, 3
    %s25 = scalar_lea.vmem %s0, %s24
    %v26 = vld [vmem:[%s25] sm:%s3]
    %s27 = scalar_lea.vmem [#allocation0], 24
    %28 = vst [vmem:[%s27] sm:%s3] %v26
    %s29 = smul.addr 2, 2
    %s30 = scalar_lea.vmem %s0, %s29
    %v31 = vld [vmem:[%s30] sm:%s3]
    %s32 = scalar_lea.vmem [#allocation0], 16
    %33 = vst [vmem:[%s32] sm:%s3] %v31
    %s34 = scalar_lea.vmem %s0, 2
    %v35 = vld [vmem:[%s34] sm:%s3]
    %s36 = scalar_lea.vmem [#allocation0], 8
    %37 = vst [vmem:[%s36] sm:%s3] %v35
    %v38 = vld [vmem:[%s0] sm:%s3]
    %39 = vst [vmem:[#allocation0] sm:%s3] %v38
    %v40 = vld [vmem:[#allocation0] ss:$8 sm:$0xf]
    %v41 = vld [vmem:[#allocation0] ss:$8 sm:$0xf0]
    %vm42 = vcmask 1047556
    %v43 = vsel %vm42, %v41, %v40
    %vm44 = vcmask 130048
    %45 = vst.msk [vmem:[%s1] sm:$0xff] %vm44, %v43
    %s46 = scalar_lea.vmem [#allocation0], 1
    %v47 = vld [vmem:[%s46] ss:$8 sm:$0xf]
    %s48 = scalar_lea.vmem [#allocation0], 1
    %v49 = vld [vmem:[%s48] ss:$8 sm:$0xf0]
    %vm50 = vcmask 1047556
    %v51 = vsel %vm50, %v49, %v47
    %52 = vrot.lane.b32.xlu0 %v51, 16
    %v53 = vpop.permute.xlu0 %52
    %vm54 = vcmask 261248
    %55 = vst.msk [vmem:[%s1] sm:$0xff] %vm54, %v53

// kernel: tile.24
$region0: #{tile.24}
  %s0 = inlined_call_operand.vmem [shape: f32[8,4,16], index: 0, kind: input, shape index: {}]
  %s1 = inlined_call_operand.vmem [shape: f32[8,64], index: 1, kind: output, shape index: {}]
  $region1: #{tile.24} parent=0
    #allocation0 [shape = 'u8[32768]{0}', space=vmem, size = 0x8000, scoped, tag = 'scoped mem for input reshape']
    %s3 = sshllo.u32 0, 4
    %s4 = smul.addr 4, 7
    %s5 = scalar_lea.vmem %s0, %s4
    %v6 = vld [vmem:[%s5] sm:%s3]
    %s7 = scalar_lea.vmem [#allocation0], 56
    %8 = vst [vmem:[%s7] sm:%s3] %v6
    %s9 = smul.addr 4, 6
    %s10 = scalar_lea.vmem %s0, %s9
    %v11 = vld [vmem:[%s10] sm:%s3]
    %s12 = scalar_lea.vmem [#allocation0], 48
    %13 = vst [vmem:[%s12] sm:%s3] %v11
    %s14 = smul.addr 4, 5
    %s15 = scalar_lea.vmem %s0, %s14
    %v16 = vld [vmem:[%s15] sm:%s3]
    %s17 = scalar_lea.vmem [#allocation0], 40
    %18 = vst [vmem:[%s17] sm:%s3] %v16
    %s19 = smul.addr 4, 4
    %s20 = scalar_lea.vmem %s0, %s19
    %v21 = vld [vmem:[%s20] sm:%s3]
    %s22 = scalar_lea.vmem [#allocation0], 32
    %23 = vst [vmem:[%s22] sm:%s3] %v21
    %s24 = smul.addr 4, 3
    %s25 = scalar_lea.vmem %s0, %s24
    %v26 = vld [vmem:[%s25] sm:%s3]
    %s27 = scalar_lea.vmem [#allocation0], 24
    %28 = vst [vmem:[%s27] sm:%s3] %v26
    %s29 = smul.addr 4, 2
    %s30 = scalar_lea.vmem %s0, %s29
    %v31 = vld [vmem:[%s30] sm:%s3]
    %s32 = scalar_lea.vmem [#allocation0], 16
    %33 = vst [vmem:[%s32] sm:%s3] %v31
    %s34 = scalar_lea.vmem %s0, 4
    %v35 = vld [vmem:[%s34] sm:%s3]
    %s36 = scalar_lea.vmem [#allocation0], 8
    %37 = vst [vmem:[%s36] sm:%s3] %v35
    %v38 = vld [vmem:[%s0] sm:%s3]
    %39 = vst [vmem:[#allocation0] sm:%s3] %v38
    %v40 = vld [vmem:[#allocation0] ss:$8 sm:$0xf]
    %v41 = vld [vmem:[#allocation0] ss:$8 sm:$0xf0]
    %vm42 = vcmask 1047556
    %v43 = vsel %vm42, %v41, %v40
    %vm44 = vcmask 130048
    %45 = vst.msk [vmem:[%s1] sm:$0xff] %vm44, %v43
    %s46 = scalar_lea.vmem [#allocation0], 3
    %v47 = vld [vmem:[%s46] ss:$8 sm:$0xf]
    %s48 = scalar_lea.vmem [#allocation0], 3
    %v49 = vld [vmem:[%s48] ss:$8 sm:$0xf0]
    %vm50 = vcmask 1047556
    %v51 = vsel %vm50, %v49, %v47
    %52 = vrot.lane.b32.xlu0 %v51, 48
    %v53 = vpop.permute.xlu0 %52
    %vm54 = vcmask 523648
    %55 = vst.msk [vmem:[%s1] sm:$0xff] %vm54, %v53
    %s56 = scalar_lea.vmem [#allocation0], 2
    %v57 = vld [vmem:[%s56] ss:$8 sm:$0xf]
    %s58 = scalar_lea.vmem [#allocation0], 2
    %v59 = vld [vmem:[%s58] ss:$8 sm:$0xf0]
    %vm60 = vcmask 1047556
    %v61 = vsel %vm60, %v59, %v57
    %62 = vrot.lane.b32.xlu0 %v61, 32
    %v63 = vpop.permute.xlu0 %62
    %vm64 = vcmask 392448
    %65 = vst.msk [vmem:[%s1] sm:$0xff] %vm64, %v63
    %s66 = scalar_lea.vmem [#allocation0], 1
    %v67 = vld [vmem:[%s66] ss:$8 sm:$0xf]
    %s68 = scalar_lea.vmem [#allocation0], 1
    %v69 = vld [vmem:[%s68] ss:$8 sm:$0xf0]
    %vm70 = vcmask 1047556
    %v71 = vsel %vm70, %v69, %v67
    %72 = vrot.lane.b32.xlu0 %v71, 16
    %v73 = vpop.permute.xlu0 %72
    %vm74 = vcmask 261248
    %75 = vst.msk [vmem:[%s1] sm:$0xff] %vm74, %v73

// kernel: forward.1
$region0: #{forward.1}
  #allocation0 [shape = 'u32[]', space=smem, size = 0x4, offset = 0x4, fixed_abs, tag = 'smem constant byte address 0x4 - core index']
  #allocation1 [shape = 'u32[144,128]{1,0:T(1,128)}', space=vmem, size = 0x12000, scoped, tag = 'internal scratch']
  %s0 = inlined_call_operand.vmem [shape: f32[8,64], index: 0, kind: input, shape index: {}]
  %s1 = inlined_call_operand.vmem [shape: f32[8,64], index: 1, kind: input, shape index: {}]
  %s2 = inlined_call_operand.vmem [shape: f32[8,64], index: 2, kind: input, shape index: {}]
  %s3 = inlined_call_operand.vmem [shape: f32[8,32], index: 3, kind: input, shape index: {}]
  %s4 = inlined_call_operand.vmem [shape: f32[8,32], index: 4, kind: input, shape index: {}]
  %s5 = inlined_call_operand.vmem [shape: bf16[64,64], index: 5, kind: input, shape index: {}]
  %s6 = inlined_call_operand.vmem [shape: bf16[32,32], index: 6, kind: input, shape index: {}]
  %s7 = inlined_call_operand.vmem [shape: f32[2,1,64], index: 7, kind: input, shape index: {}]
  %s8 = inlined_call_operand.vmem [shape: f32[2,1,64], index: 8, kind: input, shape index: {}]
  %s9 = inlined_call_operand.vmem [shape: bf16[2,64,64], index: 9, kind: input, shape index: {}]
  %s10 = inlined_call_operand.vmem [shape: f32[2,1,64], index: 10, kind: input, shape index: {}]
  %s11 = inlined_call_operand.vmem [shape: bf16[2,64,32], index: 11, kind: input, shape index: {}]
  %s12 = inlined_call_operand.vmem [shape: f32[2,1,32], index: 12, kind: input, shape index: {}]
  %s13 = inlined_call_operand.vmem [shape: bf16[2,64,32], index: 13, kind: input, shape index: {}]
  %s14 = inlined_call_operand.vmem [shape: f32[2,1,32], index: 14, kind: input, shape index: {}]
  %s15 = inlined_call_operand.vmem [shape: bf16[2,64,64], index: 15, kind: input, shape index: {}]
  %s16 = inlined_call_operand.vmem [shape: bf16[2,64,128], index: 16, kind: input, shape index: {}]
  %s17 = inlined_call_operand.vmem [shape: bf16[2,64,128], index: 17, kind: input, shape index: {}]
  %s18 = inlined_call_operand.vmem [shape: bf16[2,128,64], index: 18, kind: input, shape index: {}]
  %s19 = inlined_call_operand.vmem [shape: f32[1,64], index: 19, kind: input, shape index: {}]
  %s20 = inlined_call_operand.vmem [shape: bf16[64,128], index: 20, kind: input, shape index: {}]
  %s21 = inlined_call_operand.vmem [shape: f32[8,128], index: 21, kind: output, shape index: {}]
  %s22 = sld [smem:[#allocation0]]
  $region94: #{forward.1} parent=0
    _
  %s24 = ssub.s32 1, %s22
  %s25 = scalar_select 0, %s24, %s22
  // Predicated region
  $region2: #{forward.1} parent=0 // pred_check
    _
  $region3: #{forward.1} parent=0 // pred_check_branch
    %27 = sbr.rel (0) target = $region5
  $region4: #{forward.1} parent=0 // pred_region
    _
  $region5: #{forward.1} parent=0 // pred_fallthru
    _
  // Predicated region
  $region6: #{forward.1} parent=0 // pred_check
    _
  $region7: #{forward.1} parent=0 // pred_check_branch
    %29 = sbr.rel (0) target = $region9
  $region8: #{forward.1} parent=0 // pred_region
    _
  $region9: #{forward.1} parent=0 // pred_fallthru
    _
  // Predicated region
  $region10: #{forward.1} parent=0 // pred_check
    _
  $region11: #{forward.1} parent=0 // pred_check_branch
    %31 = sbr.rel (0) target = $region13
  $region12: #{forward.1} parent=0 // pred_region
    _
  $region13: #{forward.1} parent=0 // pred_fallthru
    _
  // Predicated region
  $region14: #{forward.1} parent=0 // pred_check
    _
  $region15: #{forward.1} parent=0 // pred_check_branch
    %33 = sbr.rel (0) target = $region17
  $region16: #{forward.1} parent=0 // pred_region
    _
  $region17: #{forward.1} parent=0 // pred_fallthru
    _
  // Predicated region
  $region18: #{forward.1} parent=0 // pred_check
    _
  $region19: #{forward.1} parent=0 // pred_check_branch
    %35 = sbr.rel (0) target = $region21
  $region20: #{forward.1} parent=0 // pred_region
    _
  $region21: #{forward.1} parent=0 // pred_fallthru
    _
  // Predicated region
  $region22: #{forward.1} parent=0 // pred_check
    _
  $region23: #{forward.1} parent=0 // pred_check_branch
    %37 = sbr.rel (0) target = $region25
  $region24: #{forward.1} parent=0 // pred_region
    _
  $region25: #{forward.1} parent=0 // pred_fallthru
    _
  // Predicated region
  $region26: #{forward.1} parent=0 // pred_check
    _
  $region27: #{forward.1} parent=0 // pred_check_branch
    %39 = sbr.rel (0) target = $region29
  $region28: #{forward.1} parent=0 // pred_region
    _
  $region29: #{forward.1} parent=0 // pred_fallthru
    _
  // Predicated region
  $region30: #{forward.1} parent=0 // pred_check
    _
  $region31: #{forward.1} parent=0 // pred_check_branch
    %41 = sbr.rel (0) target = $region33
  $region32: #{forward.1} parent=0 // pred_region
    _
  $region33: #{forward.1} parent=0 // pred_fallthru
    _
  // Predicated region
  $region34: #{forward.1} parent=0 // pred_check
    _
  $region35: #{forward.1} parent=0 // pred_check_branch
    %43 = sbr.rel (0) target = $region37
  $region36: #{forward.1} parent=0 // pred_region
    _
  $region37: #{forward.1} parent=0 // pred_fallthru
    _
  // Predicated region
  $region38: #{forward.1} parent=0 // pred_check
    _
  $region39: #{forward.1} parent=0 // pred_check_branch
    %45 = sbr.rel (0) target = $region41
  $region40: #{forward.1} parent=0 // pred_region
    _
  $region41: #{forward.1} parent=0 // pred_fallthru
    _
  // Predicated region
  $region42: #{forward.1} parent=0 // pred_check
    _
  $region43: #{forward.1} parent=0 // pred_check_branch
    %47 = sbr.rel (0) target = $region45
  $region44: #{forward.1} parent=0 // pred_region
    _
  $region45: #{forward.1} parent=0 // pred_fallthru
    _
  // Predicated region
  $region46: #{forward.1} parent=0 // pred_check
    _
  $region47: #{forward.1} parent=0 // pred_check_branch
    %49 = sbr.rel (0) target = $region49
  $region48: #{forward.1} parent=0 // pred_region
    _
  $region49: #{forward.1} parent=0 // pred_fallthru
    _
  // Predicated region
  $region50: #{forward.1} parent=0 // pred_check
    _
  $region51: #{forward.1} parent=0 // pred_check_branch
    %51 = sbr.rel (0) target = $region53
  $region52: #{forward.1} parent=0 // pred_region
    _
  $region53: #{forward.1} parent=0 // pred_fallthru
    _
  // Predicated region
  $region54: #{forward.1} parent=0 // pred_check
    _
  $region55: #{forward.1} parent=0 // pred_check_branch
    %53 = sbr.rel (0) target = $region57
  $region56: #{forward.1} parent=0 // pred_region
    _
  $region57: #{forward.1} parent=0 // pred_fallthru
    _
  // Predicated region
  $region58: #{forward.1} parent=0 // pred_check
    _
  $region59: #{forward.1} parent=0 // pred_check_branch
    %55 = sbr.rel (0) target = $region61
  $region60: #{forward.1} parent=0 // pred_region
    _
  $region61: #{forward.1} parent=0 // pred_fallthru
    _
  // Predicated region
  $region62: #{forward.1} parent=0 // pred_check
    _
  $region63: #{forward.1} parent=0 // pred_check_branch
    %57 = sbr.rel (0) target = $region65
  $region64: #{forward.1} parent=0 // pred_region
    _
  $region65: #{forward.1} parent=0 // pred_fallthru
    _
  // Predicated region
  $region66: #{forward.1} parent=0 // pred_check
    _
  $region67: #{forward.1} parent=0 // pred_check_branch
    %59 = sbr.rel (0) target = $region69
  $region68: #{forward.1} parent=0 // pred_region
    _
  $region69: #{forward.1} parent=0 // pred_fallthru
    _
  // Predicated region
  $region70: #{forward.1} parent=0 // pred_check
    _
  $region71: #{forward.1} parent=0 // pred_check_branch
    %61 = sbr.rel (0) target = $region73
  $region72: #{forward.1} parent=0 // pred_region
    _
  $region73: #{forward.1} parent=0 // pred_fallthru
    _
  // Predicated region
  $region74: #{forward.1} parent=0 // pred_check
    _
  $region75: #{forward.1} parent=0 // pred_check_branch
    %63 = sbr.rel (0) target = $region77
  $region76: #{forward.1} parent=0 // pred_region
    _
  $region77: #{forward.1} parent=0 // pred_fallthru
    _
  // Predicated region
  $region78: #{forward.1} parent=0 // pred_check
    _
  $region79: #{forward.1} parent=0 // pred_check_branch
    %65 = sbr.rel (0) target = $region81
  $region80: #{forward.1} parent=0 // pred_region
    _
  $region81: #{forward.1} parent=0 // pred_fallthru
    _
  // Predicated region
  $region82: #{forward.1} parent=0 // pred_check
    _
  $region83: #{forward.1} parent=0 // pred_check_branch
    %67 = sbr.rel (0) target = $region85
  $region84: #{forward.1} parent=0 // pred_region
    _
  $region85: #{forward.1} parent=0 // pred_fallthru
    _
  %v69 = vld [vmem:[%s0] sm:$0xff]
  %v70 = vld [vmem:[%s1] sm:$0xff]
  %v71 = vld [vmem:[%s2] sm:$0xff]
  %v72 = vld [vmem:[%s3] sm:$0xff]
  %v73 = vld [vmem:[%s4] sm:$0xff]
  %v74 = vld [vmem:[%s5] sm:$0xf]
  %v75 = vld [vmem:[%s5 + $0x4] sm:$0xf]
  %v76 = vld [vmem:[%s5 + $0x8] sm:$0xf]
  %v77 = vld [vmem:[%s5 + $0xc] sm:$0xf]
  %v78 = vld [vmem:[%s5 + $0x10] sm:$0xf]
  %v79 = vld [vmem:[%s5 + $0x14] sm:$0xf]
  %v80 = vld [vmem:[%s5 + $0x18] sm:$0xf]
  %v81 = vld [vmem:[%s5 + $0x1c] sm:$0xf]
  %v82 = vld [vmem:[%s6] sm:$0xf]
  %v83 = vld [vmem:[%s6 + $0x4] sm:$0xf]
  %v84 = vld [vmem:[%s6 + $0x8] sm:$0xf]
  %v85 = vld [vmem:[%s6 + $0xc] sm:$0xf]
  %v86 = vlaneseq
  %v87 = vshrl.u32 %v86, 7
  %v88 = vlaneseq
  %v89 = vand.u32 %v88, 127
  %vm90 = vcmp.ge.s32.totalorder %v87, %v89
  %v91 = vld [vmem:[%s7] sm:$0x1]
  %v92 = vmul.f32 %v69, %v69
  %vm93 = vcmask 523264
  %v94 = vsel %vm93, %v92, 0.0
  %95 = vadd.xlane.f32.xlu0 %v94
  %v96 = vpop.xlane.xlu0 %95
  %v97 = vrcp.pop 64.0
  %v98 = vmul.f32 %v96, %v97
  %v99 = vadd.f32 %v98, 1e-06
  %v100 = vrsqrt.pop %v99
  %v101 = vmul.f32 %v69, %v100
  %v103 = vlaneseq
  %v104 = vshrl.u32 %v103, 7
  %v105 = vsub.s32 0, %v104
  %v106 = vrot.slane %v91, %v105
  %v108 = vmul.f32 %v101, %v106
  %v109 = vpack.c.bf16 %v108, %v108
  %v110 = vld [vmem:[%s9] sm:$0xf]
  %v111 = vld [vmem:[%s9 + $0x4] sm:$0xf]
  %v112 = vld [vmem:[%s9 + $0x8] sm:$0xf]
  %v113 = vld [vmem:[%s9 + $0xc] sm:$0xf]
  %v114 = vld [vmem:[%s9 + $0x10] sm:$0xf]
  %v115 = vld [vmem:[%s9 + $0x14] sm:$0xf]
  %v116 = vld [vmem:[%s9 + $0x18] sm:$0xf]
  %v117 = vld [vmem:[%s9 + $0x1c] sm:$0xf]
  %v118 = vld [vmem:[%s10] sm:$0x1]
  %v120 = vlaneseq
  %v121 = vshrl.u32 %v120, 7
  %v122 = vsub.s32 0, %v121
  %v123 = vrot.slane %v118, %v122
  %v133 = vunpack.c.l.b16 %v110
  %v134 = vunpack.c.l.b16 %v111
  %v135 = vunpack.c.l.b16 %v112
  %v136 = vunpack.c.l.b16 %v113
  %v137 = vunpack.c.l.b16 %v114
  %v138 = vunpack.c.l.b16 %v115
  %v139 = vunpack.c.l.b16 %v116
  %v140 = vunpack.c.l.b16 %v117
  %v141 = vpack.c.b16 %v134, %v133
  %v142 = vpack.c.b16 %v136, %v135
  %v143 = vpack.c.b16 %v138, %v137
  %v144 = vpack.c.b16 %v140, %v139
  %v150 = vsel %vm93, %v109, 0
  %152 = vmatprep.subr.bf16.mxu0 0
  %153 = vmatpush1.bf16.msra.mxu0 %v141
  %154 = vmatprep.subr.bf16.mxu0 0
  %155 = vmatpush1.bf16.msra.mxu0 %v142
  %156 = vmatprep.subr.bf16.mxu0 0
  %157 = vmatpush1.bf16.msra.mxu0 %v143
  %158 = vmatprep.subr.bf16.mxu0 0
  %159 = vmatpush1.bf16.msra.mxu0 %v144
  %160 = vmatprep.subr.bf16.mxu0 0
  %161 = vmatpush1.bf16.msra.mxu0 0
  %162 = vmatprep.subr.bf16.mxu0 0
  %163 = vmatpush1.bf16.msra.mxu0 0
  %164 = vmatprep.subr.bf16.mxu0 0
  %165 = vmatpush1.bf16.msra.mxu0 0
  %166 = vmatprep.subr.bf16.mxu0 0
  %167 = vmatpush1.bf16.msra.mxu0 0
  %168 = vmatprep.subr.bf16.mxu0 0
  %169 = vmatpush1.bf16.msra.mxu0 0
  %170 = vmatprep.subr.bf16.mxu0 0
  %171 = vmatpush1.bf16.msra.mxu0 0
  %172 = vmatprep.subr.bf16.mxu0 0
  %173 = vmatpush1.bf16.msra.mxu0 0
  %174 = vmatprep.subr.bf16.mxu0 0
  %175 = vmatpush1.bf16.msra.mxu0 0
  %176 = vmatprep.subr.bf16.mxu0 0
  %177 = vmatpush1.bf16.msra.mxu0 0
  %178 = vmatprep.subr.bf16.mxu0 0
  %179 = vmatpush1.bf16.msra.mxu0 0
  %180 = vmatprep.subr.bf16.mxu0 0
  %181 = vmatpush1.bf16.msra.mxu0 0
  %182 = vmatprep.subr.bf16.mxu0 0
  %183 = vmatpush1.bf16.msra.mxu0 0
  %184 = vmatprep.mubr.bf16.mxu0 0
  %185 = vmatmul.mubr.bf16.gmra.mrb[0].mxu0 %v150
  %v186 = vpop.f32.mrb[0].mxu0
  %v187 = vadd.f32 %v123, %v186
  %v188 = vpop.f32.mrb[0].mxu0
  %v189 = vpop.f32.mrb[0].mxu0
  %v190 = vpop.f32.mrb[0].mxu0
  %191 = vdwg.mxu0
  %v192 = vld [vmem:[%s11] sm:$0xf]
  %v193 = vld [vmem:[%s11 + $0x4] sm:$0xf]
  %v194 = vld [vmem:[%s11 + $0x8] sm:$0xf]
  %v195 = vld [vmem:[%s11 + $0xc] sm:$0xf]
  %v196 = vld [vmem:[%s11 + $0x10] sm:$0xf]
  %v197 = vld [vmem:[%s11 + $0x14] sm:$0xf]
  %v198 = vld [vmem:[%s11 + $0x18] sm:$0xf]
  %v199 = vld [vmem:[%s11 + $0x1c] sm:$0xf]
  %v200 = vld [vmem:[%s12] sm:$0x1]
  %v202 = vlaneseq
  %v203 = vshrl.u32 %v202, 7
  %v204 = vsub.s32 0, %v203
  %v205 = vrot.slane %v200, %v204
  %v215 = vunpack.c.l.b16 %v192
  %v216 = vunpack.c.l.b16 %v193
  %v217 = vunpack.c.l.b16 %v194
  %v218 = vunpack.c.l.b16 %v195
  %v219 = vunpack.c.l.b16 %v196
  %v220 = vunpack.c.l.b16 %v197
  %v221 = vunpack.c.l.b16 %v198
  %v222 = vunpack.c.l.b16 %v199
  %v223 = vpack.c.b16 %v216, %v215
  %v224 = vpack.c.b16 %v218, %v217
  %v225 = vpack.c.b16 %v220, %v219
  %v226 = vpack.c.b16 %v222, %v221
  %231 = vmatprep.subr.bf16.mxu0 0
  %232 = vmatpush1.bf16.msra.mxu0 %v223
  %233 = vmatprep.subr.bf16.mxu0 0
  %234 = vmatpush1.bf16.msra.mxu0 %v224
  %235 = vmatprep.subr.bf16.mxu0 0
  %236 = vmatpush1.bf16.msra.mxu0 %v225
  %237 = vmatprep.subr.bf16.mxu0 0
  %238 = vmatpush1.bf16.msra.mxu0 %v226
  %239 = vmatprep.subr.bf16.mxu0 0
  %240 = vmatpush1.bf16.msra.mxu0 0
  %241 = vmatprep.subr.bf16.mxu0 0
  %242 = vmatpush1.bf16.msra.mxu0 0
  %243 = vmatprep.subr.bf16.mxu0 0
  %244 = vmatpush1.bf16.msra.mxu0 0
  %245 = vmatprep.subr.bf16.mxu0 0
  %246 = vmatpush1.bf16.msra.mxu0 0
  %247 = vmatprep.subr.bf16.mxu0 0
  %248 = vmatpush1.bf16.msra.mxu0 0
  %249 = vmatprep.subr.bf16.mxu0 0
  %250 = vmatpush1.bf16.msra.mxu0 0
  %251 = vmatprep.subr.bf16.mxu0 0
  %252 = vmatpush1.bf16.msra.mxu0 0
  %253 = vmatprep.subr.bf16.mxu0 0
  %254 = vmatpush1.bf16.msra.mxu0 0
  %255 = vmatprep.subr.bf16.mxu0 0
  %256 = vmatpush1.bf16.msra.mxu0 0
  %257 = vmatprep.subr.bf16.mxu0 0
  %258 = vmatpush1.bf16.msra.mxu0 0
  %259 = vmatprep.subr.bf16.mxu0 0
  %260 = vmatpush1.bf16.msra.mxu0 0
  %261 = vmatprep.subr.bf16.mxu0 0
  %262 = vmatpush1.bf16.msra.mxu0 0
  %263 = vmatprep.mubr.bf16.mxu0 0
  %264 = vmatmul.mubr.bf16.gmra.mrb[0].mxu0 %v150
  %v265 = vpop.f32.mrb[0].mxu0
  %v266 = vadd.f32 %v205, %v265
  %v267 = vpop.f32.mrb[0].mxu0
  %v268 = vpop.f32.mrb[0].mxu0
  %v269 = vpop.f32.mrb[0].mxu0
  %270 = vdwg.mxu0
  %v271 = vld [vmem:[%s13] sm:$0xf]
  %v272 = vld [vmem:[%s13 + $0x4] sm:$0xf]
  %v273 = vld [vmem:[%s13 + $0x8] sm:$0xf]
  %v274 = vld [vmem:[%s13 + $0xc] sm:$0xf]
  %v275 = vld [vmem:[%s13 + $0x10] sm:$0xf]
  %v276 = vld [vmem:[%s13 + $0x14] sm:$0xf]
  %v277 = vld [vmem:[%s13 + $0x18] sm:$0xf]
  %v278 = vld [vmem:[%s13 + $0x1c] sm:$0xf]
  %v279 = vld [vmem:[%s14] sm:$0x1]
  %v281 = vlaneseq
  %v282 = vshrl.u32 %v281, 7
  %v283 = vsub.s32 0, %v282
  %v284 = vrot.slane %v279, %v283
  %v294 = vunpack.c.l.b16 %v271
  %v295 = vunpack.c.l.b16 %v272
  %v296 = vunpack.c.l.b16 %v273
  %v297 = vunpack.c.l.b16 %v274
  %v298 = vunpack.c.l.b16 %v275
  %v299 = vunpack.c.l.b16 %v276
  %v300 = vunpack.c.l.b16 %v277
  %v301 = vunpack.c.l.b16 %v278
  %v302 = vpack.c.b16 %v295, %v294
  %v303 = vpack.c.b16 %v297, %v296
  %v304 = vpack.c.b16 %v299, %v298
  %v305 = vpack.c.b16 %v301, %v300
  %310 = vmatprep.subr.bf16.mxu0 0
  %311 = vmatpush1.bf16.msra.mxu0 %v302
  %312 = vmatprep.subr.bf16.mxu0 0
  %313 = vmatpush1.bf16.msra.mxu0 %v303
  %314 = vmatprep.subr.bf16.mxu0 0
  %315 = vmatpush1.bf16.msra.mxu0 %v304
  %316 = vmatprep.subr.bf16.mxu0 0
  %317 = vmatpush1.bf16.msra.mxu0 %v305
  %318 = vmatprep.subr.bf16.mxu0 0
  %319 = vmatpush1.bf16.msra.mxu0 0
  %320 = vmatprep.subr.bf16.mxu0 0
  %321 = vmatpush1.bf16.msra.mxu0 0
  %322 = vmatprep.subr.bf16.mxu0 0
  %323 = vmatpush1.bf16.msra.mxu0 0
  %324 = vmatprep.subr.bf16.mxu0 0
  %325 = vmatpush1.bf16.msra.mxu0 0
  %326 = vmatprep.subr.bf16.mxu0 0
  %327 = vmatpush1.bf16.msra.mxu0 0
  %328 = vmatprep.subr.bf16.mxu0 0
  %329 = vmatpush1.bf16.msra.mxu0 0
  %330 = vmatprep.subr.bf16.mxu0 0
  %331 = vmatpush1.bf16.msra.mxu0 0
  %332 = vmatprep.subr.bf16.mxu0 0
  %333 = vmatpush1.bf16.msra.mxu0 0
  %334 = vmatprep.subr.bf16.mxu0 0
  %335 = vmatpush1.bf16.msra.mxu0 0
  %336 = vmatprep.subr.bf16.mxu0 0
  %337 = vmatpush1.bf16.msra.mxu0 0
  %338 = vmatprep.subr.bf16.mxu0 0
  %339 = vmatpush1.bf16.msra.mxu0 0
  %340 = vmatprep.subr.bf16.mxu0 0
  %341 = vmatpush1.bf16.msra.mxu0 0
  %342 = vmatprep.mubr.bf16.mxu0 0
  %343 = vmatmul.mubr.bf16.gmra.mrb[0].mxu0 %v150
  %v344 = vpop.f32.mrb[0].mxu0
  %v345 = vadd.f32 %v284, %v344
  %v346 = vpop.f32.mrb[0].mxu0
  %v347 = vpop.f32.mrb[0].mxu0
  %v348 = vpop.f32.mrb[0].mxu0
  %349 = vdwg.mxu0
  %v350 = vmul.f32 %v187, %v70
  %v351 = vpack.c.bf16 %v187, %v187
  %v360 = vunpack.c.l.b16 %v74
  %v361 = vunpack.c.l.b16 %v75
  %v362 = vunpack.c.l.b16 %v76
  %v363 = vunpack.c.l.b16 %v77
  %v364 = vunpack.c.l.b16 %v78
  %v365 = vunpack.c.l.b16 %v79
  %v366 = vunpack.c.l.b16 %v80
  %v367 = vunpack.c.l.b16 %v81
  %v368 = vpack.c.b16 %v361, %v360
  %v369 = vpack.c.b16 %v363, %v362
  %v370 = vpack.c.b16 %v365, %v364
  %v371 = vpack.c.b16 %v367, %v366
  %v377 = vsel %vm93, %v351, 0
  %379 = vmatprep.subr.bf16.mxu0 0
  %380 = vmatpush1.bf16.msra.mxu0 %v368
  %381 = vmatprep.subr.bf16.mxu0 0
  %382 = vmatpush1.bf16.msra.mxu0 %v369
  %383 = vmatprep.subr.bf16.mxu0 0
  %384 = vmatpush1.bf16.msra.mxu0 %v370
  %385 = vmatprep.subr.bf16.mxu0 0
  %386 = vmatpush1.bf16.msra.mxu0 %v371
  %387 = vmatprep.subr.bf16.mxu0 0
  %388 = vmatpush1.bf16.msra.mxu0 0
  %389 = vmatprep.subr.bf16.mxu0 0
  %390 = vmatpush1.bf16.msra.mxu0 0
  %391 = vmatprep.subr.bf16.mxu0 0
  %392 = vmatpush1.bf16.msra.mxu0 0
  %393 = vmatprep.subr.bf16.mxu0 0
  %394 = vmatpush1.bf16.msra.mxu0 0
  %395 = vmatprep.subr.bf16.mxu0 0
  %396 = vmatpush1.bf16.msra.mxu0 0
  %397 = vmatprep.subr.bf16.mxu0 0
  %398 = vmatpush1.bf16.msra.mxu0 0
  %399 = vmatprep.subr.bf16.mxu0 0
  %400 = vmatpush1.bf16.msra.mxu0 0
  %401 = vmatprep.subr.bf16.mxu0 0
  %402 = vmatpush1.bf16.msra.mxu0 0
  %403 = vmatprep.subr.bf16.mxu0 0
  %404 = vmatpush1.bf16.msra.mxu0 0
  %405 = vmatprep.subr.bf16.mxu0 0
  %406 = vmatpush1.bf16.msra.mxu0 0
  %407 = vmatprep.subr.bf16.mxu0 0
  %408 = vmatpush1.bf16.msra.mxu0 0
  %409 = vmatprep.subr.bf16.mxu0 0
  %410 = vmatpush1.bf16.msra.mxu0 0
  %411 = vmatprep.mubr.bf16.mxu0 0
  %412 = vmatmul.mubr.bf16.gmra.mrb[0].mxu0 %v377
  %v413 = vpop.f32.mrb[0].mxu0
  %v414 = vadd.f32 0.0, %v413
  %v415 = vpop.f32.mrb[0].mxu0
  %v416 = vpop.f32.mrb[0].mxu0
  %v417 = vpop.f32.mrb[0].mxu0
  %418 = vdwg.mxu0
  %v419 = vmul.f32 %v414, %v71
  %v420 = vadd.f32 %v350, %v419
  %v421 = vmul.f32 %v266, %v72
  %v422 = vpack.c.bf16 %v266, %v266
  %v427 = vunpack.c.l.b16 %v82
  %v428 = vunpack.c.l.b16 %v83
  %v429 = vunpack.c.l.b16 %v84
  %v430 = vunpack.c.l.b16 %v85
  %v431 = vpack.c.b16 %v428, %v427
  %v432 = vpack.c.b16 %v430, %v429
  %vm435 = vcmask 261120
  %v437 = vsel %vm435, %v422, 0
  %439 = vmatprep.subr.bf16.mxu0 0
  %440 = vmatpush1.bf16.msra.mxu0 %v431
  %441 = vmatprep.subr.bf16.mxu0 0
  %442 = vmatpush1.bf16.msra.mxu0 %v432
  %443 = vmatprep.subr.bf16.mxu0 0
  %444 = vmatpush1.bf16.msra.mxu0 0
  %445 = vmatprep.subr.bf16.mxu0 0
  %446 = vmatpush1.bf16.msra.mxu0 0
  %447 = vmatprep.subr.bf16.mxu0 0
  %448 = vmatpush1.bf16.msra.mxu0 0
  %449 = vmatprep.subr.bf16.mxu0 0
  %450 = vmatpush1.bf16.msra.mxu0 0
  %451 = vmatprep.subr.bf16.mxu0 0
  %452 = vmatpush1.bf16.msra.mxu0 0
  %453 = vmatprep.subr.bf16.mxu0 0
  %454 = vmatpush1.bf16.msra.mxu0 0
  %455 = vmatprep.subr.bf16.mxu0 0
  %456 = vmatpush1.bf16.msra.mxu0 0
  %457 = vmatprep.subr.bf16.mxu0 0
  %458 = vmatpush1.bf16.msra.mxu0 0
  %459 = vmatprep.subr.bf16.mxu0 0
  %460 = vmatpush1.bf16.msra.mxu0 0
  %461 = vmatprep.subr.bf16.mxu0 0
  %462 = vmatpush1.bf16.msra.mxu0 0
  %463 = vmatprep.subr.bf16.mxu0 0
  %464 = vmatpush1.bf16.msra.mxu0 0
  %465 = vmatprep.subr.bf16.mxu0 0
  %466 = vmatpush1.bf16.msra.mxu0 0
  %467 = vmatprep.subr.bf16.mxu0 0
  %468 = vmatpush1.bf16.msra.mxu0 0
  %469 = vmatprep.subr.bf16.mxu0 0
  %470 = vmatpush1.bf16.msra.mxu0 0
  %471 = vmatprep.mubr.bf16.mxu0 0
  %472 = vmatmul.mubr.bf16.gmra.mrb[0].mxu0 %v437
  %v473 = vpop.f32.mrb[0].mxu0
  %v474 = vadd.f32 0.0, %v473
  %v475 = vpop.f32.mrb[0].mxu0
  %v476 = vpop.f32.mrb[0].mxu0
  %v477 = vpop.f32.mrb[0].mxu0
  %478 = vdwg.mxu0
  %v479 = vmul.f32 %v474, %v73
  %v480 = vadd.f32 %v421, %v479
  %v481 = vmul.f32 %v420, 0.25
  %v482 = vpack.c.bf16 %v481, %v481
  %v483 = vpack.c.bf16 %v480, %v480
  %v484 = vpack.c.bf16 %v345, %v345
  %v485 = vld [vmem:[%s15] sm:$0xf]
  %v486 = vld [vmem:[%s15 + $0x4] sm:$0xf]
  %v487 = vld [vmem:[%s15 + $0x8] sm:$0xf]
  %v488 = vld [vmem:[%s15 + $0xc] sm:$0xf]
  %v489 = vld [vmem:[%s15 + $0x10] sm:$0xf]
  %v490 = vld [vmem:[%s15 + $0x14] sm:$0xf]
  %v491 = vld [vmem:[%s15 + $0x18] sm:$0xf]
  %v492 = vld [vmem:[%s15 + $0x1c] sm:$0xf]
  %vm493 = vcmask 130048
  %v495 = vsel %vm493, %v482, 0
  %v498 = vsel %vm493, %v483, 0
  %500 = vmatprep.subr.bf16.mxu0 0
  %501 = vmatpush1.bf16.xpose.msra.mxu0 %v498
  %502 = vmatprep.subr.bf16.mxu0 0
  %503 = vmatpush1.bf16.xpose.msra.mxu0 0
  %504 = vmatprep.subr.bf16.mxu0 0
  %505 = vmatpush1.bf16.xpose.msra.mxu0 0
  %506 = vmatprep.subr.bf16.mxu0 0
  %507 = vmatpush1.bf16.xpose.msra.mxu0 0
  %508 = vmatprep.subr.bf16.mxu0 0
  %509 = vmatpush1.bf16.xpose.msra.mxu0 0
  %510 = vmatprep.subr.bf16.mxu0 0
  %511 = vmatpush1.bf16.xpose.msra.mxu0 0
  %512 = vmatprep.subr.bf16.mxu0 0
  %513 = vmatpush1.bf16.xpose.msra.mxu0 0
  %514 = vmatprep.subr.bf16.mxu0 0
  %515 = vmatpush1.bf16.xpose.msra.mxu0 0
  %516 = vmatprep.subr.bf16.mxu0 0
  %517 = vmatpush1.bf16.xpose.msra.mxu0 0
  %518 = vmatprep.subr.bf16.mxu0 0
  %519 = vmatpush1.bf16.xpose.msra.mxu0 0
  %520 = vmatprep.subr.bf16.mxu0 0
  %521 = vmatpush1.bf16.xpose.msra.mxu0 0
  %522 = vmatprep.subr.bf16.mxu0 0
  %523 = vmatpush1.bf16.xpose.msra.mxu0 0
  %524 = vmatprep.subr.bf16.mxu0 0
  %525 = vmatpush1.bf16.xpose.msra.mxu0 0
  %526 = vmatprep.subr.bf16.mxu0 0
  %527 = vmatpush1.bf16.xpose.msra.mxu0 0
  %528 = vmatprep.subr.bf16.mxu0 0
  %529 = vmatpush1.bf16.xpose.msra.mxu0 0
  %530 = vmatprep.subr.bf16.mxu0 0
  %531 = vmatpush1.bf16.xpose.msra.mxu0 0
  %532 = vmatprep.mubr.bf16.mxu0 0
  %533 = vmatmul.mubr.bf16.gmra.mrb[0].mxu0 %v495
  %v534 = vpop.f32.mrb[0].mxu0
  %v535 = vadd.f32 0.0, %v534
  %v536 = vpop.f32.mrb[0].mxu0
  %v537 = vpop.f32.mrb[0].mxu0
  %v538 = vpop.f32.mrb[0].mxu0
  %539 = vdwg.mxu0
  %v540 = vsel %vm90, %v535, -1e+30
  %vm541 = vcmask 64512
  %v542 = vsel %vm541, %v540, -inf
  %543 = vmax.xlane.f32.xlu0 %v542
  %v544 = vpop.xlane.xlu0 %543
  %v545 = vsub.f32 %v540, %v544
  %v546 = vmul.f32 %v545, 1.442695
  %v547 = vpow.pop %v546
  %v548 = vsel %vm541, %v547, 0.0
  %549 = vadd.xlane.f32.xlu0 %v548
  %v550 = vpop.xlane.xlu0 %549
  %v551 = vrcp.pop %v550
  %v552 = vmul.f32 %v547, %v551
  %v553 = vpack.c.bf16 %v552, %v552
  %v555 = vsel %vm541, %v553, 0
  %vm557 = vcmask 1043456
  %v559 = vsel %vm557, %v484, 0
  %561 = vmatprep.subr.bf16.mxu0 0
  %562 = vmatpush1.bf16.msra.mxu0 %v559
  %563 = vmatprep.subr.bf16.mxu0 0
  %564 = vmatpush1.bf16.msra.mxu0 0
  %565 = vmatprep.subr.bf16.mxu0 0
  %566 = vmatpush1.bf16.msra.mxu0 0
  %567 = vmatprep.subr.bf16.mxu0 0
  %568 = vmatpush1.bf16.msra.mxu0 0
  %569 = vmatprep.subr.bf16.mxu0 0
  %570 = vmatpush1.bf16.msra.mxu0 0
  %571 = vmatprep.subr.bf16.mxu0 0
  %572 = vmatpush1.bf16.msra.mxu0 0
  %573 = vmatprep.subr.bf16.mxu0 0
  %574 = vmatpush1.bf16.msra.mxu0 0
  %575 = vmatprep.subr.bf16.mxu0 0
  %576 = vmatpush1.bf16.msra.mxu0 0
  %577 = vmatprep.subr.bf16.mxu0 0
  %578 = vmatpush1.bf16.msra.mxu0 0
  %579 = vmatprep.subr.bf16.mxu0 0
  %580 = vmatpush1.bf16.msra.mxu0 0
  %581 = vmatprep.subr.bf16.mxu0 0
  %582 = vmatpush1.bf16.msra.mxu0 0
  %583 = vmatprep.subr.bf16.mxu0 0
  %584 = vmatpush1.bf16.msra.mxu0 0
  %585 = vmatprep.subr.bf16.mxu0 0
  %586 = vmatpush1.bf16.msra.mxu0 0
  %587 = vmatprep.subr.bf16.mxu0 0
  %588 = vmatpush1.bf16.msra.mxu0 0
  %589 = vmatprep.subr.bf16.mxu0 0
  %590 = vmatpush1.bf16.msra.mxu0 0
  %591 = vmatprep.subr.bf16.mxu0 0
  %592 = vmatpush1.bf16.msra.mxu0 0
  %593 = vmatprep.mubr.bf16.mxu0 0
  %594 = vmatmul.mubr.bf16.gmra.mrb[0].mxu0 %v555
  %v595 = vpop.f32.mrb[0].mxu0
  %v596 = vadd.f32 0.0, %v595
  %v597 = vpop.f32.mrb[0].mxu0
  %v598 = vpop.f32.mrb[0].mxu0
  %v599 = vpop.f32.mrb[0].mxu0
  %600 = vdwg.mxu0
  %v601 = vpack.c.bf16 %v596, %v596
  %603 = vrot.lane.b32.xlu0 %v482, 112
  %v604 = vpop.permute.xlu0 %603
  %v606 = vsel %vm493, %v604, 0
  %608 = vmatprep.subr.bf16.mxu0 0
  %609 = vmatpush1.bf16.xpose.msra.mxu0 %v498
  %610 = vmatprep.subr.bf16.mxu0 0
  %611 = vmatpush1.bf16.xpose.msra.mxu0 0
  %612 = vmatprep.subr.bf16.mxu0 0
  %613 = vmatpush1.bf16.xpose.msra.mxu0 0
  %614 = vmatprep.subr.bf16.mxu0 0
  %615 = vmatpush1.bf16.xpose.msra.mxu0 0
  %616 = vmatprep.subr.bf16.mxu0 0
  %617 = vmatpush1.bf16.xpose.msra.mxu0 0
  %618 = vmatprep.subr.bf16.mxu0 0
  %619 = vmatpush1.bf16.xpose.msra.mxu0 0
  %620 = vmatprep.subr.bf16.mxu0 0
  %621 = vmatpush1.bf16.xpose.msra.mxu0 0
  %622 = vmatprep.subr.bf16.mxu0 0
  %623 = vmatpush1.bf16.xpose.msra.mxu0 0
  %624 = vmatprep.subr.bf16.mxu0 0
  %625 = vmatpush1.bf16.xpose.msra.mxu0 0
  %626 = vmatprep.subr.bf16.mxu0 0
  %627 = vmatpush1.bf16.xpose.msra.mxu0 0
  %628 = vmatprep.subr.bf16.mxu0 0
  %629 = vmatpush1.bf16.xpose.msra.mxu0 0
  %630 = vmatprep.subr.bf16.mxu0 0
  %631 = vmatpush1.bf16.xpose.msra.mxu0 0
  %632 = vmatprep.subr.bf16.mxu0 0
  %633 = vmatpush1.bf16.xpose.msra.mxu0 0
  %634 = vmatprep.subr.bf16.mxu0 0
  %635 = vmatpush1.bf16.xpose.msra.mxu0 0
  %636 = vmatprep.subr.bf16.mxu0 0
  %637 = vmatpush1.bf16.xpose.msra.mxu0 0
  %638 = vmatprep.subr.bf16.mxu0 0
  %639 = vmatpush1.bf16.xpose.msra.mxu0 0
  %640 = vmatprep.mubr.bf16.mxu0 0
  %641 = vmatmul.mubr.bf16.gmra.mrb[0].mxu0 %v606
  %v642 = vpop.f32.mrb[0].mxu0
  %v643 = vadd.f32 0.0, %v642
  %v644 = vpop.f32.mrb[0].mxu0
  %v645 = vpop.f32.mrb[0].mxu0
  %v646 = vpop.f32.mrb[0].mxu0
  %647 = vdwg.mxu0
  %v648 = vsel %vm90, %v643, -1e+30
  %v649 = vsel %vm541, %v648, -inf
  %650 = vmax.xlane.f32.xlu0 %v649
  %v651 = vpop.xlane.xlu0 %650
  %v652 = vsub.f32 %v648, %v651
  %v653 = vmul.f32 %v652, 1.442695
  %v654 = vpow.pop %v653
  %v655 = vsel %vm541, %v654, 0.0
  %656 = vadd.xlane.f32.xlu0 %v655
  %v657 = vpop.xlane.xlu0 %656
  %v658 = vrcp.pop %v657
  %v659 = vmul.f32 %v654, %v658
  %v660 = vpack.c.bf16 %v659, %v659
  %v662 = vsel %vm541, %v660, 0
  %664 = vmatprep.subr.bf16.mxu0 0
  %665 = vmatpush1.bf16.msra.mxu0 %v559
  %666 = vmatprep.subr.bf16.mxu0 0
  %667 = vmatpush1.bf16.msra.mxu0 0
  %668 = vmatprep.subr.bf16.mxu0 0
  %669 = vmatpush1.bf16.msra.mxu0 0
  %670 = vmatprep.subr.bf16.mxu0 0
  %671 = vmatpush1.bf16.msra.mxu0 0
  %672 = vmatprep.subr.bf16.mxu0 0
  %673 = vmatpush1.bf16.msra.mxu0 0
  %674 = vmatprep.subr.bf16.mxu0 0
  %675 = vmatpush1.bf16.msra.mxu0 0
  %676 = vmatprep.subr.bf16.mxu0 0
  %677 = vmatpush1.bf16.msra.mxu0 0
  %678 = vmatprep.subr.bf16.mxu0 0
  %679 = vmatpush1.bf16.msra.mxu0 0
  %680 = vmatprep.subr.bf16.mxu0 0
  %681 = vmatpush1.bf16.msra.mxu0 0
  %682 = vmatprep.subr.bf16.mxu0 0
  %683 = vmatpush1.bf16.msra.mxu0 0
  %684 = vmatprep.subr.bf16.mxu0 0
  %685 = vmatpush1.bf16.msra.mxu0 0
  %686 = vmatprep.subr.bf16.mxu0 0
  %687 = vmatpush1.bf16.msra.mxu0 0
  %688 = vmatprep.subr.bf16.mxu0 0
  %689 = vmatpush1.bf16.msra.mxu0 0
  %690 = vmatprep.subr.bf16.mxu0 0
  %691 = vmatpush1.bf16.msra.mxu0 0
  %692 = vmatprep.subr.bf16.mxu0 0
  %693 = vmatpush1.bf16.msra.mxu0 0
  %694 = vmatprep.subr.bf16.mxu0 0
  %695 = vmatpush1.bf16.msra.mxu0 0
  %696 = vmatprep.mubr.bf16.mxu0 0
  %697 = vmatmul.mubr.bf16.gmra.mrb[0].mxu0 %v662
  %v698 = vpop.f32.mrb[0].mxu0
  %v699 = vadd.f32 0.0, %v698
  %v700 = vpop.f32.mrb[0].mxu0
  %v701 = vpop.f32.mrb[0].mxu0
  %v702 = vpop.f32.mrb[0].mxu0
  %703 = vdwg.mxu0
  %v704 = vpack.c.bf16 %v699, %v699
  %v707 = vunpack.c.l.b16 %v487
  %v708 = vunpack.c.l.b16 %v488
  %v709 = vpack.c.b16 %v708, %v707
  %v712 = vsel %vm493, %v704, 0
  %714 = vmatprep.subr.bf16.mxu0 0
  %715 = vmatpush1.bf16.msra.mxu0 %v709
  %716 = vmatprep.subr.bf16.mxu0 0
  %717 = vmatpush1.bf16.msra.mxu0 0
  %718 = vmatprep.subr.bf16.mxu0 0
  %719 = vmatpush1.bf16.msra.mxu0 0
  %720 = vmatprep.subr.bf16.mxu0 0
  %721 = vmatpush1.bf16.msra.mxu0 0
  %722 = vmatprep.subr.bf16.mxu0 0
  %723 = vmatpush1.bf16.msra.mxu0 0
  %724 = vmatprep.subr.bf16.mxu0 0
  %725 = vmatpush1.bf16.msra.mxu0 0
  %726 = vmatprep.subr.bf16.mxu0 0
  %727 = vmatpush1.bf16.msra.mxu0 0
  %728 = vmatprep.subr.bf16.mxu0 0
  %729 = vmatpush1.bf16.msra.mxu0 0
  %730 = vmatprep.subr.bf16.mxu0 0
  %731 = vmatpush1.bf16.msra.mxu0 0
  %732 = vmatprep.subr.bf16.mxu0 0
  %733 = vmatpush1.bf16.msra.mxu0 0
  %734 = vmatprep.subr.bf16.mxu0 0
  %735 = vmatpush1.bf16.msra.mxu0 0
  %736 = vmatprep.subr.bf16.mxu0 0
  %737 = vmatpush1.bf16.msra.mxu0 0
  %738 = vmatprep.subr.bf16.mxu0 0
  %739 = vmatpush1.bf16.msra.mxu0 0
  %740 = vmatprep.subr.bf16.mxu0 0
  %741 = vmatpush1.bf16.msra.mxu0 0
  %742 = vmatprep.subr.bf16.mxu0 0
  %743 = vmatpush1.bf16.msra.mxu0 0
  %744 = vmatprep.subr.bf16.mxu0 0
  %745 = vmatpush1.bf16.msra.mxu0 0
  %746 = vmatprep.mubr.bf16.mxu0 0
  %747 = vmatmul.mubr.bf16.gmra.mrb[0].mxu0 %v712
  %v748 = vpop.f32.mrb[0].mxu0
  %v749 = vadd.f32 0.0, %v748
  %v750 = vpop.f32.mrb[0].mxu0
  %v751 = vpop.f32.mrb[0].mxu0
  %v752 = vpop.f32.mrb[0].mxu0
  %753 = vdwg.mxu0
  %v756 = vunpack.c.l.b16 %v485
  %v757 = vunpack.c.l.b16 %v486
  %v758 = vpack.c.b16 %v757, %v756
  %v761 = vsel %vm493, %v601, 0
  %763 = vmatprep.subr.bf16.mxu0 0
  %764 = vmatpush1.bf16.msra.mxu0 %v758
  %765 = vmatprep.subr.bf16.mxu0 0
  %766 = vmatpush1.bf16.msra.mxu0 0
  %767 = vmatprep.subr.bf16.mxu0 0
  %768 = vmatpush1.bf16.msra.mxu0 0
  %769 = vmatprep.subr.bf16.mxu0 0
  %770 = vmatpush1.bf16.msra.mxu0 0
  %771 = vmatprep.subr.bf16.mxu0 0
  %772 = vmatpush1.bf16.msra.mxu0 0
  %773 = vmatprep.subr.bf16.mxu0 0
  %774 = vmatpush1.bf16.msra.mxu0 0
  %775 = vmatprep.subr.bf16.mxu0 0
  %776 = vmatpush1.bf16.msra.mxu0 0
  %777 = vmatprep.subr.bf16.mxu0 0
  %778 = vmatpush1.bf16.msra.mxu0 0
  %779 = vmatprep.subr.bf16.mxu0 0
  %780 = vmatpush1.bf16.msra.mxu0 0
  %781 = vmatprep.subr.bf16.mxu0 0
  %782 = vmatpush1.bf16.msra.mxu0 0
  %783 = vmatprep.subr.bf16.mxu0 0
  %784 = vmatpush1.bf16.msra.mxu0 0
  %785 = vmatprep.subr.bf16.mxu0 0
  %786 = vmatpush1.bf16.msra.mxu0 0
  %787 = vmatprep.subr.bf16.mxu0 0
  %788 = vmatpush1.bf16.msra.mxu0 0
  %789 = vmatprep.subr.bf16.mxu0 0
  %790 = vmatpush1.bf16.msra.mxu0 0
  %791 = vmatprep.subr.bf16.mxu0 0
  %792 = vmatpush1.bf16.msra.mxu0 0
  %793 = vmatprep.subr.bf16.mxu0 0
  %794 = vmatpush1.bf16.msra.mxu0 0
  %795 = vmatprep.mubr.bf16.mxu0 0
  %796 = vmatmul.mubr.bf16.gmra.mrb[0].mxu0 %v761
  %v797 = vpop.f32.mrb[0].mxu0
  %v798 = vadd.f32 %v749, %v797
  %v799 = vpop.f32.mrb[0].mxu0
  %v800 = vpop.f32.mrb[0].mxu0
  %v801 = vpop.f32.mrb[0].mxu0
  %802 = vdwg.mxu0
  %803 = vrot.lane.b32.xlu0 %v482, 96
  %v804 = vpop.permute.xlu0 %803
  %806 = vrot.lane.b32.xlu0 %v483, 112
  %v807 = vpop.permute.xlu0 %806
  %v809 = vsel %vm493, %v804, 0
  %v812 = vsel %vm493, %v807, 0
  %814 = vmatprep.subr.bf16.mxu0 0
  %815 = vmatpush1.bf16.xpose.msra.mxu0 %v812
  %816 = vmatprep.subr.bf16.mxu0 0
  %817 = vmatpush1.bf16.xpose.msra.mxu0 0
  %818 = vmatprep.subr.bf16.mxu0 0
  %819 = vmatpush1.bf16.xpose.msra.mxu0 0
  %820 = vmatprep.subr.bf16.mxu0 0
  %821 = vmatpush1.bf16.xpose.msra.mxu0 0
  %822 = vmatprep.subr.bf16.mxu0 0
  %823 = vmatpush1.bf16.xpose.msra.mxu0 0
  %824 = vmatprep.subr.bf16.mxu0 0
  %825 = vmatpush1.bf16.xpose.msra.mxu0 0
  %826 = vmatprep.subr.bf16.mxu0 0
  %827 = vmatpush1.bf16.xpose.msra.mxu0 0
  %828 = vmatprep.subr.bf16.mxu0 0
  %829 = vmatpush1.bf16.xpose.msra.mxu0 0
  %830 = vmatprep.subr.bf16.mxu0 0
  %831 = vmatpush1.bf16.xpose.msra.mxu0 0
  %832 = vmatprep.subr.bf16.mxu0 0
  %833 = vmatpush1.bf16.xpose.msra.mxu0 0
  %834 = vmatprep.subr.bf16.mxu0 0
  %835 = vmatpush1.bf16.xpose.msra.mxu0 0
  %836 = vmatprep.subr.bf16.mxu0 0
  %837 = vmatpush1.bf16.xpose.msra.mxu0 0
  %838 = vmatprep.subr.bf16.mxu0 0
  %839 = vmatpush1.bf16.xpose.msra.mxu0 0
  %840 = vmatprep.subr.bf16.mxu0 0
  %841 = vmatpush1.bf16.xpose.msra.mxu0 0
  %842 = vmatprep.subr.bf16.mxu0 0
  %843 = vmatpush1.bf16.xpose.msra.mxu0 0
  %844 = vmatprep.subr.bf16.mxu0 0
  %845 = vmatpush1.bf16.xpose.msra.mxu0 0
  %846 = vmatprep.mubr.bf16.mxu0 0
  %847 = vmatmul.mubr.bf16.gmra.mrb[0].mxu0 %v809
  %v848 = vpop.f32.mrb[0].mxu0
  %v849 = vadd.f32 0.0, %v848
  %v850 = vpop.f32.mrb[0].mxu0
  %v851 = vpop.f32.mrb[0].mxu0
  %v852 = vpop.f32.mrb[0].mxu0
  %853 = vdwg.mxu0
  %v854 = vsel %vm90, %v849, -1e+30
  %v855 = vsel %vm541, %v854, -inf
  %856 = vmax.xlane.f32.xlu0 %v855
  %v857 = vpop.xlane.xlu0 %856
  %v858 = vsub.f32 %v854, %v857
  %v859 = vmul.f32 %v858, 1.442695
  %v860 = vpow.pop %v859
  %v861 = vsel %vm541, %v860, 0.0
  %862 = vadd.xlane.f32.xlu0 %v861
  %v863 = vpop.xlane.xlu0 %862
  %v864 = vrcp.pop %v863
  %v865 = vmul.f32 %v860, %v864
  %v866 = vpack.c.bf16 %v865, %v865
  %868 = vrot.lane.b32.xlu0 %v484, 112
  %v869 = vpop.permute.xlu0 %868
  %v871 = vsel %vm541, %v866, 0
  %v874 = vsel %vm557, %v869, 0
  %876 = vmatprep.subr.bf16.mxu0 0
  %877 = vmatpush1.bf16.msra.mxu0 %v874
  %878 = vmatprep.subr.bf16.mxu0 0
  %879 = vmatpush1.bf16.msra.mxu0 0
  %880 = vmatprep.subr.bf16.mxu0 0
  %881 = vmatpush1.bf16.msra.mxu0 0
  %882 = vmatprep.subr.bf16.mxu0 0
  %883 = vmatpush1.bf16.msra.mxu0 0
  %884 = vmatprep.subr.bf16.mxu0 0
  %885 = vmatpush1.bf16.msra.mxu0 0
  %886 = vmatprep.subr.bf16.mxu0 0
  %887 = vmatpush1.bf16.msra.mxu0 0
  %888 = vmatprep.subr.bf16.mxu0 0
  %889 = vmatpush1.bf16.msra.mxu0 0
  %890 = vmatprep.subr.bf16.mxu0 0
  %891 = vmatpush1.bf16.msra.mxu0 0
  %892 = vmatprep.subr.bf16.mxu0 0
  %893 = vmatpush1.bf16.msra.mxu0 0
  %894 = vmatprep.subr.bf16.mxu0 0
  %895 = vmatpush1.bf16.msra.mxu0 0
  %896 = vmatprep.subr.bf16.mxu0 0
  %897 = vmatpush1.bf16.msra.mxu0 0
  %898 = vmatprep.subr.bf16.mxu0 0
  %899 = vmatpush1.bf16.msra.mxu0 0
  %900 = vmatprep.subr.bf16.mxu0 0
  %901 = vmatpush1.bf16.msra.mxu0 0
  %902 = vmatprep.subr.bf16.mxu0 0
  %903 = vmatpush1.bf16.msra.mxu0 0
  %904 = vmatprep.subr.bf16.mxu0 0
  %905 = vmatpush1.bf16.msra.mxu0 0
  %906 = vmatprep.subr.bf16.mxu0 0
  %907 = vmatpush1.bf16.msra.mxu0 0
  %908 = vmatprep.mubr.bf16.mxu0 0
  %909 = vmatmul.mubr.bf16.gmra.mrb[0].mxu0 %v871
  %v910 = vpop.f32.mrb[0].mxu0
  %v911 = vadd.f32 0.0, %v910
  %v912 = vpop.f32.mrb[0].mxu0
  %v913 = vpop.f32.mrb[0].mxu0
  %v914 = vpop.f32.mrb[0].mxu0
  %915 = vdwg.mxu0
  %v916 = vpack.c.bf16 %v911, %v911
  %v919 = vunpack.c.l.b16 %v489
  %v920 = vunpack.c.l.b16 %v490
  %v921 = vpack.c.b16 %v920, %v919
  %v924 = vsel %vm493, %v916, 0
  %926 = vmatprep.subr.bf16.mxu0 0
  %927 = vmatpush1.bf16.msra.mxu0 %v921
  %928 = vmatprep.subr.bf16.mxu0 0
  %929 = vmatpush1.bf16.msra.mxu0 0
  %930 = vmatprep.subr.bf16.mxu0 0
  %931 = vmatpush1.bf16.msra.mxu0 0
  %932 = vmatprep.subr.bf16.mxu0 0
  %933 = vmatpush1.bf16.msra.mxu0 0
  %934 = vmatprep.subr.bf16.mxu0 0
  %935 = vmatpush1.bf16.msra.mxu0 0
  %936 = vmatprep.subr.bf16.mxu0 0
  %937 = vmatpush1.bf16.msra.mxu0 0
  %938 = vmatprep.subr.bf16.mxu0 0
  %939 = vmatpush1.bf16.msra.mxu0 0
  %940 = vmatprep.subr.bf16.mxu0 0
  %941 = vmatpush1.bf16.msra.mxu0 0
  %942 = vmatprep.subr.bf16.mxu0 0
  %943 = vmatpush1.bf16.msra.mxu0 0
  %944 = vmatprep.subr.bf16.mxu0 0
  %945 = vmatpush1.bf16.msra.mxu0 0
  %946 = vmatprep.subr.bf16.mxu0 0
  %947 = vmatpush1.bf16.msra.mxu0 0
  %948 = vmatprep.subr.bf16.mxu0 0
  %949 = vmatpush1.bf16.msra.mxu0 0
  %950 = vmatprep.subr.bf16.mxu0 0
  %951 = vmatpush1.bf16.msra.mxu0 0
  %952 = vmatprep.subr.bf16.mxu0 0
  %953 = vmatpush1.bf16.msra.mxu0 0
  %954 = vmatprep.subr.bf16.mxu0 0
  %955 = vmatpush1.bf16.msra.mxu0 0
  %956 = vmatprep.subr.bf16.mxu0 0
  %957 = vmatpush1.bf16.msra.mxu0 0
  %958 = vmatprep.mubr.bf16.mxu0 0
  %959 = vmatmul.mubr.bf16.gmra.mrb[0].mxu0 %v924
  %v960 = vpop.f32.mrb[0].mxu0
  %v961 = vadd.f32 0.0, %v960
  %v962 = vpop.f32.mrb[0].mxu0
  %v963 = vpop.f32.mrb[0].mxu0
  %v964 = vpop.f32.mrb[0].mxu0
  %965 = vdwg.mxu0
  %v966 = vadd.f32 %v798, %v961
  %967 = vrot.lane.b32.xlu0 %v482, 80
  %v968 = vpop.permute.xlu0 %967
  %v970 = vsel %vm493, %v968, 0
  %972 = vmatprep.subr.bf16.mxu0 0
  %973 = vmatpush1.bf16.xpose.msra.mxu0 %v812
  %974 = vmatprep.subr.bf16.mxu0 0
  %975 = vmatpush1.bf16.xpose.msra.mxu0 0
  %976 = vmatprep.subr.bf16.mxu0 0
  %977 = vmatpush1.bf16.xpose.msra.mxu0 0
  %978 = vmatprep.subr.bf16.mxu0 0
  %979 = vmatpush1.bf16.xpose.msra.mxu0 0
  %980 = vmatprep.subr.bf16.mxu0 0
  %981 = vmatpush1.bf16.xpose.msra.mxu0 0
  %982 = vmatprep.subr.bf16.mxu0 0
  %983 = vmatpush1.bf16.xpose.msra.mxu0 0
  %984 = vmatprep.subr.bf16.mxu0 0
  %985 = vmatpush1.bf16.xpose.msra.mxu0 0
  %986 = vmatprep.subr.bf16.mxu0 0
  %987 = vmatpush1.bf16.xpose.msra.mxu0 0
  %988 = vmatprep.subr.bf16.mxu0 0
  %989 = vmatpush1.bf16.xpose.msra.mxu0 0
  %990 = vmatprep.subr.bf16.mxu0 0
  %991 = vmatpush1.bf16.xpose.msra.mxu0 0
  %992 = vmatprep.subr.bf16.mxu0 0
  %993 = vmatpush1.bf16.xpose.msra.mxu0 0
  %994 = vmatprep.subr.bf16.mxu0 0
  %995 = vmatpush1.bf16.xpose.msra.mxu0 0
  %996 = vmatprep.subr.bf16.mxu0 0
  %997 = vmatpush1.bf16.xpose.msra.mxu0 0
  %998 = vmatprep.subr.bf16.mxu0 0
  %999 = vmatpush1.bf16.xpose.msra.mxu0 0
  %1000 = vmatprep.subr.bf16.mxu0 0
  %1001 = vmatpush1.bf16.xpose.msra.mxu0 0
  %1002 = vmatprep.subr.bf16.mxu0 0
  %1003 = vmatpush1.bf16.xpose.msra.mxu0 0
  %1004 = vmatprep.mubr.bf16.mxu0 0
  %1005 = vmatmul.mubr.bf16.gmra.mrb[0].mxu0 %v970
  %v1006 = vpop.f32.mrb[0].mxu0
  %v1007 = vadd.f32 0.0, %v1006
  %v1008 = vpop.f32.mrb[0].mxu0
  %v1009 = vpop.f32.mrb[0].mxu0
  %v1010 = vpop.f32.mrb[0].mxu0
  %1011 = vdwg.mxu0
  %v1012 = vsel %vm90, %v1007, -1e+30
  %v1013 = vsel %vm541, %v1012, -inf
  %1014 = vmax.xlane.f32.xlu0 %v1013
  %v1015 = vpop.xlane.xlu0 %1014
  %v1016 = vsub.f32 %v1012, %v1015
  %v1017 = vmul.f32 %v1016, 1.442695
  %v1018 = vpow.pop %v1017
  %v1019 = vsel %vm541, %v1018, 0.0
  %1020 = vadd.xlane.f32.xlu0 %v1019
  %v1021 = vpop.xlane.xlu0 %1020
  %v1022 = vrcp.pop %v1021
  %v1023 = vmul.f32 %v1018, %v1022
  %v1024 = vpack.c.bf16 %v1023, %v1023
  %v1026 = vsel %vm541, %v1024, 0
  %1028 = vmatprep.subr.bf16.mxu0 0
  %1029 = vmatpush1.bf16.msra.mxu0 %v874
  %1030 = vmatprep.subr.bf16.mxu0 0
  %1031 = vmatpush1.bf16.msra.mxu0 0
  %1032 = vmatprep.subr.bf16.mxu0 0
  %1033 = vmatpush1.bf16.msra.mxu0 0
  %1034 = vmatprep.subr.bf16.mxu0 0
  %1035 = vmatpush1.bf16.msra.mxu0 0
  %1036 = vmatprep.subr.bf16.mxu0 0
  %1037 = vmatpush1.bf16.msra.mxu0 0
  %1038 = vmatprep.subr.bf16.mxu0 0
  %1039 = vmatpush1.bf16.msra.mxu0 0
  %1040 = vmatprep.subr.bf16.mxu0 0
  %1041 = vmatpush1.bf16.msra.mxu0 0
  %1042 = vmatprep.subr.bf16.mxu0 0
  %1043 = vmatpush1.bf16.msra.mxu0 0
  %1044 = vmatprep.subr.bf16.mxu0 0
  %1045 = vmatpush1.bf16.msra.mxu0 0
  %1046 = vmatprep.subr.bf16.mxu0 0
  %1047 = vmatpush1.bf16.msra.mxu0 0
  %1048 = vmatprep.subr.bf16.mxu0 0
  %1049 = vmatpush1.bf16.msra.mxu0 0
  %1050 = vmatprep.subr.bf16.mxu0 0
  %1051 = vmatpush1.bf16.msra.mxu0 0
  %1052 = vmatprep.subr.bf16.mxu0 0
  %1053 = vmatpush1.bf16.msra.mxu0 0
  %1054 = vmatprep.subr.bf16.mxu0 0
  %1055 = vmatpush1.bf16.msra.mxu0 0
  %1056 = vmatprep.subr.bf16.mxu0 0
  %1057 = vmatpush1.bf16.msra.mxu0 0
  %1058 = vmatprep.subr.bf16.mxu0 0
  %1059 = vmatpush1.bf16.msra.mxu0 0
  %1060 = vmatprep.mubr.bf16.mxu0 0
  %1061 = vmatmul.mubr.bf16.gmra.mrb[0].mxu0 %v1026
  %v1062 = vpop.f32.mrb[0].mxu0
  %v1063 = vadd.f32 0.0, %v1062
  %v1064 = vpop.f32.mrb[0].mxu0
  %v1065 = vpop.f32.mrb[0].mxu0
  %v1066 = vpop.f32.mrb[0].mxu0
  %1067 = vdwg.mxu0
  %v1068 = vpack.c.bf16 %v1063, %v1063
  %v1071 = vunpack.c.l.b16 %v491
  %v1072 = vunpack.c.l.b16 %v492
  %v1073 = vpack.c.b16 %v1072, %v1071
  %v1076 = vsel %vm493, %v1068, 0
  %1078 = vmatprep.subr.bf16.mxu0 0
  %1079 = vmatpush1.bf16.msra.mxu0 %v1073
  %1080 = vmatprep.subr.bf16.mxu0 0
  %1081 = vmatpush1.bf16.msra.mxu0 0
  %1082 = vmatprep.subr.bf16.mxu0 0
  %1083 = vmatpush1.bf16.msra.mxu0 0
  %1084 = vmatprep.subr.bf16.mxu0 0
  %1085 = vmatpush1.bf16.msra.mxu0 0
  %1086 = vmatprep.subr.bf16.mxu0 0
  %1087 = vmatpush1.bf16.msra.mxu0 0
  %1088 = vmatprep.subr.bf16.mxu0 0
  %1089 = vmatpush1.bf16.msra.mxu0 0
  %1090 = vmatprep.subr.bf16.mxu0 0
  %1091 = vmatpush1.bf16.msra.mxu0 0
  %1092 = vmatprep.subr.bf16.mxu0 0
  %1093 = vmatpush1.bf16.msra.mxu0 0
  %1094 = vmatprep.subr.bf16.mxu0 0
  %1095 = vmatpush1.bf16.msra.mxu0 0
  %1096 = vmatprep.subr.bf16.mxu0 0
  %1097 = vmatpush1.bf16.msra.mxu0 0
  %1098 = vmatprep.subr.bf16.mxu0 0
  %1099 = vmatpush1.bf16.msra.mxu0 0
  %1100 = vmatprep.subr.bf16.mxu0 0
  %1101 = vmatpush1.bf16.msra.mxu0 0
  %1102 = vmatprep.subr.bf16.mxu0 0
  %1103 = vmatpush1.bf16.msra.mxu0 0
  %1104 = vmatprep.subr.bf16.mxu0 0
  %1105 = vmatpush1.bf16.msra.mxu0 0
  %1106 = vmatprep.subr.bf16.mxu0 0
  %1107 = vmatpush1.bf16.msra.mxu0 0
  %1108 = vmatprep.subr.bf16.mxu0 0
  %1109 = vmatpush1.bf16.msra.mxu0 0
  %1110 = vmatprep.mubr.bf16.mxu0 0
  %1111 = vmatmul.mubr.bf16.gmra.mrb[0].mxu0 %v1076
  %v1112 = vpop.f32.mrb[0].mxu0
  %v1113 = vadd.f32 0.0, %v1112
  %v1114 = vpop.f32.mrb[0].mxu0
  %v1115 = vpop.f32.mrb[0].mxu0
  %v1116 = vpop.f32.mrb[0].mxu0
  %1117 = vdwg.mxu0
  %v1118 = vadd.f32 %v966, %v1113
  %v1119 = vadd.f32 %v69, %v1118
  %v1120 = vld [vmem:[%s8] sm:$0x1]
  %v1121 = vmul.f32 %v1119, %v1119
  %v1122 = vsel %vm93, %v1121, 0.0
  %1123 = vadd.xlane.f32.xlu0 %v1122
  %v1124 = vpop.xlane.xlu0 %1123
  %v1125 = vmul.f32 %v1124, %v97
  %v1126 = vadd.f32 %v1125, 1e-06
  %v1127 = vrsqrt.pop %v1126
  %v1128 = vmul.f32 %v1119, %v1127
  %v1130 = vlaneseq
  %v1131 = vshrl.u32 %v1130, 7
  %v1132 = vsub.s32 0, %v1131
  %v1133 = vrot.slane %v1120, %v1132
  %v1135 = vmul.f32 %v1128, %v1133
  %v1136 = vpack.c.bf16 %v1135, %v1135
  %v1137 = vld [vmem:[%s16] sm:$0xf]
  %v1138 = vld [vmem:[%s16 + $0x4] sm:$0xf]
  %v1139 = vld [vmem:[%s16 + $0x8] sm:$0xf]
  %v1140 = vld [vmem:[%s16 + $0xc] sm:$0xf]
  %v1141 = vld [vmem:[%s16 + $0x10] sm:$0xf]
  %v1142 = vld [vmem:[%s16 + $0x14] sm:$0xf]
  %v1143 = vld [vmem:[%s16 + $0x18] sm:$0xf]
  %v1144 = vld [vmem:[%s16 + $0x1c] sm:$0xf]
  %v1153 = vunpack.c.l.b16 %v1137
  %v1154 = vunpack.c.l.b16 %v1138
  %v1155 = vunpack.c.l.b16 %v1139
  %v1156 = vunpack.c.l.b16 %v1140
  %v1157 = vunpack.c.l.b16 %v1141
  %v1158 = vunpack.c.l.b16 %v1142
  %v1159 = vunpack.c.l.b16 %v1143
  %v1160 = vunpack.c.l.b16 %v1144
  %v1161 = vpack.c.b16 %v1154, %v1153
  %v1162 = vpack.c.b16 %v1156, %v1155
  %v1163 = vpack.c.b16 %v1158, %v1157
  %v1164 = vpack.c.b16 %v1160, %v1159
  %v1170 = vsel %vm93, %v1136, 0
  %1172 = vmatprep.subr.bf16.mxu0 0
  %1173 = vmatpush1.bf16.msra.mxu0 %v1161
  %1174 = vmatprep.subr.bf16.mxu0 0
  %1175 = vmatpush1.bf16.msra.mxu0 %v1162
  %1176 = vmatprep.subr.bf16.mxu0 0
  %1177 = vmatpush1.bf16.msra.mxu0 %v1163
  %1178 = vmatprep.subr.bf16.mxu0 0
  %1179 = vmatpush1.bf16.msra.mxu0 %v1164
  %1180 = vmatprep.subr.bf16.mxu0 0
  %1181 = vmatpush1.bf16.msra.mxu0 0
  %1182 = vmatprep.subr.bf16.mxu0 0
  %1183 = vmatpush1.bf16.msra.mxu0 0
  %1184 = vmatprep.subr.bf16.mxu0 0
  %1185 = vmatpush1.bf16.msra.mxu0 0
  %1186 = vmatprep.subr.bf16.mxu0 0
  %1187 = vmatpush1.bf16.msra.mxu0 0
  %1188 = vmatprep.subr.bf16.mxu0 0
  %1189 = vmatpush1.bf16.msra.mxu0 0
  %1190 = vmatprep.subr.bf16.mxu0 0
  %1191 = vmatpush1.bf16.msra.mxu0 0
  %1192 = vmatprep.subr.bf16.mxu0 0
  %1193 = vmatpush1.bf16.msra.mxu0 0
  %1194 = vmatprep.subr.bf16.mxu0 0
  %1195 = vmatpush1.bf16.msra.mxu0 0
  %1196 = vmatprep.subr.bf16.mxu0 0
  %1197 = vmatpush1.bf16.msra.mxu0 0
  %1198 = vmatprep.subr.bf16.mxu0 0
  %1199 = vmatpush1.bf16.msra.mxu0 0
  %1200 = vmatprep.subr.bf16.mxu0 0
  %1201 = vmatpush1.bf16.msra.mxu0 0
  %1202 = vmatprep.subr.bf16.mxu0 0
  %1203 = vmatpush1.bf16.msra.mxu0 0
  %1204 = vmatprep.mubr.bf16.mxu0 0
  %1205 = vmatmul.mubr.bf16.gmra.mrb[0].mxu0 %v1170
  %v1206 = vpop.f32.mrb[0].mxu0
  %v1207 = vadd.f32 0.0, %v1206
  %v1208 = vpop.f32.mrb[0].mxu0
  %v1209 = vpop.f32.mrb[0].mxu0
  %v1210 = vpop.f32.mrb[0].mxu0
  %1211 = vdwg.mxu0
  %v1212 = vld [vmem:[%s17] sm:$0xf]
  %v1213 = vld [vmem:[%s17 + $0x4] sm:$0xf]
  %v1214 = vld [vmem:[%s17 + $0x8] sm:$0xf]
  %v1215 = vld [vmem:[%s17 + $0xc] sm:$0xf]
  %v1216 = vld [vmem:[%s17 + $0x10] sm:$0xf]
  %v1217 = vld [vmem:[%s17 + $0x14] sm:$0xf]
  %v1218 = vld [vmem:[%s17 + $0x18] sm:$0xf]
  %v1219 = vld [vmem:[%s17 + $0x1c] sm:$0xf]
  %v1228 = vunpack.c.l.b16 %v1212
  %v1229 = vunpack.c.l.b16 %v1213
  %v1230 = vunpack.c.l.b16 %v1214
  %v1231 = vunpack.c.l.b16 %v1215
  %v1232 = vunpack.c.l.b16 %v1216
  %v1233 = vunpack.c.l.b16 %v1217
  %v1234 = vunpack.c.l.b16 %v1218
  %v1235 = vunpack.c.l.b16 %v1219
  %v1236 = vpack.c.b16 %v1229, %v1228
  %v1237 = vpack.c.b16 %v1231, %v1230
  %v1238 = vpack.c.b16 %v1233, %v1232
  %v1239 = vpack.c.b16 %v1235, %v1234
  %1244 = vmatprep.subr.bf16.mxu0 0
  %1245 = vmatpush1.bf16.msra.mxu0 %v1236
  %1246 = vmatprep.subr.bf16.mxu0 0
  %1247 = vmatpush1.bf16.msra.mxu0 %v1237
  %1248 = vmatprep.subr.bf16.mxu0 0
  %1249 = vmatpush1.bf16.msra.mxu0 %v1238
  %1250 = vmatprep.subr.bf16.mxu0 0
  %1251 = vmatpush1.bf16.msra.mxu0 %v1239
  %1252 = vmatprep.subr.bf16.mxu0 0
  %1253 = vmatpush1.bf16.msra.mxu0 0
  %1254 = vmatprep.subr.bf16.mxu0 0
  %1255 = vmatpush1.bf16.msra.mxu0 0
  %1256 = vmatprep.subr.bf16.mxu0 0
  %1257 = vmatpush1.bf16.msra.mxu0 0
  %1258 = vmatprep.subr.bf16.mxu0 0
  %1259 = vmatpush1.bf16.msra.mxu0 0
  %1260 = vmatprep.subr.bf16.mxu0 0
  %1261 = vmatpush1.bf16.msra.mxu0 0
  %1262 = vmatprep.subr.bf16.mxu0 0
  %1263 = vmatpush1.bf16.msra.mxu0 0
  %1264 = vmatprep.subr.bf16.mxu0 0
  %1265 = vmatpush1.bf16.msra.mxu0 0
  %1266 = vmatprep.subr.bf16.mxu0 0
  %1267 = vmatpush1.bf16.msra.mxu0 0
  %1268 = vmatprep.subr.bf16.mxu0 0
  %1269 = vmatpush1.bf16.msra.mxu0 0
  %1270 = vmatprep.subr.bf16.mxu0 0
  %1271 = vmatpush1.bf16.msra.mxu0 0
  %1272 = vmatprep.subr.bf16.mxu0 0
  %1273 = vmatpush1.bf16.msra.mxu0 0
  %1274 = vmatprep.subr.bf16.mxu0 0
  %1275 = vmatpush1.bf16.msra.mxu0 0
  %1276 = vmatprep.mubr.bf16.mxu0 0
  %1277 = vmatmul.mubr.bf16.gmra.mrb[0].mxu0 %v1170
  %v1278 = vpop.f32.mrb[0].mxu0
  %v1279 = vadd.f32 0.0, %v1278
  %v1280 = vpop.f32.mrb[0].mxu0
  %v1281 = vpop.f32.mrb[0].mxu0
  %v1282 = vpop.f32.mrb[0].mxu0
  %1283 = vdwg.mxu0
  %v1284 = vsub.f32 0.0, %v1207
  %v1285 = vmul.f32 %v1284, 1.442695
  %v1286 = vpow.pop %v1285
  %v1287 = vadd.f32 %v1286, 1.0
  %v1288 = vrcp.pop %v1287
  %v1289 = vmul.f32 %v1207, %v1288
  %v1290 = vmul.f32 %v1289, %v1279
  %v1291 = vpack.c.bf16 %v1290, %v1290
  %v1292 = vld [vmem:[%s18] sm:$0xf]
  %v1293 = vld [vmem:[%s18 + $0x4] sm:$0xf]
  %v1294 = vld [vmem:[%s18 + $0x8] sm:$0xf]
  %v1295 = vld [vmem:[%s18 + $0xc] sm:$0xf]
  %v1296 = vld [vmem:[%s18 + $0x10] sm:$0xf]
  %v1297 = vld [vmem:[%s18 + $0x14] sm:$0xf]
  %v1298 = vld [vmem:[%s18 + $0x18] sm:$0xf]
  %v1299 = vld [vmem:[%s18 + $0x1c] sm:$0xf]
  %v1300 = vld [vmem:[%s18 + $0x20] sm:$0xf]
  %v1301 = vld [vmem:[%s18 + $0x24] sm:$0xf]
  %v1302 = vld [vmem:[%s18 + $0x28] sm:$0xf]
  %v1303 = vld [vmem:[%s18 + $0x2c] sm:$0xf]
  %v1304 = vld [vmem:[%s18 + $0x30] sm:$0xf]
  %v1305 = vld [vmem:[%s18 + $0x34] sm:$0xf]
  %v1306 = vld [vmem:[%s18 + $0x38] sm:$0xf]
  %v1307 = vld [vmem:[%s18 + $0x3c] sm:$0xf]
  %v1324 = vunpack.c.l.b16 %v1292
  %v1325 = vunpack.c.l.b16 %v1293
  %v1326 = vunpack.c.l.b16 %v1294
  %v1327 = vunpack.c.l.b16 %v1295
  %v1328 = vunpack.c.l.b16 %v1296
  %v1329 = vunpack.c.l.b16 %v1297
  %v1330 = vunpack.c.l.b16 %v1298
  %v1331 = vunpack.c.l.b16 %v1299
  %v1332 = vunpack.c.l.b16 %v1300
  %v1333 = vunpack.c.l.b16 %v1301
  %v1334 = vunpack.c.l.b16 %v1302
  %v1335 = vunpack.c.l.b16 %v1303
  %v1336 = vunpack.c.l.b16 %v1304
  %v1337 = vunpack.c.l.b16 %v1305
  %v1338 = vunpack.c.l.b16 %v1306
  %v1339 = vunpack.c.l.b16 %v1307
  %v1340 = vpack.c.b16 %v1325, %v1324
  %v1341 = vpack.c.b16 %v1327, %v1326
  %v1342 = vpack.c.b16 %v1329, %v1328
  %v1343 = vpack.c.b16 %v1331, %v1330
  %v1344 = vpack.c.b16 %v1333, %v1332
  %v1345 = vpack.c.b16 %v1335, %v1334
  %v1346 = vpack.c.b16 %v1337, %v1336
  %v1347 = vpack.c.b16 %v1339, %v1338
  %1356 = vmatprep.subr.bf16.mxu0 0
  %1357 = vmatpush1.bf16.msra.mxu0 %v1340
  %1358 = vmatprep.subr.bf16.mxu0 0
  %1359 = vmatpush1.bf16.msra.mxu0 %v1341
  %1360 = vmatprep.subr.bf16.mxu0 0
  %1361 = vmatpush1.bf16.msra.mxu0 %v1342
  %1362 = vmatprep.subr.bf16.mxu0 0
  %1363 = vmatpush1.bf16.msra.mxu0 %v1343
  %1364 = vmatprep.subr.bf16.mxu0 0
  %1365 = vmatpush1.bf16.msra.mxu0 %v1344
  %1366 = vmatprep.subr.bf16.mxu0 0
  %1367 = vmatpush1.bf16.msra.mxu0 %v1345
  %1368 = vmatprep.subr.bf16.mxu0 0
  %1369 = vmatpush1.bf16.msra.mxu0 %v1346
  %1370 = vmatprep.subr.bf16.mxu0 0
  %1371 = vmatpush1.bf16.msra.mxu0 %v1347
  %1372 = vmatprep.subr.bf16.mxu0 0
  %1373 = vmatpush1.bf16.msra.mxu0 0
  %1374 = vmatprep.subr.bf16.mxu0 0
  %1375 = vmatpush1.bf16.msra.mxu0 0
  %1376 = vmatprep.subr.bf16.mxu0 0
  %1377 = vmatpush1.bf16.msra.mxu0 0
  %1378 = vmatprep.subr.bf16.mxu0 0
  %1379 = vmatpush1.bf16.msra.mxu0 0
  %1380 = vmatprep.subr.bf16.mxu0 0
  %1381 = vmatpush1.bf16.msra.mxu0 0
  %1382 = vmatprep.subr.bf16.mxu0 0
  %1383 = vmatpush1.bf16.msra.mxu0 0
  %1384 = vmatprep.subr.bf16.mxu0 0
  %1385 = vmatpush1.bf16.msra.mxu0 0
  %1386 = vmatprep.subr.bf16.mxu0 0
  %1387 = vmatpush1.bf16.msra.mxu0 0
  %1388 = vmatprep.mubr.bf16.mxu0 0
  %1389 = vmatmul.mubr.bf16.gmra.mrb[0].mxu0 %v1291
  %v1390 = vpop.f32.mrb[0].mxu0
  %v1391 = vadd.f32 0.0, %v1390
  %v1392 = vpop.f32.mrb[0].mxu0
  %v1393 = vpop.f32.mrb[0].mxu0
  %v1394 = vpop.f32.mrb[0].mxu0
  %1395 = vdwg.mxu0
  %v1396 = vadd.f32 %v1119, %v1391
  %s1397 = scalar_lea.vmem %s7, 1
  %v1398 = vld [vmem:[%s1397] sm:$0x1]
  %v1399 = vmul.f32 %v1396, %v1396
  %v1400 = vsel %vm93, %v1399, 0.0
  %1401 = vadd.xlane.f32.xlu0 %v1400
  %v1402 = vpop.xlane.xlu0 %1401
  %v1403 = vmul.f32 %v1402, %v97
  %v1404 = vadd.f32 %v1403, 1e-06
  %v1405 = vrsqrt.pop %v1404
  %v1406 = vmul.f32 %v1396, %v1405
  %v1408 = vlaneseq
  %v1409 = vshrl.u32 %v1408, 7
  %v1410 = vsub.s32 0, %v1409
  %v1411 = vrot.slane %v1398, %v1410
  %v1413 = vmul.f32 %v1406, %v1411
  %v1414 = vpack.c.bf16 %v1413, %v1413
  %s1415 = scalar_lea.vmem %s9, 32
  %v1416 = vld [vmem:[%s1415] sm:$0xf]
  %v1417 = vld [vmem:[%s1415 + $0x4] sm:$0xf]
  %v1418 = vld [vmem:[%s1415 + $0x8] sm:$0xf]
  %v1419 = vld [vmem:[%s1415 + $0xc] sm:$0xf]
  %v1420 = vld [vmem:[%s1415 + $0x10] sm:$0xf]
  %v1421 = vld [vmem:[%s1415 + $0x14] sm:$0xf]
  %v1422 = vld [vmem:[%s1415 + $0x18] sm:$0xf]
  %v1423 = vld [vmem:[%s1415 + $0x1c] sm:$0xf]
  %s1424 = scalar_lea.vmem %s10, 1
  %v1425 = vld [vmem:[%s1424] sm:$0x1]
  %v1427 = vlaneseq
  %v1428 = vshrl.u32 %v1427, 7
  %v1429 = vsub.s32 0, %v1428
  %v1430 = vrot.slane %v1425, %v1429
  %v1440 = vunpack.c.l.b16 %v1416
  %v1441 = vunpack.c.l.b16 %v1417
  %v1442 = vunpack.c.l.b16 %v1418
  %v1443 = vunpack.c.l.b16 %v1419
  %v1444 = vunpack.c.l.b16 %v1420
  %v1445 = vunpack.c.l.b16 %v1421
  %v1446 = vunpack.c.l.b16 %v1422
  %v1447 = vunpack.c.l.b16 %v1423
  %v1448 = vpack.c.b16 %v1441, %v1440
  %v1449 = vpack.c.b16 %v1443, %v1442
  %v1450 = vpack.c.b16 %v1445, %v1444
  %v1451 = vpack.c.b16 %v1447, %v1446
  %v1457 = vsel %vm93, %v1414, 0
  %1459 = vmatprep.subr.bf16.mxu0 0
  %1460 = vmatpush1.bf16.msra.mxu0 %v1448
  %1461 = vmatprep.subr.bf16.mxu0 0
  %1462 = vmatpush1.bf16.msra.mxu0 %v1449
  %1463 = vmatprep.subr.bf16.mxu0 0
  %1464 = vmatpush1.bf16.msra.mxu0 %v1450
  %1465 = vmatprep.subr.bf16.mxu0 0
  %1466 = vmatpush1.bf16.msra.mxu0 %v1451
  %1467 = vmatprep.subr.bf16.mxu0 0
  %1468 = vmatpush1.bf16.msra.mxu0 0
  %1469 = vmatprep.subr.bf16.mxu0 0
  %1470 = vmatpush1.bf16.msra.mxu0 0
  %1471 = vmatprep.subr.bf16.mxu0 0
  %1472 = vmatpush1.bf16.msra.mxu0 0
  %1473 = vmatprep.subr.bf16.mxu0 0
  %1474 = vmatpush1.bf16.msra.mxu0 0
  %1475 = vmatprep.subr.bf16.mxu0 0
  %1476 = vmatpush1.bf16.msra.mxu0 0
  %1477 = vmatprep.subr.bf16.mxu0 0
  %1478 = vmatpush1.bf16.msra.mxu0 0
  %1479 = vmatprep.subr.bf16.mxu0 0
  %1480 = vmatpush1.bf16.msra.mxu0 0
  %1481 = vmatprep.subr.bf16.mxu0 0
  %1482 = vmatpush1.bf16.msra.mxu0 0
  %1483 = vmatprep.subr.bf16.mxu0 0
  %1484 = vmatpush1.bf16.msra.mxu0 0
  %1485 = vmatprep.subr.bf16.mxu0 0
  %1486 = vmatpush1.bf16.msra.mxu0 0
  %1487 = vmatprep.subr.bf16.mxu0 0
  %1488 = vmatpush1.bf16.msra.mxu0 0
  %1489 = vmatprep.subr.bf16.mxu0 0
  %1490 = vmatpush1.bf16.msra.mxu0 0
  %1491 = vmatprep.mubr.bf16.mxu0 0
  %1492 = vmatmul.mubr.bf16.gmra.mrb[0].mxu0 %v1457
  %v1493 = vpop.f32.mrb[0].mxu0
  %v1494 = vadd.f32 %v1430, %v1493
  %v1495 = vpop.f32.mrb[0].mxu0
  %v1496 = vpop.f32.mrb[0].mxu0
  %v1497 = vpop.f32.mrb[0].mxu0
  %1498 = vdwg.mxu0
  %s1499 = scalar_lea.vmem %s11, 32
  %v1500 = vld [vmem:[%s1499] sm:$0xf]
  %v1501 = vld [vmem:[%s1499 + $0x4] sm:$0xf]
  %v1502 = vld [vmem:[%s1499 + $0x8] sm:$0xf]
  %v1503 = vld [vmem:[%s1499 + $0xc] sm:$0xf]
  %v1504 = vld [vmem:[%s1499 + $0x10] sm:$0xf]
  %v1505 = vld [vmem:[%s1499 + $0x14] sm:$0xf]
  %v1506 = vld [vmem:[%s1499 + $0x18] sm:$0xf]
  %v1507 = vld [vmem:[%s1499 + $0x1c] sm:$0xf]
  %s1508 = scalar_lea.vmem %s12, 1
  %v1509 = vld [vmem:[%s1508] sm:$0x1]
  %v1511 = vlaneseq
  %v1512 = vshrl.u32 %v1511, 7
  %v1513 = vsub.s32 0, %v1512
  %v1514 = vrot.slane %v1509, %v1513
  %v1524 = vunpack.c.l.b16 %v1500
  %v1525 = vunpack.c.l.b16 %v1501
  %v1526 = vunpack.c.l.b16 %v1502
  %v1527 = vunpack.c.l.b16 %v1503
  %v1528 = vunpack.c.l.b16 %v1504
  %v1529 = vunpack.c.l.b16 %v1505
  %v1530 = vunpack.c.l.b16 %v1506
  %v1531 = vunpack.c.l.b16 %v1507
  %v1532 = vpack.c.b16 %v1525, %v1524
  %v1533 = vpack.c.b16 %v1527, %v1526
  %v1534 = vpack.c.b16 %v1529, %v1528
  %v1535 = vpack.c.b16 %v1531, %v1530
  %1540 = vmatprep.subr.bf16.mxu0 0
  %1541 = vmatpush1.bf16.msra.mxu0 %v1532
  %1542 = vmatprep.subr.bf16.mxu0 0
  %1543 = vmatpush1.bf16.msra.mxu0 %v1533
  %1544 = vmatprep.subr.bf16.mxu0 0
  %1545 = vmatpush1.bf16.msra.mxu0 %v1534
  %1546 = vmatprep.subr.bf16.mxu0 0
  %1547 = vmatpush1.bf16.msra.mxu0 %v1535
  %1548 = vmatprep.subr.bf16.mxu0 0
  %1549 = vmatpush1.bf16.msra.mxu0 0
  %1550 = vmatprep.subr.bf16.mxu0 0
  %1551 = vmatpush1.bf16.msra.mxu0 0
  %1552 = vmatprep.subr.bf16.mxu0 0
  %1553 = vmatpush1.bf16.msra.mxu0 0
  %1554 = vmatprep.subr.bf16.mxu0 0
  %1555 = vmatpush1.bf16.msra.mxu0 0
  %1556 = vmatprep.subr.bf16.mxu0 0
  %1557 = vmatpush1.bf16.msra.mxu0 0
  %1558 = vmatprep.subr.bf16.mxu0 0
  %1559 = vmatpush1.bf16.msra.mxu0 0
  %1560 = vmatprep.subr.bf16.mxu0 0
  %1561 = vmatpush1.bf16.msra.mxu0 0
  %1562 = vmatprep.subr.bf16.mxu0 0
  %1563 = vmatpush1.bf16.msra.mxu0 0
  %1564 = vmatprep.subr.bf16.mxu0 0
  %1565 = vmatpush1.bf16.msra.mxu0 0
  %1566 = vmatprep.subr.bf16.mxu0 0
  %1567 = vmatpush1.bf16.msra.mxu0 0
  %1568 = vmatprep.subr.bf16.mxu0 0
  %1569 = vmatpush1.bf16.msra.mxu0 0
  %1570 = vmatprep.subr.bf16.mxu0 0
  %1571 = vmatpush1.bf16.msra.mxu0 0
  %1572 = vmatprep.mubr.bf16.mxu0 0
  %1573 = vmatmul.mubr.bf16.gmra.mrb[0].mxu0 %v1457
  %v1574 = vpop.f32.mrb[0].mxu0
  %v1575 = vadd.f32 %v1514, %v1574
  %v1576 = vpop.f32.mrb[0].mxu0
  %v1577 = vpop.f32.mrb[0].mxu0
  %v1578 = vpop.f32.mrb[0].mxu0
  %1579 = vdwg.mxu0
  %s1580 = scalar_lea.vmem %s13, 32
  %v1581 = vld [vmem:[%s1580] sm:$0xf]
  %v1582 = vld [vmem:[%s1580 + $0x4] sm:$0xf]
  %v1583 = vld [vmem:[%s1580 + $0x8] sm:$0xf]
  %v1584 = vld [vmem:[%s1580 + $0xc] sm:$0xf]
  %v1585 = vld [vmem:[%s1580 + $0x10] sm:$0xf]
  %v1586 = vld [vmem:[%s1580 + $0x14] sm:$0xf]
  %v1587 = vld [vmem:[%s1580 + $0x18] sm:$0xf]
  %v1588 = vld [vmem:[%s1580 + $0x1c] sm:$0xf]
  %s1589 = scalar_lea.vmem %s14, 1
  %v1590 = vld [vmem:[%s1589] sm:$0x1]
  %v1592 = vlaneseq
  %v1593 = vshrl.u32 %v1592, 7
  %v1594 = vsub.s32 0, %v1593
  %v1595 = vrot.slane %v1590, %v1594
  %v1605 = vunpack.c.l.b16 %v1581
  %v1606 = vunpack.c.l.b16 %v1582
  %v1607 = vunpack.c.l.b16 %v1583
  %v1608 = vunpack.c.l.b16 %v1584
  %v1609 = vunpack.c.l.b16 %v1585
  %v1610 = vunpack.c.l.b16 %v1586
  %v1611 = vunpack.c.l.b16 %v1587
  %v1612 = vunpack.c.l.b16 %v1588
  %v1613 = vpack.c.b16 %v1606, %v1605
  %v1614 = vpack.c.b16 %v1608, %v1607
  %v1615 = vpack.c.b16 %v1610, %v1609
  %v1616 = vpack.c.b16 %v1612, %v1611
  %1621 = vmatprep.subr.bf16.mxu0 0
  %1622 = vmatpush1.bf16.msra.mxu0 %v1613
  %1623 = vmatprep.subr.bf16.mxu0 0
  %1624 = vmatpush1.bf16.msra.mxu0 %v1614
  %1625 = vmatprep.subr.bf16.mxu0 0
  %1626 = vmatpush1.bf16.msra.mxu0 %v1615
  %1627 = vmatprep.subr.bf16.mxu0 0
  %1628 = vmatpush1.bf16.msra.mxu0 %v1616
  %1629 = vmatprep.subr.bf16.mxu0 0
  %1630 = vmatpush1.bf16.msra.mxu0 0
  %1631 = vmatprep.subr.bf16.mxu0 0
  %1632 = vmatpush1.bf16.msra.mxu0 0
  %1633 = vmatprep.subr.bf16.mxu0 0
  %1634 = vmatpush1.bf16.msra.mxu0 0
  %1635 = vmatprep.subr.bf16.mxu0 0
  %1636 = vmatpush1.bf16.msra.mxu0 0
  %1637 = vmatprep.subr.bf16.mxu0 0
  %1638 = vmatpush1.bf16.msra.mxu0 0
  %1639 = vmatprep.subr.bf16.mxu0 0
  %1640 = vmatpush1.bf16.msra.mxu0 0
  %1641 = vmatprep.subr.bf16.mxu0 0
  %1642 = vmatpush1.bf16.msra.mxu0 0
  %1643 = vmatprep.subr.bf16.mxu0 0
  %1644 = vmatpush1.bf16.msra.mxu0 0
  %1645 = vmatprep.subr.bf16.mxu0 0
  %1646 = vmatpush1.bf16.msra.mxu0 0
  %1647 = vmatprep.subr.bf16.mxu0 0
  %1648 = vmatpush1.bf16.msra.mxu0 0
  %1649 = vmatprep.subr.bf16.mxu0 0
  %1650 = vmatpush1.bf16.msra.mxu0 0
  %1651 = vmatprep.subr.bf16.mxu0 0
  %1652 = vmatpush1.bf16.msra.mxu0 0
  %1653 = vmatprep.mubr.bf16.mxu0 0
  %1654 = vmatmul.mubr.bf16.gmra.mrb[0].mxu0 %v1457
  %v1655 = vpop.f32.mrb[0].mxu0
  %v1656 = vadd.f32 %v1595, %v1655
  %v1657 = vpop.f32.mrb[0].mxu0
  %v1658 = vpop.f32.mrb[0].mxu0
  %v1659 = vpop.f32.mrb[0].mxu0
  %1660 = vdwg.mxu0
  %v1661 = vmul.f32 %v1494, %v70
  %v1662 = vpack.c.bf16 %v1494, %v1494
  %v1664 = vsel %vm93, %v1662, 0
  %1666 = vmatprep.subr.bf16.mxu0 0
  %1667 = vmatpush1.bf16.msra.mxu0 %v368
  %1668 = vmatprep.subr.bf16.mxu0 0
  %1669 = vmatpush1.bf16.msra.mxu0 %v369
  %1670 = vmatprep.subr.bf16.mxu0 0
  %1671 = vmatpush1.bf16.msra.mxu0 %v370
  %1672 = vmatprep.subr.bf16.mxu0 0
  %1673 = vmatpush1.bf16.msra.mxu0 %v371
  %1674 = vmatprep.subr.bf16.mxu0 0
  %1675 = vmatpush1.bf16.msra.mxu0 0
  %1676 = vmatprep.subr.bf16.mxu0 0
  %1677 = vmatpush1.bf16.msra.mxu0 0
  %1678 = vmatprep.subr.bf16.mxu0 0
  %1679 = vmatpush1.bf16.msra.mxu0 0
  %1680 = vmatprep.subr.bf16.mxu0 0
  %1681 = vmatpush1.bf16.msra.mxu0 0
  %1682 = vmatprep.subr.bf16.mxu0 0
  %1683 = vmatpush1.bf16.msra.mxu0 0
  %1684 = vmatprep.subr.bf16.mxu0 0
  %1685 = vmatpush1.bf16.msra.mxu0 0
  %1686 = vmatprep.subr.bf16.mxu0 0
  %1687 = vmatpush1.bf16.msra.mxu0 0
  %1688 = vmatprep.subr.bf16.mxu0 0
  %1689 = vmatpush1.bf16.msra.mxu0 0
  %1690 = vmatprep.subr.bf16.mxu0 0
  %1691 = vmatpush1.bf16.msra.mxu0 0
  %1692 = vmatprep.subr.bf16.mxu0 0
  %1693 = vmatpush1.bf16.msra.mxu0 0
  %1694 = vmatprep.subr.bf16.mxu0 0
  %1695 = vmatpush1.bf16.msra.mxu0 0
  %1696 = vmatprep.subr.bf16.mxu0 0
  %1697 = vmatpush1.bf16.msra.mxu0 0
  %1698 = vmatprep.mubr.bf16.mxu0 0
  %1699 = vmatmul.mubr.bf16.gmra.mrb[0].mxu0 %v1664
  %v1700 = vpop.f32.mrb[0].mxu0
  %v1701 = vadd.f32 0.0, %v1700
  %v1702 = vpop.f32.mrb[0].mxu0
  %v1703 = vpop.f32.mrb[0].mxu0
  %v1704 = vpop.f32.mrb[0].mxu0
  %1705 = vdwg.mxu0
  %v1706 = vmul.f32 %v1701, %v71
  %v1707 = vadd.f32 %v1661, %v1706
  %v1708 = vmul.f32 %v1575, %v72
  %v1709 = vpack.c.bf16 %v1575, %v1575
  %v1711 = vsel %vm435, %v1709, 0
  %1713 = vmatprep.subr.bf16.mxu0 0
  %1714 = vmatpush1.bf16.msra.mxu0 %v431
  %1715 = vmatprep.subr.bf16.mxu0 0
  %1716 = vmatpush1.bf16.msra.mxu0 %v432
  %1717 = vmatprep.subr.bf16.mxu0 0
  %1718 = vmatpush1.bf16.msra.mxu0 0
  %1719 = vmatprep.subr.bf16.mxu0 0
  %1720 = vmatpush1.bf16.msra.mxu0 0
  %1721 = vmatprep.subr.bf16.mxu0 0
  %1722 = vmatpush1.bf16.msra.mxu0 0
  %1723 = vmatprep.subr.bf16.mxu0 0
  %1724 = vmatpush1.bf16.msra.mxu0 0
  %1725 = vmatprep.subr.bf16.mxu0 0
  %1726 = vmatpush1.bf16.msra.mxu0 0
  %1727 = vmatprep.subr.bf16.mxu0 0
  %1728 = vmatpush1.bf16.msra.mxu0 0
  %1729 = vmatprep.subr.bf16.mxu0 0
  %1730 = vmatpush1.bf16.msra.mxu0 0
  %1731 = vmatprep.subr.bf16.mxu0 0
  %1732 = vmatpush1.bf16.msra.mxu0 0
  %1733 = vmatprep.subr.bf16.mxu0 0
  %1734 = vmatpush1.bf16.msra.mxu0 0
  %1735 = vmatprep.subr.bf16.mxu0 0
  %1736 = vmatpush1.bf16.msra.mxu0 0
  %1737 = vmatprep.subr.bf16.mxu0 0
  %1738 = vmatpush1.bf16.msra.mxu0 0
  %1739 = vmatprep.subr.bf16.mxu0 0
  %1740 = vmatpush1.bf16.msra.mxu0 0
  %1741 = vmatprep.subr.bf16.mxu0 0
  %1742 = vmatpush1.bf16.msra.mxu0 0
  %1743 = vmatprep.subr.bf16.mxu0 0
  %1744 = vmatpush1.bf16.msra.mxu0 0
  %1745 = vmatprep.mubr.bf16.mxu0 0
  %1746 = vmatmul.mubr.bf16.gmra.mrb[0].mxu0 %v1711
  %v1747 = vpop.f32.mrb[0].mxu0
  %v1748 = vadd.f32 0.0, %v1747
  %v1749 = vpop.f32.mrb[0].mxu0
  %v1750 = vpop.f32.mrb[0].mxu0
  %v1751 = vpop.f32.mrb[0].mxu0
  %1752 = vdwg.mxu0
  %v1753 = vmul.f32 %v1748, %v73
  %v1754 = vadd.f32 %v1708, %v1753
  %v1755 = vmul.f32 %v1707, 0.25
  %v1756 = vpack.c.bf16 %v1755, %v1755
  %v1757 = vpack.c.bf16 %v1754, %v1754
  %v1758 = vpack.c.bf16 %v1656, %v1656
  %s1759 = scalar_lea.vmem %s15, 32
  %v1760 = vld [vmem:[%s1759] sm:$0xf]
  %v1761 = vld [vmem:[%s1759 + $0x4] sm:$0xf]
  %v1762 = vld [vmem:[%s1759 + $0x8] sm:$0xf]
  %v1763 = vld [vmem:[%s1759 + $0xc] sm:$0xf]
  %v1764 = vld [vmem:[%s1759 + $0x10] sm:$0xf]
  %v1765 = vld [vmem:[%s1759 + $0x14] sm:$0xf]
  %v1766 = vld [vmem:[%s1759 + $0x18] sm:$0xf]
  %v1767 = vld [vmem:[%s1759 + $0x1c] sm:$0xf]
  %v1769 = vsel %vm493, %v1756, 0
  %v1772 = vsel %vm493, %v1757, 0
  %1774 = vmatprep.subr.bf16.mxu0 0
  %1775 = vmatpush1.bf16.xpose.msra.mxu0 %v1772
  %1776 = vmatprep.subr.bf16.mxu0 0
  %1777 = vmatpush1.bf16.xpose.msra.mxu0 0
  %1778 = vmatprep.subr.bf16.mxu0 0
  %1779 = vmatpush1.bf16.xpose.msra.mxu0 0
  %1780 = vmatprep.subr.bf16.mxu0 0
  %1781 = vmatpush1.bf16.xpose.msra.mxu0 0
  %1782 = vmatprep.subr.bf16.mxu0 0
  %1783 = vmatpush1.bf16.xpose.msra.mxu0 0
  %1784 = vmatprep.subr.bf16.mxu0 0
  %1785 = vmatpush1.bf16.xpose.msra.mxu0 0
  %1786 = vmatprep.subr.bf16.mxu0 0
  %1787 = vmatpush1.bf16.xpose.msra.mxu0 0
  %1788 = vmatprep.subr.bf16.mxu0 0
  %1789 = vmatpush1.bf16.xpose.msra.mxu0 0
  %1790 = vmatprep.subr.bf16.mxu0 0
  %1791 = vmatpush1.bf16.xpose.msra.mxu0 0
  %1792 = vmatprep.subr.bf16.mxu0 0
  %1793 = vmatpush1.bf16.xpose.msra.mxu0 0
  %1794 = vmatprep.subr.bf16.mxu0 0
  %1795 = vmatpush1.bf16.xpose.msra.mxu0 0
  %1796 = vmatprep.subr.bf16.mxu0 0
  %1797 = vmatpush1.bf16.xpose.msra.mxu0 0
  %1798 = vmatprep.subr.bf16.mxu0 0
  %1799 = vmatpush1.bf16.xpose.msra.mxu0 0
  %1800 = vmatprep.subr.bf16.mxu0 0
  %1801 = vmatpush1.bf16.xpose.msra.mxu0 0
  %1802 = vmatprep.subr.bf16.mxu0 0
  %1803 = vmatpush1.bf16.xpose.msra.mxu0 0
  %1804 = vmatprep.subr.bf16.mxu0 0
  %1805 = vmatpush1.bf16.xpose.msra.mxu0 0
  %1806 = vmatprep.mubr.bf16.mxu0 0
  %1807 = vmatmul.mubr.bf16.gmra.mrb[0].mxu0 %v1769
  %v1808 = vpop.f32.mrb[0].mxu0
  %v1809 = vadd.f32 0.0, %v1808
  %v1810 = vpop.f32.mrb[0].mxu0
  %v1811 = vpop.f32.mrb[0].mxu0
  %v1812 = vpop.f32.mrb[0].mxu0
  %1813 = vdwg.mxu0
  %v1814 = vsel %vm90, %v1809, -1e+30
  %v1815 = vsel %vm541, %v1814, -inf
  %1816 = vmax.xlane.f32.xlu0 %v1815
  %v1817 = vpop.xlane.xlu0 %1816
  %v1818 = vsub.f32 %v1814, %v1817
  %v1819 = vmul.f32 %v1818, 1.442695
  %v1820 = vpow.pop %v1819
  %v1821 = vsel %vm541, %v1820, 0.0
  %1822 = vadd.xlane.f32.xlu0 %v1821
  %v1823 = vpop.xlane.xlu0 %1822
  %v1824 = vrcp.pop %v1823
  %v1825 = vmul.f32 %v1820, %v1824
  %v1826 = vpack.c.bf16 %v1825, %v1825
  %v1828 = vsel %vm541, %v1826, 0
  %v1831 = vsel %vm557, %v1758, 0
  %1833 = vmatprep.subr.bf16.mxu0 0
  %1834 = vmatpush1.bf16.msra.mxu0 %v1831
  %1835 = vmatprep.subr.bf16.mxu0 0
  %1836 = vmatpush1.bf16.msra.mxu0 0
  %1837 = vmatprep.subr.bf16.mxu0 0
  %1838 = vmatpush1.bf16.msra.mxu0 0
  %1839 = vmatprep.subr.bf16.mxu0 0
  %1840 = vmatpush1.bf16.msra.mxu0 0
  %1841 = vmatprep.subr.bf16.mxu0 0
  %1842 = vmatpush1.bf16.msra.mxu0 0
  %1843 = vmatprep.subr.bf16.mxu0 0
  %1844 = vmatpush1.bf16.msra.mxu0 0
  %1845 = vmatprep.subr.bf16.mxu0 0
  %1846 = vmatpush1.bf16.msra.mxu0 0
  %1847 = vmatprep.subr.bf16.mxu0 0
  %1848 = vmatpush1.bf16.msra.mxu0 0
  %1849 = vmatprep.subr.bf16.mxu0 0
  %1850 = vmatpush1.bf16.msra.mxu0 0
  %1851 = vmatprep.subr.bf16.mxu0 0
  %1852 = vmatpush1.bf16.msra.mxu0 0
  %1853 = vmatprep.subr.bf16.mxu0 0
  %1854 = vmatpush1.bf16.msra.mxu0 0
  %1855 = vmatprep.subr.bf16.mxu0 0
  %1856 = vmatpush1.bf16.msra.mxu0 0
  %1857 = vmatprep.subr.bf16.mxu0 0
  %1858 = vmatpush1.bf16.msra.mxu0 0
  %1859 = vmatprep.subr.bf16.mxu0 0
  %1860 = vmatpush1.bf16.msra.mxu0 0
  %1861 = vmatprep.subr.bf16.mxu0 0
  %1862 = vmatpush1.bf16.msra.mxu0 0
  %1863 = vmatprep.subr.bf16.mxu0 0
  %1864 = vmatpush1.bf16.msra.mxu0 0
  %1865 = vmatprep.mubr.bf16.mxu0 0
  %1866 = vmatmul.mubr.bf16.gmra.mrb[0].mxu0 %v1828
  %v1867 = vpop.f32.mrb[0].mxu0
  %v1868 = vadd.f32 0.0, %v1867
  %v1869 = vpop.f32.mrb[0].mxu0
  %v1870 = vpop.f32.mrb[0].mxu0
  %v1871 = vpop.f32.mrb[0].mxu0
  %1872 = vdwg.mxu0
  %v1873 = vpack.c.bf16 %v1868, %v1868
  %1875 = vrot.lane.b32.xlu0 %v1756, 112
  %v1876 = vpop.permute.xlu0 %1875
  %v1878 = vsel %vm493, %v1876, 0
  %1880 = vmatprep.subr.bf16.mxu0 0
  %1881 = vmatpush1.bf16.xpose.msra.mxu0 %v1772
  %1882 = vmatprep.subr.bf16.mxu0 0
  %1883 = vmatpush1.bf16.xpose.msra.mxu0 0
  %1884 = vmatprep.subr.bf16.mxu0 0
  %1885 = vmatpush1.bf16.xpose.msra.mxu0 0
  %1886 = vmatprep.subr.bf16.mxu0 0
  %1887 = vmatpush1.bf16.xpose.msra.mxu0 0
  %1888 = vmatprep.subr.bf16.mxu0 0
  %1889 = vmatpush1.bf16.xpose.msra.mxu0 0
  %1890 = vmatprep.subr.bf16.mxu0 0
  %1891 = vmatpush1.bf16.xpose.msra.mxu0 0
  %1892 = vmatprep.subr.bf16.mxu0 0
  %1893 = vmatpush1.bf16.xpose.msra.mxu0 0
  %1894 = vmatprep.subr.bf16.mxu0 0
  %1895 = vmatpush1.bf16.xpose.msra.mxu0 0
  %1896 = vmatprep.subr.bf16.mxu0 0
  %1897 = vmatpush1.bf16.xpose.msra.mxu0 0
  %1898 = vmatprep.subr.bf16.mxu0 0
  %1899 = vmatpush1.bf16.xpose.msra.mxu0 0
  %1900 = vmatprep.subr.bf16.mxu0 0
  %1901 = vmatpush1.bf16.xpose.msra.mxu0 0
  %1902 = vmatprep.subr.bf16.mxu0 0
  %1903 = vmatpush1.bf16.xpose.msra.mxu0 0
  %1904 = vmatprep.subr.bf16.mxu0 0
  %1905 = vmatpush1.bf16.xpose.msra.mxu0 0
  %1906 = vmatprep.subr.bf16.mxu0 0
  %1907 = vmatpush1.bf16.xpose.msra.mxu0 0
  %1908 = vmatprep.subr.bf16.mxu0 0
  %1909 = vmatpush1.bf16.xpose.msra.mxu0 0
  %1910 = vmatprep.subr.bf16.mxu0 0
  %1911 = vmatpush1.bf16.xpose.msra.mxu0 0
  %1912 = vmatprep.mubr.bf16.mxu0 0
  %1913 = vmatmul.mubr.bf16.gmra.mrb[0].mxu0 %v1878
  %v1914 = vpop.f32.mrb[0].mxu0
  %v1915 = vadd.f32 0.0, %v1914
  %v1916 = vpop.f32.mrb[0].mxu0
  %v1917 = vpop.f32.mrb[0].mxu0
  %v1918 = vpop.f32.mrb[0].mxu0
  %1919 = vdwg.mxu0
  %v1920 = vsel %vm90, %v1915, -1e+30
  %v1921 = vsel %vm541, %v1920, -inf
  %1922 = vmax.xlane.f32.xlu0 %v1921
  %v1923 = vpop.xlane.xlu0 %1922
  %v1924 = vsub.f32 %v1920, %v1923
  %v1925 = vmul.f32 %v1924, 1.442695
  %v1926 = vpow.pop %v1925
  %v1927 = vsel %vm541, %v1926, 0.0
  %1928 = vadd.xlane.f32.xlu0 %v1927
  %v1929 = vpop.xlane.xlu0 %1928
  %v1930 = vrcp.pop %v1929
  %v1931 = vmul.f32 %v1926, %v1930
  %v1932 = vpack.c.bf16 %v1931, %v1931
  %v1934 = vsel %vm541, %v1932, 0
  %1936 = vmatprep.subr.bf16.mxu0 0
  %1937 = vmatpush1.bf16.msra.mxu0 %v1831
  %1938 = vmatprep.subr.bf16.mxu0 0
  %1939 = vmatpush1.bf16.msra.mxu0 0
  %1940 = vmatprep.subr.bf16.mxu0 0
  %1941 = vmatpush1.bf16.msra.mxu0 0
  %1942 = vmatprep.subr.bf16.mxu0 0
  %1943 = vmatpush1.bf16.msra.mxu0 0
  %1944 = vmatprep.subr.bf16.mxu0 0
  %1945 = vmatpush1.bf16.msra.mxu0 0
  %1946 = vmatprep.subr.bf16.mxu0 0
  %1947 = vmatpush1.bf16.msra.mxu0 0
  %1948 = vmatprep.subr.bf16.mxu0 0
  %1949 = vmatpush1.bf16.msra.mxu0 0
  %1950 = vmatprep.subr.bf16.mxu0 0
  %1951 = vmatpush1.bf16.msra.mxu0 0
  %1952 = vmatprep.subr.bf16.mxu0 0
  %1953 = vmatpush1.bf16.msra.mxu0 0
  %1954 = vmatprep.subr.bf16.mxu0 0
  %1955 = vmatpush1.bf16.msra.mxu0 0
  %1956 = vmatprep.subr.bf16.mxu0 0
  %1957 = vmatpush1.bf16.msra.mxu0 0
  %1958 = vmatprep.subr.bf16.mxu0 0
  %1959 = vmatpush1.bf16.msra.mxu0 0
  %1960 = vmatprep.subr.bf16.mxu0 0
  %1961 = vmatpush1.bf16.msra.mxu0 0
  %1962 = vmatprep.subr.bf16.mxu0 0
  %1963 = vmatpush1.bf16.msra.mxu0 0
  %1964 = vmatprep.subr.bf16.mxu0 0
  %1965 = vmatpush1.bf16.msra.mxu0 0
  %1966 = vmatprep.subr.bf16.mxu0 0
  %1967 = vmatpush1.bf16.msra.mxu0 0
  %1968 = vmatprep.mubr.bf16.mxu0 0
  %1969 = vmatmul.mubr.bf16.gmra.mrb[0].mxu0 %v1934
  %v1970 = vpop.f32.mrb[0].mxu0
  %v1971 = vadd.f32 0.0, %v1970
  %v1972 = vpop.f32.mrb[0].mxu0
  %v1973 = vpop.f32.mrb[0].mxu0
  %v1974 = vpop.f32.mrb[0].mxu0
  %1975 = vdwg.mxu0
  %v1976 = vpack.c.bf16 %v1971, %v1971
  %v1979 = vunpack.c.l.b16 %v1762
  %v1980 = vunpack.c.l.b16 %v1763
  %v1981 = vpack.c.b16 %v1980, %v1979
  %v1984 = vsel %vm493, %v1976, 0
  %1986 = vmatprep.subr.bf16.mxu0 0
  %1987 = vmatpush1.bf16.msra.mxu0 %v1981
  %1988 = vmatprep.subr.bf16.mxu0 0
  %1989 = vmatpush1.bf16.msra.mxu0 0
  %1990 = vmatprep.subr.bf16.mxu0 0
  %1991 = vmatpush1.bf16.msra.mxu0 0
  %1992 = vmatprep.subr.bf16.mxu0 0
  %1993 = vmatpush1.bf16.msra.mxu0 0
  %1994 = vmatprep.subr.bf16.mxu0 0
  %1995 = vmatpush1.bf16.msra.mxu0 0
  %1996 = vmatprep.subr.bf16.mxu0 0
  %1997 = vmatpush1.bf16.msra.mxu0 0
  %1998 = vmatprep.subr.bf16.mxu0 0
  %1999 = vmatpush1.bf16.msra.mxu0 0
  %2000 = vmatprep.subr.bf16.mxu0 0
  %2001 = vmatpush1.bf16.msra.mxu0 0
  %2002 = vmatprep.subr.bf16.mxu0 0
  %2003 = vmatpush1.bf16.msra.mxu0 0
  %2004 = vmatprep.subr.bf16.mxu0 0
  %2005 = vmatpush1.bf16.msra.mxu0 0
  %2006 = vmatprep.subr.bf16.mxu0 0
  %2007 = vmatpush1.bf16.msra.mxu0 0
  %2008 = vmatprep.subr.bf16.mxu0 0
  %2009 = vmatpush1.bf16.msra.mxu0 0
  %2010 = vmatprep.subr.bf16.mxu0 0
  %2011 = vmatpush1.bf16.msra.mxu0 0
  %2012 = vmatprep.subr.bf16.mxu0 0
  %2013 = vmatpush1.bf16.msra.mxu0 0
  %2014 = vmatprep.subr.bf16.mxu0 0
  %2015 = vmatpush1.bf16.msra.mxu0 0
  %2016 = vmatprep.subr.bf16.mxu0 0
  %2017 = vmatpush1.bf16.msra.mxu0 0
  %2018 = vmatprep.mubr.bf16.mxu0 0
  %2019 = vmatmul.mubr.bf16.gmra.mrb[0].mxu0 %v1984
  %v2020 = vpop.f32.mrb[0].mxu0
  %v2021 = vadd.f32 0.0, %v2020
  %v2022 = vpop.f32.mrb[0].mxu0
  %v2023 = vpop.f32.mrb[0].mxu0
  %v2024 = vpop.f32.mrb[0].mxu0
  %2025 = vdwg.mxu0
  %v2028 = vunpack.c.l.b16 %v1760
  %v2029 = vunpack.c.l.b16 %v1761
  %v2030 = vpack.c.b16 %v2029, %v2028
  %v2033 = vsel %vm493, %v1873, 0
  %2035 = vmatprep.subr.bf16.mxu0 0
  %2036 = vmatpush1.bf16.msra.mxu0 %v2030
  %2037 = vmatprep.subr.bf16.mxu0 0
  %2038 = vmatpush1.bf16.msra.mxu0 0
  %2039 = vmatprep.subr.bf16.mxu0 0
  %2040 = vmatpush1.bf16.msra.mxu0 0
  %2041 = vmatprep.subr.bf16.mxu0 0
  %2042 = vmatpush1.bf16.msra.mxu0 0
  %2043 = vmatprep.subr.bf16.mxu0 0
  %2044 = vmatpush1.bf16.msra.mxu0 0
  %2045 = vmatprep.subr.bf16.mxu0 0
  %2046 = vmatpush1.bf16.msra.mxu0 0
  %2047 = vmatprep.subr.bf16.mxu0 0
  %2048 = vmatpush1.bf16.msra.mxu0 0
  %2049 = vmatprep.subr.bf16.mxu0 0
  %2050 = vmatpush1.bf16.msra.mxu0 0
  %2051 = vmatprep.subr.bf16.mxu0 0
  %2052 = vmatpush1.bf16.msra.mxu0 0
  %2053 = vmatprep.subr.bf16.mxu0 0
  %2054 = vmatpush1.bf16.msra.mxu0 0
  %2055 = vmatprep.subr.bf16.mxu0 0
  %2056 = vmatpush1.bf16.msra.mxu0 0
  %2057 = vmatprep.subr.bf16.mxu0 0
  %2058 = vmatpush1.bf16.msra.mxu0 0
  %2059 = vmatprep.subr.bf16.mxu0 0
  %2060 = vmatpush1.bf16.msra.mxu0 0
  %2061 = vmatprep.subr.bf16.mxu0 0
  %2062 = vmatpush1.bf16.msra.mxu0 0
  %2063 = vmatprep.subr.bf16.mxu0 0
  %2064 = vmatpush1.bf16.msra.mxu0 0
  %2065 = vmatprep.subr.bf16.mxu0 0
  %2066 = vmatpush1.bf16.msra.mxu0 0
  %2067 = vmatprep.mubr.bf16.mxu0 0
  %2068 = vmatmul.mubr.bf16.gmra.mrb[0].mxu0 %v2033
  %v2069 = vpop.f32.mrb[0].mxu0
  %v2070 = vadd.f32 %v2021, %v2069
  %v2071 = vpop.f32.mrb[0].mxu0
  %v2072 = vpop.f32.mrb[0].mxu0
  %v2073 = vpop.f32.mrb[0].mxu0
  %2074 = vdwg.mxu0
  %2075 = vrot.lane.b32.xlu0 %v1756, 96
  %v2076 = vpop.permute.xlu0 %2075
  %2078 = vrot.lane.b32.xlu0 %v1757, 112
  %v2079 = vpop.permute.xlu0 %2078
  %v2081 = vsel %vm493, %v2076, 0
  %v2084 = vsel %vm493, %v2079, 0
  %2086 = vmatprep.subr.bf16.mxu0 0
  %2087 = vmatpush1.bf16.xpose.msra.mxu0 %v2084
  %2088 = vmatprep.subr.bf16.mxu0 0
  %2089 = vmatpush1.bf16.xpose.msra.mxu0 0
  %2090 = vmatprep.subr.bf16.mxu0 0
  %2091 = vmatpush1.bf16.xpose.msra.mxu0 0
  %2092 = vmatprep.subr.bf16.mxu0 0
  %2093 = vmatpush1.bf16.xpose.msra.mxu0 0
  %2094 = vmatprep.subr.bf16.mxu0 0
  %2095 = vmatpush1.bf16.xpose.msra.mxu0 0
  %2096 = vmatprep.subr.bf16.mxu0 0
  %2097 = vmatpush1.bf16.xpose.msra.mxu0 0
  %2098 = vmatprep.subr.bf16.mxu0 0
  %2099 = vmatpush1.bf16.xpose.msra.mxu0 0
  %2100 = vmatprep.subr.bf16.mxu0 0
  %2101 = vmatpush1.bf16.xpose.msra.mxu0 0
  %2102 = vmatprep.subr.bf16.mxu0 0
  %2103 = vmatpush1.bf16.xpose.msra.mxu0 0
  %2104 = vmatprep.subr.bf16.mxu0 0
  %2105 = vmatpush1.bf16.xpose.msra.mxu0 0
  %2106 = vmatprep.subr.bf16.mxu0 0
  %2107 = vmatpush1.bf16.xpose.msra.mxu0 0
  %2108 = vmatprep.subr.bf16.mxu0 0
  %2109 = vmatpush1.bf16.xpose.msra.mxu0 0
  %2110 = vmatprep.subr.bf16.mxu0 0
  %2111 = vmatpush1.bf16.xpose.msra.mxu0 0
  %2112 = vmatprep.subr.bf16.mxu0 0
  %2113 = vmatpush1.bf16.xpose.msra.mxu0 0
  %2114 = vmatprep.subr.bf16.mxu0 0
  %2115 = vmatpush1.bf16.xpose.msra.mxu0 0
  %2116 = vmatprep.subr.bf16.mxu0 0
  %2117 = vmatpush1.bf16.xpose.msra.mxu0 0
  %2118 = vmatprep.mubr.bf16.mxu0 0
  %2119 = vmatmul.mubr.bf16.gmra.mrb[0].mxu0 %v2081
  %v2120 = vpop.f32.mrb[0].mxu0
  %v2121 = vadd.f32 0.0, %v2120
  %v2122 = vpop.f32.mrb[0].mxu0
  %v2123 = vpop.f32.mrb[0].mxu0
  %v2124 = vpop.f32.mrb[0].mxu0
  %2125 = vdwg.mxu0
  %v2126 = vsel %vm90, %v2121, -1e+30
  %v2127 = vsel %vm541, %v2126, -inf
  %2128 = vmax.xlane.f32.xlu0 %v2127
  %v2129 = vpop.xlane.xlu0 %2128
  %v2130 = vsub.f32 %v2126, %v2129
  %v2131 = vmul.f32 %v2130, 1.442695
  %v2132 = vpow.pop %v2131
  %v2133 = vsel %vm541, %v2132, 0.0
  %2134 = vadd.xlane.f32.xlu0 %v2133
  %v2135 = vpop.xlane.xlu0 %2134
  %v2136 = vrcp.pop %v2135
  %v2137 = vmul.f32 %v2132, %v2136
  %v2138 = vpack.c.bf16 %v2137, %v2137
  %2140 = vrot.lane.b32.xlu0 %v1758, 112
  %v2141 = vpop.permute.xlu0 %2140
  %v2143 = vsel %vm541, %v2138, 0
  %v2146 = vsel %vm557, %v2141, 0
  %2148 = vmatprep.subr.bf16.mxu0 0
  %2149 = vmatpush1.bf16.msra.mxu0 %v2146
  %2150 = vmatprep.subr.bf16.mxu0 0
  %2151 = vmatpush1.bf16.msra.mxu0 0
  %2152 = vmatprep.subr.bf16.mxu0 0
  %2153 = vmatpush1.bf16.msra.mxu0 0
  %2154 = vmatprep.subr.bf16.mxu0 0
  %2155 = vmatpush1.bf16.msra.mxu0 0
  %2156 = vmatprep.subr.bf16.mxu0 0
  %2157 = vmatpush1.bf16.msra.mxu0 0
  %2158 = vmatprep.subr.bf16.mxu0 0
  %2159 = vmatpush1.bf16.msra.mxu0 0
  %2160 = vmatprep.subr.bf16.mxu0 0
  %2161 = vmatpush1.bf16.msra.mxu0 0
  %2162 = vmatprep.subr.bf16.mxu0 0
  %2163 = vmatpush1.bf16.msra.mxu0 0
  %2164 = vmatprep.subr.bf16.mxu0 0
  %2165 = vmatpush1.bf16.msra.mxu0 0
  %2166 = vmatprep.subr.bf16.mxu0 0
  %2167 = vmatpush1.bf16.msra.mxu0 0
  %2168 = vmatprep.subr.bf16.mxu0 0
  %2169 = vmatpush1.bf16.msra.mxu0 0
  %2170 = vmatprep.subr.bf16.mxu0 0
  %2171 = vmatpush1.bf16.msra.mxu0 0
  %2172 = vmatprep.subr.bf16.mxu0 0
  %2173 = vmatpush1.bf16.msra.mxu0 0
  %2174 = vmatprep.subr.bf16.mxu0 0
  %2175 = vmatpush1.bf16.msra.mxu0 0
  %2176 = vmatprep.subr.bf16.mxu0 0
  %2177 = vmatpush1.bf16.msra.mxu0 0
  %2178 = vmatprep.subr.bf16.mxu0 0
  %2179 = vmatpush1.bf16.msra.mxu0 0
  %2180 = vmatprep.mubr.bf16.mxu0 0
  %2181 = vmatmul.mubr.bf16.gmra.mrb[0].mxu0 %v2143
  %v2182 = vpop.f32.mrb[0].mxu0
  %v2183 = vadd.f32 0.0, %v2182
  %v2184 = vpop.f32.mrb[0].mxu0
  %v2185 = vpop.f32.mrb[0].mxu0
  %v2186 = vpop.f32.mrb[0].mxu0
  %2187 = vdwg.mxu0
  %v2188 = vpack.c.bf16 %v2183, %v2183
  %v2191 = vunpack.c.l.b16 %v1764
  %v2192 = vunpack.c.l.b16 %v1765
  %v2193 = vpack.c.b16 %v2192, %v2191
  %v2196 = vsel %vm493, %v2188, 0
  %2198 = vmatprep.subr.bf16.mxu0 0
  %2199 = vmatpush1.bf16.msra.mxu0 %v2193
  %2200 = vmatprep.subr.bf16.mxu0 0
  %2201 = vmatpush1.bf16.msra.mxu0 0
  %2202 = vmatprep.subr.bf16.mxu0 0
  %2203 = vmatpush1.bf16.msra.mxu0 0
  %2204 = vmatprep.subr.bf16.mxu0 0
  %2205 = vmatpush1.bf16.msra.mxu0 0
  %2206 = vmatprep.subr.bf16.mxu0 0
  %2207 = vmatpush1.bf16.msra.mxu0 0
  %2208 = vmatprep.subr.bf16.mxu0 0
  %2209 = vmatpush1.bf16.msra.mxu0 0
  %2210 = vmatprep.subr.bf16.mxu0 0
  %2211 = vmatpush1.bf16.msra.mxu0 0
  %2212 = vmatprep.subr.bf16.mxu0 0
  %2213 = vmatpush1.bf16.msra.mxu0 0
  %2214 = vmatprep.subr.bf16.mxu0 0
  %2215 = vmatpush1.bf16.msra.mxu0 0
  %2216 = vmatprep.subr.bf16.mxu0 0
  %2217 = vmatpush1.bf16.msra.mxu0 0
  %2218 = vmatprep.subr.bf16.mxu0 0
  %2219 = vmatpush1.bf16.msra.mxu0 0
  %2220 = vmatprep.subr.bf16.mxu0 0
  %2221 = vmatpush1.bf16.msra.mxu0 0
  %2222 = vmatprep.subr.bf16.mxu0 0
  %2223 = vmatpush1.bf16.msra.mxu0 0
  %2224 = vmatprep.subr.bf16.mxu0 0
  %2225 = vmatpush1.bf16.msra.mxu0 0
  %2226 = vmatprep.subr.bf16.mxu0 0
  %2227 = vmatpush1.bf16.msra.mxu0 0
  %2228 = vmatprep.subr.bf16.mxu0 0
  %2229 = vmatpush1.bf16.msra.mxu0 0
  %2230 = vmatprep.mubr.bf16.mxu0 0
  %2231 = vmatmul.mubr.bf16.gmra.mrb[0].mxu0 %v2196
  %v2232 = vpop.f32.mrb[0].mxu0
  %v2233 = vadd.f32 0.0, %v2232
  %v2234 = vpop.f32.mrb[0].mxu0
  %v2235 = vpop.f32.mrb[0].mxu0
  %v2236 = vpop.f32.mrb[0].mxu0
  %2237 = vdwg.mxu0
  %v2238 = vadd.f32 %v2070, %v2233
  %2239 = vrot.lane.b32.xlu0 %v1756, 80
  %v2240 = vpop.permute.xlu0 %2239
  %v2242 = vsel %vm493, %v2240, 0
  %2244 = vmatprep.subr.bf16.mxu0 0
  %2245 = vmatpush1.bf16.xpose.msra.mxu0 %v2084
  %2246 = vmatprep.subr.bf16.mxu0 0
  %2247 = vmatpush1.bf16.xpose.msra.mxu0 0
  %2248 = vmatprep.subr.bf16.mxu0 0
  %2249 = vmatpush1.bf16.xpose.msra.mxu0 0
  %2250 = vmatprep.subr.bf16.mxu0 0
  %2251 = vmatpush1.bf16.xpose.msra.mxu0 0
  %2252 = vmatprep.subr.bf16.mxu0 0
  %2253 = vmatpush1.bf16.xpose.msra.mxu0 0
  %2254 = vmatprep.subr.bf16.mxu0 0
  %2255 = vmatpush1.bf16.xpose.msra.mxu0 0
  %2256 = vmatprep.subr.bf16.mxu0 0
  %2257 = vmatpush1.bf16.xpose.msra.mxu0 0
  %2258 = vmatprep.subr.bf16.mxu0 0
  %2259 = vmatpush1.bf16.xpose.msra.mxu0 0
  %2260 = vmatprep.subr.bf16.mxu0 0
  %2261 = vmatpush1.bf16.xpose.msra.mxu0 0
  %2262 = vmatprep.subr.bf16.mxu0 0
  %2263 = vmatpush1.bf16.xpose.msra.mxu0 0
  %2264 = vmatprep.subr.bf16.mxu0 0
  %2265 = vmatpush1.bf16.xpose.msra.mxu0 0
  %2266 = vmatprep.subr.bf16.mxu0 0
  %2267 = vmatpush1.bf16.xpose.msra.mxu0 0
  %2268 = vmatprep.subr.bf16.mxu0 0
  %2269 = vmatpush1.bf16.xpose.msra.mxu0 0
  %2270 = vmatprep.subr.bf16.mxu0 0
  %2271 = vmatpush1.bf16.xpose.msra.mxu0 0
  %2272 = vmatprep.subr.bf16.mxu0 0
  %2273 = vmatpush1.bf16.xpose.msra.mxu0 0
  %2274 = vmatprep.subr.bf16.mxu0 0
  %2275 = vmatpush1.bf16.xpose.msra.mxu0 0
  %2276 = vmatprep.mubr.bf16.mxu0 0
  %2277 = vmatmul.mubr.bf16.gmra.mrb[0].mxu0 %v2242
  %v2278 = vpop.f32.mrb[0].mxu0
  %v2279 = vadd.f32 0.0, %v2278
  %v2280 = vpop.f32.mrb[0].mxu0
  %v2281 = vpop.f32.mrb[0].mxu0
  %v2282 = vpop.f32.mrb[0].mxu0
  %2283 = vdwg.mxu0
  %v2284 = vsel %vm90, %v2279, -1e+30
  %v2285 = vsel %vm541, %v2284, -inf
  %2286 = vmax.xlane.f32.xlu0 %v2285
  %v2287 = vpop.xlane.xlu0 %2286
  %v2288 = vsub.f32 %v2284, %v2287
  %v2289 = vmul.f32 %v2288, 1.442695
  %v2290 = vpow.pop %v2289
  %v2291 = vsel %vm541, %v2290, 0.0
  %2292 = vadd.xlane.f32.xlu0 %v2291
  %v2293 = vpop.xlane.xlu0 %2292
  %v2294 = vrcp.pop %v2293
  %v2295 = vmul.f32 %v2290, %v2294
  %v2296 = vpack.c.bf16 %v2295, %v2295
  %v2298 = vsel %vm541, %v2296, 0
  %2300 = vmatprep.subr.bf16.mxu0 0
  %2301 = vmatpush1.bf16.msra.mxu0 %v2146
  %2302 = vmatprep.subr.bf16.mxu0 0
  %2303 = vmatpush1.bf16.msra.mxu0 0
  %2304 = vmatprep.subr.bf16.mxu0 0
  %2305 = vmatpush1.bf16.msra.mxu0 0
  %2306 = vmatprep.subr.bf16.mxu0 0
  %2307 = vmatpush1.bf16.msra.mxu0 0
  %2308 = vmatprep.subr.bf16.mxu0 0
  %2309 = vmatpush1.bf16.msra.mxu0 0
  %2310 = vmatprep.subr.bf16.mxu0 0
  %2311 = vmatpush1.bf16.msra.mxu0 0
  %2312 = vmatprep.subr.bf16.mxu0 0
  %2313 = vmatpush1.bf16.msra.mxu0 0
  %2314 = vmatprep.subr.bf16.mxu0 0
  %2315 = vmatpush1.bf16.msra.mxu0 0
  %2316 = vmatprep.subr.bf16.mxu0 0
  %2317 = vmatpush1.bf16.msra.mxu0 0
  %2318 = vmatprep.subr.bf16.mxu0 0
  %2319 = vmatpush1.bf16.msra.mxu0 0
  %2320 = vmatprep.subr.bf16.mxu0 0
  %2321 = vmatpush1.bf16.msra.mxu0 0
  %2322 = vmatprep.subr.bf16.mxu0 0
  %2323 = vmatpush1.bf16.msra.mxu0 0
  %2324 = vmatprep.subr.bf16.mxu0 0
  %2325 = vmatpush1.bf16.msra.mxu0 0
  %2326 = vmatprep.subr.bf16.mxu0 0
  %2327 = vmatpush1.bf16.msra.mxu0 0
  %2328 = vmatprep.subr.bf16.mxu0 0
  %2329 = vmatpush1.bf16.msra.mxu0 0
  %2330 = vmatprep.subr.bf16.mxu0 0
  %2331 = vmatpush1.bf16.msra.mxu0 0
  %2332 = vmatprep.mubr.bf16.mxu0 0
  %2333 = vmatmul.mubr.bf16.gmra.mrb[0].mxu0 %v2298
  %v2334 = vpop.f32.mrb[0].mxu0
  %v2335 = vadd.f32 0.0, %v2334
  %v2336 = vpop.f32.mrb[0].mxu0
  %v2337 = vpop.f32.mrb[0].mxu0
  %v2338 = vpop.f32.mrb[0].mxu0
  %2339 = vdwg.mxu0
  %v2340 = vpack.c.bf16 %v2335, %v2335
  %v2343 = vunpack.c.l.b16 %v1766
  %v2344 = vunpack.c.l.b16 %v1767
  %v2345 = vpack.c.b16 %v2344, %v2343
  %v2348 = vsel %vm493, %v2340, 0
  %2350 = vmatprep.subr.bf16.mxu0 0
  %2351 = vmatpush1.bf16.msra.mxu0 %v2345
  %2352 = vmatprep.subr.bf16.mxu0 0
  %2353 = vmatpush1.bf16.msra.mxu0 0
  %2354 = vmatprep.subr.bf16.mxu0 0
  %2355 = vmatpush1.bf16.msra.mxu0 0
  %2356 = vmatprep.subr.bf16.mxu0 0
  %2357 = vmatpush1.bf16.msra.mxu0 0
  %2358 = vmatprep.subr.bf16.mxu0 0
  %2359 = vmatpush1.bf16.msra.mxu0 0
  %2360 = vmatprep.subr.bf16.mxu0 0
  %2361 = vmatpush1.bf16.msra.mxu0 0
  %2362 = vmatprep.subr.bf16.mxu0 0
  %2363 = vmatpush1.bf16.msra.mxu0 0
  %2364 = vmatprep.subr.bf16.mxu0 0
  %2365 = vmatpush1.bf16.msra.mxu0 0
  %2366 = vmatprep.subr.bf16.mxu0 0
  %2367 = vmatpush1.bf16.msra.mxu0 0
  %2368 = vmatprep.subr.bf16.mxu0 0
  %2369 = vmatpush1.bf16.msra.mxu0 0
  %2370 = vmatprep.subr.bf16.mxu0 0
  %2371 = vmatpush1.bf16.msra.mxu0 0
  %2372 = vmatprep.subr.bf16.mxu0 0
  %2373 = vmatpush1.bf16.msra.mxu0 0
  %2374 = vmatprep.subr.bf16.mxu0 0
  %2375 = vmatpush1.bf16.msra.mxu0 0
  %2376 = vmatprep.subr.bf16.mxu0 0
  %2377 = vmatpush1.bf16.msra.mxu0 0
  %2378 = vmatprep.subr.bf16.mxu0 0
  %2379 = vmatpush1.bf16.msra.mxu0 0
  %2380 = vmatprep.subr.bf16.mxu0 0
  %2381 = vmatpush1.bf16.msra.mxu0 0
  %2382 = vmatprep.mubr.bf16.mxu0 0
  %2383 = vmatmul.mubr.bf16.gmra.mrb[0].mxu0 %v2348
  %v2384 = vpop.f32.mrb[0].mxu0
  %v2385 = vadd.f32 0.0, %v2384
  %v2386 = vpop.f32.mrb[0].mxu0
  %v2387 = vpop.f32.mrb[0].mxu0
  %v2388 = vpop.f32.mrb[0].mxu0
  %2389 = vdwg.mxu0
  %v2390 = vadd.f32 %v2238, %v2385
  %v2391 = vadd.f32 %v1396, %v2390
  %s2392 = scalar_lea.vmem %s8, 1
  %v2393 = vld [vmem:[%s2392] sm:$0x1]
  %v2394 = vmul.f32 %v2391, %v2391
  %v2395 = vsel %vm93, %v2394, 0.0
  %2396 = vadd.xlane.f32.xlu0 %v2395
  %v2397 = vpop.xlane.xlu0 %2396
  %v2398 = vmul.f32 %v2397, %v97
  %v2399 = vadd.f32 %v2398, 1e-06
  %v2400 = vrsqrt.pop %v2399
  %v2401 = vmul.f32 %v2391, %v2400
  %v2403 = vlaneseq
  %v2404 = vshrl.u32 %v2403, 7
  %v2405 = vsub.s32 0, %v2404
  %v2406 = vrot.slane %v2393, %v2405
  %v2408 = vmul.f32 %v2401, %v2406
  %v2409 = vpack.c.bf16 %v2408, %v2408
  %s2410 = scalar_lea.vmem %s16, 32
  %v2411 = vld [vmem:[%s2410] sm:$0xf]
  %v2412 = vld [vmem:[%s2410 + $0x4] sm:$0xf]
  %v2413 = vld [vmem:[%s2410 + $0x8] sm:$0xf]
  %v2414 = vld [vmem:[%s2410 + $0xc] sm:$0xf]
  %v2415 = vld [vmem:[%s2410 + $0x10] sm:$0xf]
  %v2416 = vld [vmem:[%s2410 + $0x14] sm:$0xf]
  %v2417 = vld [vmem:[%s2410 + $0x18] sm:$0xf]
  %v2418 = vld [vmem:[%s2410 + $0x1c] sm:$0xf]
  %v2427 = vunpack.c.l.b16 %v2411
  %v2428 = vunpack.c.l.b16 %v2412
  %v2429 = vunpack.c.l.b16 %v2413
  %v2430 = vunpack.c.l.b16 %v2414
  %v2431 = vunpack.c.l.b16 %v2415
  %v2432 = vunpack.c.l.b16 %v2416
  %v2433 = vunpack.c.l.b16 %v2417
  %v2434 = vunpack.c.l.b16 %v2418
  %v2435 = vpack.c.b16 %v2428, %v2427
  %v2436 = vpack.c.b16 %v2430, %v2429
  %v2437 = vpack.c.b16 %v2432, %v2431
  %v2438 = vpack.c.b16 %v2434, %v2433
  %v2444 = vsel %vm93, %v2409, 0
  %2446 = vmatprep.subr.bf16.mxu0 0
  %2447 = vmatpush1.bf16.msra.mxu0 %v2435
  %2448 = vmatprep.subr.bf16.mxu0 0
  %2449 = vmatpush1.bf16.msra.mxu0 %v2436
  %2450 = vmatprep.subr.bf16.mxu0 0
  %2451 = vmatpush1.bf16.msra.mxu0 %v2437
  %2452 = vmatprep.subr.bf16.mxu0 0
  %2453 = vmatpush1.bf16.msra.mxu0 %v2438
  %2454 = vmatprep.subr.bf16.mxu0 0
  %2455 = vmatpush1.bf16.msra.mxu0 0
  %2456 = vmatprep.subr.bf16.mxu0 0
  %2457 = vmatpush1.bf16.msra.mxu0 0
  %2458 = vmatprep.subr.bf16.mxu0 0
  %2459 = vmatpush1.bf16.msra.mxu0 0
  %2460 = vmatprep.subr.bf16.mxu0 0
  %2461 = vmatpush1.bf16.msra.mxu0 0
  %2462 = vmatprep.subr.bf16.mxu0 0
  %2463 = vmatpush1.bf16.msra.mxu0 0
  %2464 = vmatprep.subr.bf16.mxu0 0
  %2465 = vmatpush1.bf16.msra.mxu0 0
  %2466 = vmatprep.subr.bf16.mxu0 0
  %2467 = vmatpush1.bf16.msra.mxu0 0
  %2468 = vmatprep.subr.bf16.mxu0 0
  %2469 = vmatpush1.bf16.msra.mxu0 0
  %2470 = vmatprep.subr.bf16.mxu0 0
  %2471 = vmatpush1.bf16.msra.mxu0 0
  %2472 = vmatprep.subr.bf16.mxu0 0
  %2473 = vmatpush1.bf16.msra.mxu0 0
  %2474 = vmatprep.subr.bf16.mxu0 0
  %2475 = vmatpush1.bf16.msra.mxu0 0
  %2476 = vmatprep.subr.bf16.mxu0 0
  %2477 = vmatpush1.bf16.msra.mxu0 0
  %2478 = vmatprep.mubr.bf16.mxu0 0
  %2479 = vmatmul.mubr.bf16.gmra.mrb[0].mxu0 %v2444
  %v2480 = vpop.f32.mrb[0].mxu0
  %v2481 = vadd.f32 0.0, %v2480
  %v2482 = vpop.f32.mrb[0].mxu0
  %v2483 = vpop.f32.mrb[0].mxu0
  %v2484 = vpop.f32.mrb[0].mxu0
  %2485 = vdwg.mxu0
  %s2486 = scalar_lea.vmem %s17, 32
  %v2487 = vld [vmem:[%s2486] sm:$0xf]
  %v2488 = vld [vmem:[%s2486 + $0x4] sm:$0xf]
  %v2489 = vld [vmem:[%s2486 + $0x8] sm:$0xf]
  %v2490 = vld [vmem:[%s2486 + $0xc] sm:$0xf]
  %v2491 = vld [vmem:[%s2486 + $0x10] sm:$0xf]
  %v2492 = vld [vmem:[%s2486 + $0x14] sm:$0xf]
  %v2493 = vld [vmem:[%s2486 + $0x18] sm:$0xf]
  %v2494 = vld [vmem:[%s2486 + $0x1c] sm:$0xf]
  %v2503 = vunpack.c.l.b16 %v2487
  %v2504 = vunpack.c.l.b16 %v2488
  %v2505 = vunpack.c.l.b16 %v2489
  %v2506 = vunpack.c.l.b16 %v2490
  %v2507 = vunpack.c.l.b16 %v2491
  %v2508 = vunpack.c.l.b16 %v2492
  %v2509 = vunpack.c.l.b16 %v2493
  %v2510 = vunpack.c.l.b16 %v2494
  %v2511 = vpack.c.b16 %v2504, %v2503
  %v2512 = vpack.c.b16 %v2506, %v2505
  %v2513 = vpack.c.b16 %v2508, %v2507
  %v2514 = vpack.c.b16 %v2510, %v2509
  %2519 = vmatprep.subr.bf16.mxu0 0
  %2520 = vmatpush1.bf16.msra.mxu0 %v2511
  %2521 = vmatprep.subr.bf16.mxu0 0
  %2522 = vmatpush1.bf16.msra.mxu0 %v2512
  %2523 = vmatprep.subr.bf16.mxu0 0
  %2524 = vmatpush1.bf16.msra.mxu0 %v2513
  %2525 = vmatprep.subr.bf16.mxu0 0
  %2526 = vmatpush1.bf16.msra.mxu0 %v2514
  %2527 = vmatprep.subr.bf16.mxu0 0
  %2528 = vmatpush1.bf16.msra.mxu0 0
  %2529 = vmatprep.subr.bf16.mxu0 0
  %2530 = vmatpush1.bf16.msra.mxu0 0
  %2531 = vmatprep.subr.bf16.mxu0 0
  %2532 = vmatpush1.bf16.msra.mxu0 0
  %2533 = vmatprep.subr.bf16.mxu0 0
  %2534 = vmatpush1.bf16.msra.mxu0 0
  %2535 = vmatprep.subr.bf16.mxu0 0
  %2536 = vmatpush1.bf16.msra.mxu0 0
  %2537 = vmatprep.subr.bf16.mxu0 0
  %2538 = vmatpush1.bf16.msra.mxu0 0
  %2539 = vmatprep.subr.bf16.mxu0 0
  %2540 = vmatpush1.bf16.msra.mxu0 0
  %2541 = vmatprep.subr.bf16.mxu0 0
  %2542 = vmatpush1.bf16.msra.mxu0 0
  %2543 = vmatprep.subr.bf16.mxu0 0
  %2544 = vmatpush1.bf16.msra.mxu0 0
  %2545 = vmatprep.subr.bf16.mxu0 0
  %2546 = vmatpush1.bf16.msra.mxu0 0
  %2547 = vmatprep.subr.bf16.mxu0 0
  %2548 = vmatpush1.bf16.msra.mxu0 0
  %2549 = vmatprep.subr.bf16.mxu0 0
  %2550 = vmatpush1.bf16.msra.mxu0 0
  %2551 = vmatprep.mubr.bf16.mxu0 0
  %2552 = vmatmul.mubr.bf16.gmra.mrb[0].mxu0 %v2444
  %v2553 = vpop.f32.mrb[0].mxu0
  %v2554 = vadd.f32 0.0, %v2553
  %v2555 = vpop.f32.mrb[0].mxu0
  %v2556 = vpop.f32.mrb[0].mxu0
  %v2557 = vpop.f32.mrb[0].mxu0
  %2558 = vdwg.mxu0
  %v2559 = vsub.f32 0.0, %v2481
  %v2560 = vmul.f32 %v2559, 1.442695
  %v2561 = vpow.pop %v2560
  %v2562 = vadd.f32 %v2561, 1.0
  %v2563 = vrcp.pop %v2562
  %v2564 = vmul.f32 %v2481, %v2563
  %v2565 = vmul.f32 %v2564, %v2554
  %v2566 = vpack.c.bf16 %v2565, %v2565
  %s2567 = scalar_lea.vmem %s18, 64
  %v2568 = vld [vmem:[%s2567] sm:$0xf]
  %v2569 = vld [vmem:[%s2567 + $0x4] sm:$0xf]
  %v2570 = vld [vmem:[%s2567 + $0x8] sm:$0xf]
  %v2571 = vld [vmem:[%s2567 + $0xc] sm:$0xf]
  %v2572 = vld [vmem:[%s2567 + $0x10] sm:$0xf]
  %v2573 = vld [vmem:[%s2567 + $0x14] sm:$0xf]
  %v2574 = vld [vmem:[%s2567 + $0x18] sm:$0xf]
  %v2575 = vld [vmem:[%s2567 + $0x1c] sm:$0xf]
  %v2576 = vld [vmem:[%s2567 + $0x20] sm:$0xf]
  %v2577 = vld [vmem:[%s2567 + $0x24] sm:$0xf]
  %v2578 = vld [vmem:[%s2567 + $0x28] sm:$0xf]
  %v2579 = vld [vmem:[%s2567 + $0x2c] sm:$0xf]
  %v2580 = vld [vmem:[%s2567 + $0x30] sm:$0xf]
  %v2581 = vld [vmem:[%s2567 + $0x34] sm:$0xf]
  %v2582 = vld [vmem:[%s2567 + $0x38] sm:$0xf]
  %v2583 = vld [vmem:[%s2567 + $0x3c] sm:$0xf]
  %v2600 = vunpack.c.l.b16 %v2568
  %v2601 = vunpack.c.l.b16 %v2569
  %v2602 = vunpack.c.l.b16 %v2570
  %v2603 = vunpack.c.l.b16 %v2571
  %v2604 = vunpack.c.l.b16 %v2572
  %v2605 = vunpack.c.l.b16 %v2573
  %v2606 = vunpack.c.l.b16 %v2574
  %v2607 = vunpack.c.l.b16 %v2575
  %v2608 = vunpack.c.l.b16 %v2576
  %v2609 = vunpack.c.l.b16 %v2577
  %v2610 = vunpack.c.l.b16 %v2578
  %v2611 = vunpack.c.l.b16 %v2579
  %v2612 = vunpack.c.l.b16 %v2580
  %v2613 = vunpack.c.l.b16 %v2581
  %v2614 = vunpack.c.l.b16 %v2582
  %v2615 = vunpack.c.l.b16 %v2583
  %v2616 = vpack.c.b16 %v2601, %v2600
  %v2617 = vpack.c.b16 %v2603, %v2602
  %v2618 = vpack.c.b16 %v2605, %v2604
  %v2619 = vpack.c.b16 %v2607, %v2606
  %v2620 = vpack.c.b16 %v2609, %v2608
  %v2621 = vpack.c.b16 %v2611, %v2610
  %v2622 = vpack.c.b16 %v2613, %v2612
  %v2623 = vpack.c.b16 %v2615, %v2614
  %2632 = vmatprep.subr.bf16.mxu0 0
  %2633 = vmatpush1.bf16.msra.mxu0 %v2616
  %2634 = vmatprep.subr.bf16.mxu0 0
  %2635 = vmatpush1.bf16.msra.mxu0 %v2617
  %2636 = vmatprep.subr.bf16.mxu0 0
  %2637 = vmatpush1.bf16.msra.mxu0 %v2618
  %2638 = vmatprep.subr.bf16.mxu0 0
  %2639 = vmatpush1.bf16.msra.mxu0 %v2619
  %2640 = vmatprep.subr.bf16.mxu0 0
  %2641 = vmatpush1.bf16.msra.mxu0 %v2620
  %2642 = vmatprep.subr.bf16.mxu0 0
  %2643 = vmatpush1.bf16.msra.mxu0 %v2621
  %2644 = vmatprep.subr.bf16.mxu0 0
  %2645 = vmatpush1.bf16.msra.mxu0 %v2622
  %2646 = vmatprep.subr.bf16.mxu0 0
  %2647 = vmatpush1.bf16.msra.mxu0 %v2623
  %2648 = vmatprep.subr.bf16.mxu0 0
  %2649 = vmatpush1.bf16.msra.mxu0 0
  %2650 = vmatprep.subr.bf16.mxu0 0
  %2651 = vmatpush1.bf16.msra.mxu0 0
  %2652 = vmatprep.subr.bf16.mxu0 0
  %2653 = vmatpush1.bf16.msra.mxu0 0
  %2654 = vmatprep.subr.bf16.mxu0 0
  %2655 = vmatpush1.bf16.msra.mxu0 0
  %2656 = vmatprep.subr.bf16.mxu0 0
  %2657 = vmatpush1.bf16.msra.mxu0 0
  %2658 = vmatprep.subr.bf16.mxu0 0
  %2659 = vmatpush1.bf16.msra.mxu0 0
  %2660 = vmatprep.subr.bf16.mxu0 0
  %2661 = vmatpush1.bf16.msra.mxu0 0
  %2662 = vmatprep.subr.bf16.mxu0 0
  %2663 = vmatpush1.bf16.msra.mxu0 0
  %2664 = vmatprep.mubr.bf16.mxu0 0
  %2665 = vmatmul.mubr.bf16.gmra.mrb[0].mxu0 %v2566
  %v2666 = vpop.f32.mrb[0].mxu0
  %v2667 = vadd.f32 0.0, %v2666
  %v2668 = vpop.f32.mrb[0].mxu0
  %v2669 = vpop.f32.mrb[0].mxu0
  %v2670 = vpop.f32.mrb[0].mxu0
  %2671 = vdwg.mxu0
  %v2672 = vadd.f32 %v2391, %v2667
  %v2673 = vld [vmem:[%s19] sm:$0x1]
  %v2674 = vmul.f32 %v2672, %v2672
  %v2675 = vsel %vm93, %v2674, 0.0
  %2676 = vadd.xlane.f32.xlu0 %v2675
  %v2677 = vpop.xlane.xlu0 %2676
  %v2678 = vmul.f32 %v2677, %v97
  %v2679 = vadd.f32 %v2678, 1e-06
  %v2680 = vrsqrt.pop %v2679
  %v2681 = vmul.f32 %v2672, %v2680
  %v2683 = vlaneseq
  %v2684 = vshrl.u32 %v2683, 7
  %v2685 = vsub.s32 0, %v2684
  %v2686 = vrot.slane %v2673, %v2685
  %v2688 = vmul.f32 %v2681, %v2686
  %v2689 = vpack.c.bf16 %v2688, %v2688
  %v2690 = vld [vmem:[%s20] sm:$0xf]
  %v2691 = vld [vmem:[%s20 + $0x4] sm:$0xf]
  %v2692 = vld [vmem:[%s20 + $0x8] sm:$0xf]
  %v2693 = vld [vmem:[%s20 + $0xc] sm:$0xf]
  %v2694 = vld [vmem:[%s20 + $0x10] sm:$0xf]
  %v2695 = vld [vmem:[%s20 + $0x14] sm:$0xf]
  %v2696 = vld [vmem:[%s20 + $0x18] sm:$0xf]
  %v2697 = vld [vmem:[%s20 + $0x1c] sm:$0xf]
  %v2706 = vunpack.c.l.b16 %v2690
  %v2707 = vunpack.c.l.b16 %v2691
  %v2708 = vunpack.c.l.b16 %v2692
  %v2709 = vunpack.c.l.b16 %v2693
  %v2710 = vunpack.c.l.b16 %v2694
  %v2711 = vunpack.c.l.b16 %v2695
  %v2712 = vunpack.c.l.b16 %v2696
  %v2713 = vunpack.c.l.b16 %v2697
  %v2714 = vpack.c.b16 %v2707, %v2706
  %v2715 = vpack.c.b16 %v2709, %v2708
  %v2716 = vpack.c.b16 %v2711, %v2710
  %v2717 = vpack.c.b16 %v2713, %v2712
  %v2723 = vsel %vm93, %v2689, 0
  %2725 = vmatprep.subr.bf16.mxu0 0
  %2726 = vmatpush1.bf16.msra.mxu0 %v2714
  %2727 = vmatprep.subr.bf16.mxu0 0
  %2728 = vmatpush1.bf16.msra.mxu0 %v2715
  %2729 = vmatprep.subr.bf16.mxu0 0
  %2730 = vmatpush1.bf16.msra.mxu0 %v2716
  %2731 = vmatprep.subr.bf16.mxu0 0
  %2732 = vmatpush1.bf16.msra.mxu0 %v2717
  %2733 = vmatprep.subr.bf16.mxu0 0
  %2734 = vmatpush1.bf16.msra.mxu0 0
  %2735 = vmatprep.subr.bf16.mxu0 0
  %2736 = vmatpush1.bf16.msra.mxu0 0
  %2737 = vmatprep.subr.bf16.mxu0 0
  %2738 = vmatpush1.bf16.msra.mxu0 0
  %2739 = vmatprep.subr.bf16.mxu0 0
  %2740 = vmatpush1.bf16.msra.mxu0 0
  %2741 = vmatprep.subr.bf16.mxu0 0
  %2742 = vmatpush1.bf16.msra.mxu0 0
  %2743 = vmatprep.subr.bf16.mxu0 0
  %2744 = vmatpush1.bf16.msra.mxu0 0
  %2745 = vmatprep.subr.bf16.mxu0 0
  %2746 = vmatpush1.bf16.msra.mxu0 0
  %2747 = vmatprep.subr.bf16.mxu0 0
  %2748 = vmatpush1.bf16.msra.mxu0 0
  %2749 = vmatprep.subr.bf16.mxu0 0
  %2750 = vmatpush1.bf16.msra.mxu0 0
  %2751 = vmatprep.subr.bf16.mxu0 0
  %2752 = vmatpush1.bf16.msra.mxu0 0
  %2753 = vmatprep.subr.bf16.mxu0 0
  %2754 = vmatpush1.bf16.msra.mxu0 0
  %2755 = vmatprep.subr.bf16.mxu0 0
  %2756 = vmatpush1.bf16.msra.mxu0 0
  %2757 = vmatprep.mubr.bf16.mxu0 0
  %2758 = vmatmul.mubr.bf16.gmra.mrb[0].mxu0 %v2723
  %v2759 = vpop.f32.mrb[0].mxu0
  %v2760 = vadd.f32 0.0, %v2759
  %v2761 = vpop.f32.mrb[0].mxu0
  %v2762 = vpop.f32.mrb[0].mxu0
  %v2763 = vpop.f32.mrb[0].mxu0
  %2764 = vdwg.mxu0
  %2765 = vst [vmem:[%s21] sm:$0xff] %v2760
  // Predicated region
  $region86: #{forward.1} parent=0 // pred_check
    _
  $region87: #{forward.1} parent=0 // pred_check_branch
    %2767 = sbr.rel (0) target = $region89
  $region88: #{forward.1} parent=0 // pred_region
    _
  $region89: #{forward.1} parent=0 // pred_fallthru
    _
  // Predicated region
  $region90: #{forward.1} parent=0 // pred_check
    _
  $region91: #{forward.1} parent=0 // pred_check_branch
    %2769 = sbr.rel (0) target = $region93
  $region92: #{forward.1} parent=0 // pred_region
    _
  $region93: #{forward.1} parent=0 // pred_fallthru
    _

</llo_original>
